<compile_context>
chip_gen: v5e
topology: v5e:2x2
jax: 0.10.0
libtpu: 0.0.40
codegen_flags: <defaults>
</compile_context>

<pallas_src>
import functools
import math

import numpy as np
import jax
import jax.numpy as jnp
from jax import lax
from jax.experimental import pallas as pl
from jax.experimental.pallas import tpu as pltpu

WIN_SIZE = 11
WIN_SIGMA = 1.5
K1 = 0.01
K2 = 0.03
_LANE = 128
_SUBLANE = 8


def _round_up(x, m):
    return (x + m - 1) // m * m


def _gauss_1d(size, sigma):
    coords = np.arange(size, dtype=np.float64) - size // 2
    g = np.exp(-(coords ** 2) / (2.0 * sigma * sigma))
    return g / g.sum()


def _gauss_matrices(h_pad, w, hn, wn, size=WIN_SIZE, sigma=WIN_SIGMA):
    """Banded Toeplitz matrices with lane-padded (128-multiple) output dims.

    W-conv : (r*H, W)       @ gw  (W,     Wn_pad) -> (r*H, Wn_pad)
    H-conv : (r*Wn_pad, H)  @ ghT (H_pad, Hn_pad) -> (r*Wn_pad, Hn_pad)
    Padded output columns are all-zero; they are masked out of the SSIM reduction.
    """
    g = _gauss_1d(size, sigma)
    wn_pad = _round_up(wn, _LANE)
    hn_pad = _round_up(hn, _LANE)
    gw = np.zeros((w, wn_pad), np.float32)
    for j in range(wn):
        gw[j:j + size, j] = g
    ght = np.zeros((h_pad, hn_pad), np.float32)
    for i in range(hn):
        ght[i:i + size, i] = g
    return jnp.asarray(gw), jnp.asarray(ght)


def _psnr_ssim_kernel(pred_ref, gt_ref, gw_ref, ght_ref, mse_ref, ssim_ref,
                      *, data_range, h_valid, hn, wn):
    bt, c, h, w = pred_ref.shape              # h = sublane-padded height
    x = pred_ref[...].astype(jnp.float32)     # cast in VMEM, DMA in orig dtype
    y = gt_ref[...].astype(jnp.float32)

    # ---- per-sample MSE (padded rows are zero in both inputs -> contribute 0) ----
    diff = x - y
    inv_n = 1.0 / float(c * h_valid * w)
    mse_ref[...] = jnp.sum(diff * diff, axis=(1, 2, 3), keepdims=True) * inv_n

    # ---- per-sample SSIM (separable gaussian filter as two flat MXU matmuls) ----
    gw = gw_ref[...]            # (W, Wn_pad)      f32
    ght = ght_ref[...]          # (H_pad, Hn_pad)  f32
    wn_pad = gw.shape[1]
    hn_pad = ght.shape[1]
    r = bt * c

    def gfilt(a):               # (r, H, W) -> (r, Wn_pad, Hn_pad)  (transposed layout)
        # W (lane) direction: one flat matmul against the banded matrix.
        t = jnp.dot(a.reshape(r * h, w), gw,
                    preferred_element_type=jnp.float32).reshape(r, h, wn_pad)
        # Swap the two minor dims (XLU) so the H-conv is also one flat matmul.
        t = jnp.swapaxes(t, 1, 2)                              # (r, Wn_pad, H)
        o = jnp.dot(t.reshape(r * wn_pad, h), ght,
                    preferred_element_type=jnp.float32)        # (r*Wn_pad, Hn_pad)
        return o.reshape(r, wn_pad, hn_pad)

    c1 = (K1 * data_range) ** 2
    c2 = (K2 * data_range) ** 2

    xr = x.reshape(r, h, w)
    yr = y.reshape(r, h, w)
    mu1 = gfilt(xr)
    mu2 = gfilt(yr)
    mu1_sq = mu1 * mu1
    mu2_sq = mu2 * mu2
    mu1_mu2 = mu1 * mu2
    # Linearity of the filter: gfilt(x*x) + gfilt(y*y) == gfilt(x*x + y*y).
    sigma_sum = gfilt(xr * xr + yr * yr) - mu1_sq - mu2_sq     # sigma1_sq + sigma2_sq
    sigma12 = gfilt(xr * yr) - mu1_mu2

    num = (2.0 * mu1_mu2 + c1) * (2.0 * sigma12 + c2)
    den = (mu1_sq + mu2_sq + c1) * (sigma_sum + c2)
    inv = pl.reciprocal(den, approx=True)       # EUP slot
    inv = inv * (2.0 - den * inv)               # one Newton step -> ~f32 accuracy
    ssim_map = num * inv

    # Padded filter columns evaluate to (c1*c2)/(c1*c2) == 1 -> mask them out.
    col = lax.broadcasted_iota(jnp.int32, (r, wn_pad, hn_pad), 1)   # Wn axis
    row = lax.broadcasted_iota(jnp.int32, (r, wn_pad, hn_pad), 2)   # Hn axis
    ssim_map = jnp.where((col < wn) & (row < hn), ssim_map, 0.0)

    sm = ssim_map.reshape(bt, c, wn_pad, hn_pad)
    inv_m = 1.0 / float(c * hn * wn)
    ssim_ref[...] = jnp.sum(sm, axis=(1, 2, 3), keepdims=True) * inv_m


def _tpu_budget_and_cores():
    """Generation-aware VMEM budget (bytes) and a TensorCore-count guess."""
    cap = None
    try:
        cap = getattr(pltpu.get_tpu_info(), "vmem_capacity_bytes", None)
    except Exception:
        cap = None
    if cap is None:
        cap = 64 * 1024 * 1024                 # conservative (v7x-sized) fallback
    if cap <= 64 * 1024 * 1024:                # v7x-class: 64 MiB / TC, 2 TCs / chip
        return min(int(cap * 3 // 4), 48 * 1024 * 1024), 2
    return min(int(cap * 3 // 4), 96 * 1024 * 1024), 1   # v5e / v6e: 128 MiB, 1 TC


def _working_set(C, h_pad, W, hn_pad, wn_pad, itemsize):
    """Per-sample + constant VMEM working-set estimate (bytes), incl. filter temps."""
    per_sample = (
        2 * 2 * C * h_pad * W * itemsize       # 2 inputs x double-buffered DMA blocks
        + 4 * C * h_pad * W * 4                # x, y (f32) + elementwise product temps
        + 2 * C * h_pad * wn_pad * 4           # W-conv intermediate + its transpose
        + 8 * C * wn_pad * hn_pad * 4          # mu/sigma/num/den/ssim_map temps
    )
    const = 2 * (W * wn_pad + h_pad * hn_pad) * 4   # double-buffered Toeplitz weights
    return per_sample, const


def _pick_batch_tile(B, per_sample, const, budget, num_cores):
    bt_cap = B
    if num_cores >= 2 and B >= 2:
        bt_cap = max(1, B // 2)    # >= 2 parallel grid steps so both TCs get work
    for bt in range(bt_cap, 0, -1):
        if B % bt == 0 and const + bt * per_sample <= budget:
            return bt
    return 1


def psnr_forward(pred, gt, boundary_ignore=None, max_value=1.0):
    """Equivalent of PSNR(boundary_ignore, max_value).forward(pred, gt, valid=None).

    Returns (psnr, ssim, lpips_placeholder)."""
    assert pred.ndim == 4 and pred.shape == gt.shape
    if boundary_ignore is not None:
        pred = pred[..., boundary_ignore:-boundary_ignore, boundary_ignore:-boundary_ignore]
        gt = gt[..., boundary_ignore:-boundary_ignore, boundary_ignore:-boundary_ignore]

    B, C, H, W = pred.shape
    Hn, Wn = H - WIN_SIZE + 1, W - WIN_SIZE + 1
    if Hn <= 0 or Wn <= 0:
        raise ValueError(f"spatial size ({H}x{W}) must be >= SSIM window size {WIN_SIZE}")

    # Pad H to a sublane multiple so the (r,H,W)->(r*H,W) merge in the kernel is free.
    h_pad = _round_up(H, _SUBLANE)
    if h_pad != H:
        pad_cfg = ((0, 0), (0, 0), (0, h_pad - H), (0, 0))
        pred = jnp.pad(pred, pad_cfg)
        gt = jnp.pad(gt, pad_cfg)

    gw, ght = _gauss_matrices(h_pad, W, Hn, Wn)
    wn_pad, hn_pad = gw.shape[1], ght.shape[1]

    itemsize = jnp.dtype(pred.dtype).itemsize
    budget, cores = _tpu_budget_and_cores()
    per_sample, const = _working_set(C, h_pad, W, hn_pad, wn_pad, itemsize)
    Bt = _pick_batch_tile(B, per_sample, const, budget, cores)
    vmem_limit = int(budget)

    kernel = functools.partial(_psnr_ssim_kernel, data_range=1.0,
                               h_valid=H, hn=Hn, wn=Wn)

    # (B,1,1,1) scalar outputs: lane-width-1 masked stores, but traffic is negligible
    # and the block shape (Bt,1,1,1) stays legal for any Bt that divides B.
    mse, ssim_v = pl.pallas_call(
        kernel,
        out_shape=(
            jax.ShapeDtypeStruct((B, 1, 1, 1), jnp.float32),
            jax.ShapeDtypeStruct((B, 1, 1, 1), jnp.float32),
        ),
        grid=(B // Bt,),
        in_specs=[
            pl.BlockSpec((Bt, C, h_pad, W), lambda b: (b, 0, 0, 0)),
            pl.BlockSpec((Bt, C, h_pad, W), lambda b: (b, 0, 0, 0)),
            pl.BlockSpec((W, wn_pad), lambda b: (0, 0)),
            pl.BlockSpec((h_pad, hn_pad), lambda b: (0, 0)),
        ],
        out_specs=(
            pl.BlockSpec((Bt, 1, 1, 1), lambda b: (b, 0, 0, 0)),
            pl.BlockSpec((Bt, 1, 1, 1), lambda b: (b, 0, 0, 0)),
        ),
        compiler_params=pltpu.CompilerParams(
            dimension_semantics=("parallel",),
            vmem_limit_bytes=vmem_limit,
        ),
    )(pred, gt, gw, ght)

    mse = mse.reshape(B)
    ssim_v = ssim_v.reshape(B)

    # per-sample PSNR, then average over the batch (as in the reference loop)
    psnr_per_sample = 20.0 * math.log10(max_value) - 10.0 * jnp.log10(mse)
    psnr = jnp.mean(psnr_per_sample)
    ssim_mean = jnp.mean(ssim_v)

    # TODO(synk): LPIPS term requires pretrained VGG16 weights; placeholder 0.0.
    lp = jnp.zeros((), jnp.float32)
    return psnr, ssim_mean, lp


if __name__ == "__main__":
    key = jax.random.PRNGKey(0)
    k1, k2 = jax.random.split(key)
    B, C, H, W = 2, 4, 16, 16
    pred = jax.random.uniform(k1, (B, C, H, W), dtype=jnp.float32)
    gt = jax.random.uniform(k2, (B, C, H, W), dtype=jnp.float32)

    psnr, ssim_val, lp = psnr_forward(pred, gt, boundary_ignore=None, max_value=1.0)
    jax.block_until_ready((psnr, ssim_val, lp))
    print("KERNEL_OK")
</pallas_src>

<mosaic_0001>
module attributes {stable_mosaic.version = 11 : i64} {
  func.func @_psnr_ssim_kernel(%arg0: i32, %arg1: memref<1x4x16x16xf32, #tpu.memory_space<vmem>>, %arg2: memref<1x4x16x16xf32, #tpu.memory_space<vmem>>, %arg3: memref<16x128xf32, #tpu.memory_space<vmem>>, %arg4: memref<16x128xf32, #tpu.memory_space<vmem>>, %arg5: memref<1x1x1x1xf32, #tpu.memory_space<vmem>>, %arg6: memref<1x1x1x1xf32, #tpu.memory_space<vmem>>) attributes {dimension_semantics = [#tpu.dimension_semantics<parallel>], iteration_bounds = array<i64: 2>, scalar_prefetch = 0 : i64, scratch_operands = 0 : i64, tpu.core_type = #tpu.core_type<tc>, window_params = [{transform_indices = @transform_0, window_bounds = array<i64: 1, 4, 16, 16>}, {transform_indices = @transform_1, window_bounds = array<i64: 1, 4, 16, 16>}, {pipeline_mode = #tpu.pipeline_mode<synchronous>, transform_indices = @transform_2, window_bounds = array<i64: 16, 128>}, {pipeline_mode = #tpu.pipeline_mode<synchronous>, transform_indices = @transform_3, window_bounds = array<i64: 16, 128>}, {transform_indices = @transform_4, window_bounds = array<i64: 1, 1, 1, 1>}, {transform_indices = @transform_5, window_bounds = array<i64: 1, 1, 1, 1>}]} {
    %c0 = arith.constant 0 : index
    %c0_0 = arith.constant 0 : index
    %c0_1 = arith.constant 0 : index
    %c0_2 = arith.constant 0 : index
    %0 = vector.load %arg1[%c0, %c0_0, %c0_1, %c0_2] : memref<1x4x16x16xf32, #tpu.memory_space<vmem>>, vector<1x4x16x16xf32>
    %c0_3 = arith.constant 0 : index
    %c0_4 = arith.constant 0 : index
    %c0_5 = arith.constant 0 : index
    %c0_6 = arith.constant 0 : index
    %1 = vector.load %arg2[%c0_3, %c0_4, %c0_5, %c0_6] : memref<1x4x16x16xf32, #tpu.memory_space<vmem>>, vector<1x4x16x16xf32>
    %2 = arith.subf %0, %1 : vector<1x4x16x16xf32>
    %3 = arith.mulf %2, %2 : vector<1x4x16x16xf32>
    %cst = arith.constant dense<0.000000e+00> : vector<1xf32>
    %4 = vector.multi_reduction <add>, %3, %cst [1, 2, 3] : vector<1x4x16x16xf32> to vector<1xf32>
    %5 = vector.shape_cast %4 : vector<1xf32> to vector<1x1x1x1xf32>
    %cst_7 = arith.constant 9.765625E-4 : f32
    %6 = vector.broadcast %cst_7 : f32 to vector<1x1x1x1xf32>
    %7 = arith.mulf %5, %6 : vector<1x1x1x1xf32>
    %c0_8 = arith.constant 0 : index
    %c0_9 = arith.constant 0 : index
    %c0_10 = arith.constant 0 : index
    %c0_11 = arith.constant 0 : index
    %8 = vector.load %arg5[%c0_8, %c0_9, %c0_10, %c0_11] : memref<1x1x1x1xf32, #tpu.memory_space<vmem>>, vector<1x1x1x1xf32>
    tpu.vector_store %arg5[%c0_8, %c0_9, %c0_10, %c0_11], %7 {strides = array<i32>} : memref<1x1x1x1xf32, #tpu.memory_space<vmem>>, vector<1x1x1x1xf32>,
    %c0_12 = arith.constant 0 : index
    %c0_13 = arith.constant 0 : index
    %9 = vector.load %arg3[%c0_12, %c0_13] : memref<16x128xf32, #tpu.memory_space<vmem>>, vector<16x128xf32>
    %c0_14 = arith.constant 0 : index
    %c0_15 = arith.constant 0 : index
    %10 = vector.load %arg4[%c0_14, %c0_15] : memref<16x128xf32, #tpu.memory_space<vmem>>, vector<16x128xf32>
    %11 = vector.shape_cast %0 : vector<1x4x16x16xf32> to vector<4x16x16xf32>
    %12 = vector.shape_cast %1 : vector<1x4x16x16xf32> to vector<4x16x16xf32>
    %13 = vector.shape_cast %11 : vector<4x16x16xf32> to vector<64x16xf32>
    %cst_16 = arith.constant dense<0.000000e+00> : vector<64x128xf32>
    %14 = tpu.matmul %13, %9, %cst_16 {dimension_numbers = #tpu.dot_dimension_numbers<[1], [0], [0], [1], [0, 0, 1, 1], [], []>} : vector<64x16xf32>, vector<16x128xf32>, vector<64x128xf32> -> vector<64x128xf32>
    %15 = vector.shape_cast %14 : vector<64x128xf32> to vector<4x16x128xf32>
    %16 = tpu.transpose %15, [0, 2, 1] : vector<4x16x128xf32> -> vector<4x128x16xf32>
    %17 = vector.shape_cast %16 : vector<4x128x16xf32> to vector<512x16xf32>
    %cst_17 = arith.constant dense<0.000000e+00> : vector<512x128xf32>
    %18 = tpu.matmul %17, %10, %cst_17 {dimension_numbers = #tpu.dot_dimension_numbers<[1], [0], [0], [1], [0, 0, 1, 1], [], []>} : vector<512x16xf32>, vector<16x128xf32>, vector<512x128xf32> -> vector<512x128xf32>
    %19 = vector.shape_cast %18 : vector<512x128xf32> to vector<4x128x128xf32>
    %20 = vector.shape_cast %12 : vector<4x16x16xf32> to vector<64x16xf32>
    %cst_18 = arith.constant dense<0.000000e+00> : vector<64x128xf32>
    %21 = tpu.matmul %20, %9, %cst_18 {dimension_numbers = #tpu.dot_dimension_numbers<[1], [0], [0], [1], [0, 0, 1, 1], [], []>} : vector<64x16xf32>, vector<16x128xf32>, vector<64x128xf32> -> vector<64x128xf32>
    %22 = vector.shape_cast %21 : vector<64x128xf32> to vector<4x16x128xf32>
    %23 = tpu.transpose %22, [0, 2, 1] : vector<4x16x128xf32> -> vector<4x128x16xf32>
    %24 = vector.shape_cast %23 : vector<4x128x16xf32> to vector<512x16xf32>
    %cst_19 = arith.constant dense<0.000000e+00> : vector<512x128xf32>
    %25 = tpu.matmul %24, %10, %cst_19 {dimension_numbers = #tpu.dot_dimension_numbers<[1], [0], [0], [1], [0, 0, 1, 1], [], []>} : vector<512x16xf32>, vector<16x128xf32>, vector<512x128xf32> -> vector<512x128xf32>
    %26 = vector.shape_cast %25 : vector<512x128xf32> to vector<4x128x128xf32>
    %27 = arith.mulf %19, %19 : vector<4x128x128xf32>
    %28 = arith.mulf %26, %26 : vector<4x128x128xf32>
    %29 = arith.mulf %19, %26 : vector<4x128x128xf32>
    %30 = arith.mulf %11, %11 : vector<4x16x16xf32>
    %31 = arith.mulf %12, %12 : vector<4x16x16xf32>
    %32 = arith.addf %30, %31 : vector<4x16x16xf32>
    %33 = vector.shape_cast %32 : vector<4x16x16xf32> to vector<64x16xf32>
    %cst_20 = arith.constant dense<0.000000e+00> : vector<64x128xf32>
    %34 = tpu.matmul %33, %9, %cst_20 {dimension_numbers = #tpu.dot_dimension_numbers<[1], [0], [0], [1], [0, 0, 1, 1], [], []>} : vector<64x16xf32>, vector<16x128xf32>, vector<64x128xf32> -> vector<64x128xf32>
    %35 = vector.shape_cast %34 : vector<64x128xf32> to vector<4x16x128xf32>
    %36 = tpu.transpose %35, [0, 2, 1] : vector<4x16x128xf32> -> vector<4x128x16xf32>
    %37 = vector.shape_cast %36 : vector<4x128x16xf32> to vector<512x16xf32>
    %cst_21 = arith.constant dense<0.000000e+00> : vector<512x128xf32>
    %38 = tpu.matmul %37, %10, %cst_21 {dimension_numbers = #tpu.dot_dimension_numbers<[1], [0], [0], [1], [0, 0, 1, 1], [], []>} : vector<512x16xf32>, vector<16x128xf32>, vector<512x128xf32> -> vector<512x128xf32>
    %39 = vector.shape_cast %38 : vector<512x128xf32> to vector<4x128x128xf32>
    %40 = arith.subf %39, %27 : vector<4x128x128xf32>
    %41 = arith.subf %40, %28 : vector<4x128x128xf32>
    %42 = arith.mulf %11, %12 : vector<4x16x16xf32>
    %43 = vector.shape_cast %42 : vector<4x16x16xf32> to vector<64x16xf32>
    %cst_22 = arith.constant dense<0.000000e+00> : vector<64x128xf32>
    %44 = tpu.matmul %43, %9, %cst_22 {dimension_numbers = #tpu.dot_dimension_numbers<[1], [0], [0], [1], [0, 0, 1, 1], [], []>} : vector<64x16xf32>, vector<16x128xf32>, vector<64x128xf32> -> vector<64x128xf32>
    %45 = vector.shape_cast %44 : vector<64x128xf32> to vector<4x16x128xf32>
    %46 = tpu.transpose %45, [0, 2, 1] : vector<4x16x128xf32> -> vector<4x128x16xf32>
    %47 = vector.shape_cast %46 : vector<4x128x16xf32> to vector<512x16xf32>
    %cst_23 = arith.constant dense<0.000000e+00> : vector<512x128xf32>
    %48 = tpu.matmul %47, %10, %cst_23 {dimension_numbers = #tpu.dot_dimension_numbers<[1], [0], [0], [1], [0, 0, 1, 1], [], []>} : vector<512x16xf32>, vector<16x128xf32>, vector<512x128xf32> -> vector<512x128xf32>
    %49 = vector.shape_cast %48 : vector<512x128xf32> to vector<4x128x128xf32>
    %50 = arith.subf %49, %29 : vector<4x128x128xf32>
    %cst_24 = arith.constant 2.000000e+00 : f32
    %51 = vector.broadcast %cst_24 : f32 to vector<4x128x128xf32>
    %52 = arith.mulf %51, %29 : vector<4x128x128xf32>
    %cst_25 = arith.constant 9.99999974E-5 : f32
    %53 = vector.broadcast %cst_25 : f32 to vector<4x128x128xf32>
    %54 = arith.addf %52, %53 : vector<4x128x128xf32>
    %cst_26 = arith.constant 2.000000e+00 : f32
    %55 = vector.broadcast %cst_26 : f32 to vector<4x128x128xf32>
    %56 = arith.mulf %55, %50 : vector<4x128x128xf32>
    %cst_27 = arith.constant 8.99999984E-4 : f32
    %57 = vector.broadcast %cst_27 : f32 to vector<4x128x128xf32>
    %58 = arith.addf %56, %57 : vector<4x128x128xf32>
    %59 = arith.mulf %54, %58 : vector<4x128x128xf32>
    %60 = arith.addf %27, %28 : vector<4x128x128xf32>
    %cst_28 = arith.constant 9.99999974E-5 : f32
    %61 = vector.broadcast %cst_28 : f32 to vector<4x128x128xf32>
    %62 = arith.addf %60, %61 : vector<4x128x128xf32>
    %cst_29 = arith.constant 8.99999984E-4 : f32
    %63 = vector.broadcast %cst_29 : f32 to vector<4x128x128xf32>
    %64 = arith.addf %41, %63 : vector<4x128x128xf32>
    %65 = arith.mulf %62, %64 : vector<4x128x128xf32>
    %66 = tpu.reciprocal %65 {approx = true} : vector<4x128x128xf32> -> vector<4x128x128xf32>
    %67 = arith.mulf %65, %66 : vector<4x128x128xf32>
    %cst_30 = arith.constant 2.000000e+00 : f32
    %68 = vector.broadcast %cst_30 : f32 to vector<4x128x128xf32>
    %69 = arith.subf %68, %67 : vector<4x128x128xf32>
    %70 = arith.mulf %66, %69 : vector<4x128x128xf32>
    %71 = arith.mulf %59, %70 : vector<4x128x128xf32>
    %72 = tpu.iota {dimensions = array<i32: 1>} : vector<4x128x128xi32>
    %73 = tpu.iota {dimensions = array<i32: 2>} : vector<4x128x128xi32>
    %c6_i32 = arith.constant 6 : i32
    %74 = vector.broadcast %c6_i32 : i32 to vector<4x128x128xi32>
    %75 = arith.cmpi slt, %72, %74 : vector<4x128x128xi32>
    %c6_i32_31 = arith.constant 6 : i32
    %76 = vector.broadcast %c6_i32_31 : i32 to vector<4x128x128xi32>
    %77 = arith.cmpi slt, %73, %76 : vector<4x128x128xi32>
    %78 = arith.andi %75, %77 : vector<4x128x128xi1>
    %cst_32 = arith.constant 0.000000e+00 : f32
    %79 = vector.broadcast %cst_32 : f32 to vector<4x128x128xf32>
    %80 = arith.select %78, %71, %79 : vector<4x128x128xi1>, vector<4x128x128xf32>
    %81 = vector.shape_cast %80 : vector<4x128x128xf32> to vector<1x4x128x128xf32>
    %cst_33 = arith.constant dense<0.000000e+00> : vector<1xf32>
    %82 = vector.multi_reduction <add>, %81, %cst_33 [1, 2, 3] : vector<1x4x128x128xf32> to vector<1xf32>
    %83 = vector.shape_cast %82 : vector<1xf32> to vector<1x1x1x1xf32>
    %cst_34 = arith.constant 0.0069444445 : f32
    %84 = vector.broadcast %cst_34 : f32 to vector<1x1x1x1xf32>
    %85 = arith.mulf %83, %84 : vector<1x1x1x1xf32>
    %c0_35 = arith.constant 0 : index
    %c0_36 = arith.constant 0 : index
    %c0_37 = arith.constant 0 : index
    %c0_38 = arith.constant 0 : index
    %86 = vector.load %arg6[%c0_35, %c0_36, %c0_37, %c0_38] : memref<1x1x1x1xf32, #tpu.memory_space<vmem>>, vector<1x1x1x1xf32>
    tpu.vector_store %arg6[%c0_35, %c0_36, %c0_37, %c0_38], %85 {strides = array<i32>} : memref<1x1x1x1xf32, #tpu.memory_space<vmem>>, vector<1x1x1x1xf32>,
    return
  }
  func.func @transform_0(%arg0: i32) -> (i32, i32, i32, i32) {
    %c0_i32 = arith.constant 0 : i32
    %c0_i32_0 = arith.constant 0 : i32
    %c0_i32_1 = arith.constant 0 : i32
    %c0_i32_2 = arith.constant 0 : i32
    return %arg0, %c0_i32, %c0_i32_0, %c0_i32_1 : i32, i32, i32, i32
  }
  func.func @transform_1(%arg0: i32) -> (i32, i32, i32, i32) {
    %c0_i32 = arith.constant 0 : i32
    %c0_i32_0 = arith.constant 0 : i32
    %c0_i32_1 = arith.constant 0 : i32
    %c0_i32_2 = arith.constant 0 : i32
    return %arg0, %c0_i32, %c0_i32_0, %c0_i32_1 : i32, i32, i32, i32
  }
  func.func @transform_2(%arg0: i32) -> (i32, i32) {
    %c0_i32 = arith.constant 0 : i32
    %c0_i32_0 = arith.constant 0 : i32
    %c0_i32_1 = arith.constant 0 : i32
    return %c0_i32, %c0_i32_0 : i32, i32
  }
  func.func @transform_3(%arg0: i32) -> (i32, i32) {
    %c0_i32 = arith.constant 0 : i32
    %c0_i32_0 = arith.constant 0 : i32
    %c0_i32_1 = arith.constant 0 : i32
    return %c0_i32, %c0_i32_0 : i32, i32
  }
  func.func @transform_4(%arg0: i32) -> (i32, i32, i32, i32) {
    %c0_i32 = arith.constant 0 : i32
    %c0_i32_0 = arith.constant 0 : i32
    %c0_i32_1 = arith.constant 0 : i32
    %c0_i32_2 = arith.constant 0 : i32
    return %arg0, %c0_i32, %c0_i32_0, %c0_i32_1 : i32, i32, i32, i32
  }
  func.func @transform_5(%arg0: i32) -> (i32, i32, i32, i32) {
    %c0_i32 = arith.constant 0 : i32
    %c0_i32_0 = arith.constant 0 : i32
    %c0_i32_1 = arith.constant 0 : i32
    %c0_i32_2 = arith.constant 0 : i32
    return %arg0, %c0_i32, %c0_i32_0, %c0_i32_1 : i32, i32, i32, i32
  }
}

</mosaic_0001>

<llo_original>
// kernel: tpu_custom_call.1
$region0: #{tpu_custom_call.1}
  #allocation0 [shape = 'u32[]', space=smem, size = 0x4, offset = 0x4, fixed_abs, tag = 'smem constant byte address 0x4 - core index']
  #allocation1 [shape = 'u32[72,128]{1,0:T(1,128)}', space=vmem, size = 0x9000, scoped, tag = 'internal scratch']
  %s0 = inlined_call_operand.hbm [shape: f32[2,4,16,16], index: 0, kind: input, shape index: {}]
  %s1 = inlined_call_operand.hbm [shape: f32[2,4,16,16], index: 1, kind: input, shape index: {}]
  %s2 = inlined_call_operand.hbm [shape: f32[16,128], index: 2, kind: input, shape index: {}]
  %s3 = inlined_call_operand.hbm [shape: f32[16,128], index: 3, kind: input, shape index: {}]
  %s4 = inlined_call_operand.vmem [shape: f32[2,1,1,1], index: 4, kind: output, shape index: {0}]
  %s5 = inlined_call_operand.vmem [shape: f32[2,1,1,1], index: 5, kind: output, shape index: {1}]
  %6 = xla_tuple %s4, %s5
  %s7 = sld [smem:[#allocation0]]
  $region73: #{tpu_custom_call.1} parent=0
    _
  %s9 = ssub.s32 1, %s7
  %s10 = scalar_select 0, %s9, %s7
  $region1: #{tpu_custom_call.1} parent=0
    #allocation2 [shape = 'u8[65536]{0}', space=vmem, size = 0x10000, scoped, tag = 'input window, operand 0']
    #allocation3 [shape = 's32[2]{0}', space=sflag, size = 0x8, scoped, tag = 'scoped memory for tpu_custom_call.1']
    #allocation4 [shape = 'u8[65536]{0}', space=vmem, size = 0x10000, scoped, tag = 'input window, operand 1']
    #allocation5 [shape = 's32[2]{0}', space=sflag, size = 0x8, scoped, tag = 'scoped memory for tpu_custom_call.1']
    #allocation6 [shape = 'u8[8192]{0}', space=vmem, size = 0x2000, scoped, tag = 'input window, operand 2, single buffered']
    #allocation7 [shape = 'u8[8192]{0}', space=vmem, size = 0x2000, scoped, tag = 'input window, operand 3, single buffered']
    #allocation8 [shape = 's32[1]{0}', space=sflag, size = 0x4, scoped, tag = 'scoped memory for tpu_custom_call.1']
    %11 = vsyncpa [#allocation3], 0
    %s12 = scalar_lea.sflag [#allocation3], 1
    %13 = vsyncpa %s12, 0
    %14 = vsyncpa [#allocation5], 0
    %s15 = scalar_lea.sflag [#allocation5], 1
    %16 = vsyncpa %s15, 0
    %17 = vsyncpa [#allocation8], 0
    loop: start=0, step=1, limit=4
    $region2: #{tpu_custom_call.1} parent=1 // loop_pre_header
      _
    $region3: #{tpu_custom_call.1} parent=1 // loop_header
      %s19 = sphi 0, %s23
      %p20 = scmp.ge.s32.totalorder %s19, 4
      %s29 = sphi 0, %s31
      %s32 = sphi 0, %s29
      %s33 = sphi 0, %s32
      %s49 = sphi 0, %s33
      %s55 = sphi 0, %s57
      %s58 = sphi 0, %s55
      %s59 = sphi 0, %s58
      %s75 = sphi 0, %s59
      %s79 = sphi 0, %s79
      %s81 = sphi 0, %s79
      %s82 = sphi 0, %s81
      %s96 = sphi 0, %s82
      %s100 = sphi 0, %s100
      %s102 = sphi 0, %s100
      %s103 = sphi 0, %s102
      %s117 = sphi 0, %s103
      %s123 = sphi 0, %s125
      %s126 = sphi 0, %s123
      %s127 = sphi 0, %s126
      %s143 = sphi 0, %s127
      %s149 = sphi 0, %s151
      %s152 = sphi 0, %s149
      %s153 = sphi 0, %s152
      %s169 = sphi 0, %s153
    $region4: #{tpu_custom_call.1} parent=1 // loop_header_branch
      %22 = sbr.rel (%p20) target = $region8
    $region5: #{tpu_custom_call.1} parent=1 // loop_body
      %s24 = ssub.s32 %s19, 1
      %s25 = ssub.s32 %s19, 2
      %s26 = sadd.s32 %s19, 1
      %s27 = ssub.s32 %s19, %s26
      %p28 = scmp.eq.s32.totalorder %s27, 0
      %s30 = sadd.s32 %s29, 1
      %s31 = scalar_select %p28, %s29, %s30
      %p34 = pneg %p28
      %p35 = scmp.eq.s32.totalorder %s19, 1
      %p36 = por %p34, %p35
      %p37 = scmp.ne.s32.totalorder %s29, %s32
      %p38 = scmp.eq.s32.totalorder %s19, 0
      %p39 = por %p37, %p38
      %p40 = scmp.ne.s32.totalorder %s29, %s32
      %p41 = scmp.eq.s32.totalorder %s24, 1
      %p42 = por %p40, %p41
      %p43 = scmp.ne.s32.totalorder %s32, %s33
      %p44 = scmp.eq.s32.totalorder %s24, 0
      %p45 = por %p43, %p44
      %p46 = scmp.ne.s32.totalorder %s32, %s33
      %p47 = scmp.eq.s32.totalorder %s25, 1
      %p48 = por %p46, %p47
      %p50 = scmp.ne.s32.totalorder %s33, %s49
      %p51 = scmp.eq.s32.totalorder %s25, 0
      %p52 = por %p50, %p51
      %s53 = ssub.s32 %s19, %s26
      %p54 = scmp.eq.s32.totalorder %s53, 0
      %s56 = sadd.s32 %s55, 1
      %s57 = scalar_select %p54, %s55, %s56
      %p60 = pneg %p54
      %p61 = scmp.eq.s32.totalorder %s19, 1
      %p62 = por %p60, %p61
      %p63 = scmp.ne.s32.totalorder %s55, %s58
      %p64 = scmp.eq.s32.totalorder %s19, 0
      %p65 = por %p63, %p64
      %p66 = scmp.ne.s32.totalorder %s55, %s58
      %p67 = scmp.eq.s32.totalorder %s24, 1
      %p68 = por %p66, %p67
      %p69 = scmp.ne.s32.totalorder %s58, %s59
      %p70 = scmp.eq.s32.totalorder %s24, 0
      %p71 = por %p69, %p70
      %p72 = scmp.ne.s32.totalorder %s58, %s59
      %p73 = scmp.eq.s32.totalorder %s25, 1
      %p74 = por %p72, %p73
      %p76 = scmp.ne.s32.totalorder %s59, %s75
      %p77 = scmp.eq.s32.totalorder %s25, 0
      %p78 = por %p76, %p77
      %s80 = sadd.s32 %s79, 1
      %p83 = scmp.eq.s32.totalorder %s19, 1
      %p84 = scmp.ne.s32.totalorder %s79, %s81
      %p85 = scmp.eq.s32.totalorder %s19, 0
      %p86 = por %p84, %p85
      %p87 = scmp.ne.s32.totalorder %s79, %s81
      %p88 = scmp.eq.s32.totalorder %s24, 1
      %p89 = por %p87, %p88
      %p90 = scmp.ne.s32.totalorder %s81, %s82
      %p91 = scmp.eq.s32.totalorder %s24, 0
      %p92 = por %p90, %p91
      %p93 = scmp.ne.s32.totalorder %s81, %s82
      %p94 = scmp.eq.s32.totalorder %s25, 1
      %p95 = por %p93, %p94
      %p97 = scmp.ne.s32.totalorder %s82, %s96
      %p98 = scmp.eq.s32.totalorder %s25, 0
      %p99 = por %p97, %p98
      %s101 = sadd.s32 %s100, 1
      %p104 = scmp.eq.s32.totalorder %s19, 1
      %p105 = scmp.ne.s32.totalorder %s100, %s102
      %p106 = scmp.eq.s32.totalorder %s19, 0
      %p107 = por %p105, %p106
      %p108 = scmp.ne.s32.totalorder %s100, %s102
      %p109 = scmp.eq.s32.totalorder %s24, 1
      %p110 = por %p108, %p109
      %p111 = scmp.ne.s32.totalorder %s102, %s103
      %p112 = scmp.eq.s32.totalorder %s24, 0
      %p113 = por %p111, %p112
      %p114 = scmp.ne.s32.totalorder %s102, %s103
      %p115 = scmp.eq.s32.totalorder %s25, 1
      %p116 = por %p114, %p115
      %p118 = scmp.ne.s32.totalorder %s103, %s117
      %p119 = scmp.eq.s32.totalorder %s25, 0
      %p120 = por %p118, %p119
      %s121 = ssub.s32 %s19, %s26
      %p122 = scmp.eq.s32.totalorder %s121, 0
      %s124 = sadd.s32 %s123, 1
      %s125 = scalar_select %p122, %s123, %s124
      %p128 = pneg %p122
      %p129 = scmp.eq.s32.totalorder %s19, 1
      %p130 = por %p128, %p129
      %p131 = scmp.ne.s32.totalorder %s123, %s126
      %p132 = scmp.eq.s32.totalorder %s19, 0
      %p133 = por %p131, %p132
      %p134 = scmp.ne.s32.totalorder %s123, %s126
      %p135 = scmp.eq.s32.totalorder %s24, 1
      %p136 = por %p134, %p135
      %p137 = scmp.ne.s32.totalorder %s126, %s127
      %p138 = scmp.eq.s32.totalorder %s24, 0
      %p139 = por %p137, %p138
      %p140 = scmp.ne.s32.totalorder %s126, %s127
      %p141 = scmp.eq.s32.totalorder %s25, 1
      %p142 = por %p140, %p141
      %p144 = scmp.ne.s32.totalorder %s127, %s143
      %p145 = scmp.eq.s32.totalorder %s25, 0
      %p146 = por %p144, %p145
      %s147 = ssub.s32 %s19, %s26
      %p148 = scmp.eq.s32.totalorder %s147, 0
      %s150 = sadd.s32 %s149, 1
      %s151 = scalar_select %p148, %s149, %s150
      %p154 = pneg %p148
      %p155 = scmp.eq.s32.totalorder %s19, 1
      %p156 = por %p154, %p155
      %p157 = scmp.ne.s32.totalorder %s149, %s152
      %p158 = scmp.eq.s32.totalorder %s19, 0
      %p159 = por %p157, %p158
      %p160 = scmp.ne.s32.totalorder %s149, %s152
      %p161 = scmp.eq.s32.totalorder %s24, 1
      %p162 = por %p160, %p161
      %p163 = scmp.ne.s32.totalorder %s152, %s153
      %p164 = scmp.eq.s32.totalorder %s24, 0
      %p165 = por %p163, %p164
      %p166 = scmp.ne.s32.totalorder %s152, %s153
      %p167 = scmp.eq.s32.totalorder %s25, 1
      %p168 = por %p166, %p167
      %p170 = scmp.ne.s32.totalorder %s153, %s169
      %p171 = scmp.eq.s32.totalorder %s25, 0
      %p172 = por %p170, %p171
      %p173 = scmp.le.s32.totalorder 1, %s19
      %p174 = scmp.lt.s32.totalorder %s19, 3
      %p175 = pnand %p173, %p174
      %p176 = pneg %p175
      // Predicated region
      $region9: #{tpu_custom_call.1} parent=5 // pred_check
        _
      $region10: #{tpu_custom_call.1} parent=5 // pred_check_branch
        %178 = sbr.rel (%p175) target = $region12
      $region11: #{tpu_custom_call.1} parent=5 // pred_region
        %s179 = ssub.s32 %s19, 1
        // Predicated region
        $region13: #{tpu_custom_call.1} parent=11 // pred_check
          %p180 = pneg %p92
        $region14: #{tpu_custom_call.1} parent=11 // pred_check_branch
          %182 = sbr.rel (%p180) target = $region16
        $region15: #{tpu_custom_call.1} parent=11 // pred_region
          %184 = vsyncadd [#allocation5], 0
          %s185 = sshll.u32 %s2, 4
          %s186 = int_to_ptr.hbm [resolvable:$true] %s185
          %s187 = sshll.u32 [#allocation6], 4
          %s188 = int_to_ptr.vmem [resolvable:$true] %s187
          %193 = dma.hbm_to_vmem [thread:$0]  %s186, 256, %s188, [#allocation5], 128, 128, 8
        $region16: #{tpu_custom_call.1} parent=11 // pred_fallthru
          _
        // Predicated region
        $region17: #{tpu_custom_call.1} parent=11 // pred_check
          %p194 = pneg %p113
        $region18: #{tpu_custom_call.1} parent=11 // pred_check_branch
          %196 = sbr.rel (%p194) target = $region20
        $region19: #{tpu_custom_call.1} parent=11 // pred_region
          %198 = vsyncadd [#allocation8], 0
          %s199 = sshll.u32 %s3, 4
          %s200 = int_to_ptr.hbm [resolvable:$true] %s199
          %s201 = sshll.u32 [#allocation7], 4
          %s202 = int_to_ptr.vmem [resolvable:$true] %s201
          %207 = dma.hbm_to_vmem [thread:$0]  %s200, 256, %s202, [#allocation8], 128, 128, 8
        $region20: #{tpu_custom_call.1} parent=11 // pred_fallthru
          _
      $region12: #{tpu_custom_call.1} parent=5 // pred_fallthru
        _
      %p208 = scmp.lt.s32.totalorder %s19, 2
      // Predicated region
      $region21: #{tpu_custom_call.1} parent=5 // pred_check
        %p209 = pneg %p208
      $region22: #{tpu_custom_call.1} parent=5 // pred_check_branch
        %211 = sbr.rel (%p209) target = $region24
      $region23: #{tpu_custom_call.1} parent=5 // pred_region
        // Predicated region
        $region25: #{tpu_custom_call.1} parent=23 // pred_check
          %p212 = pneg %p39
        $region26: #{tpu_custom_call.1} parent=23 // pred_check_branch
          %214 = sbr.rel (%p212) target = $region28
        $region27: #{tpu_custom_call.1} parent=23 // pred_region
          %s215 = sand.u32 %s29, 1
          %s216 = scalar_lea.sflag [#allocation3], %s215
          %s217 = sand.u32 %s29, 1
          %s218 = smul.addr %s217, 64
          %s219 = scalar_lea.vmem [#allocation2], %s218
          %221 = vsyncadd %s216, 0
          %s222 = smul.addr %s19, 8
          %s223 = smul.addr %s222, 8
          %s224 = scalar_lea.hbm %s0, %s223
          %s225 = sshll.u32 %s224, 4
          %s226 = int_to_ptr.hbm [resolvable:$true] %s225
          %s227 = sshll.u32 %s219, 4
          %s228 = int_to_ptr.vmem [resolvable:$true] %s227
          %233 = dma.hbm_to_vmem [thread:$0]  %s226, 1024, %s228, %s216, 128, 128, 8
        $region28: #{tpu_custom_call.1} parent=23 // pred_fallthru
          _
        // Predicated region
        $region29: #{tpu_custom_call.1} parent=23 // pred_check
          %p234 = pneg %p65
        $region30: #{tpu_custom_call.1} parent=23 // pred_check_branch
          %236 = sbr.rel (%p234) target = $region32
        $region31: #{tpu_custom_call.1} parent=23 // pred_region
          %s237 = sand.u32 %s19, 1
          %s238 = scalar_lea.sflag [#allocation5], %s237
          %s239 = sand.u32 %s55, 1
          %s240 = smul.addr %s239, 64
          %s241 = scalar_lea.vmem [#allocation4], %s240
          %243 = vsyncadd %s238, 0
          %s244 = smul.addr %s19, 8
          %s245 = smul.addr %s244, 8
          %s246 = scalar_lea.hbm %s1, %s245
          %s247 = sshll.u32 %s246, 4
          %s248 = int_to_ptr.hbm [resolvable:$true] %s247
          %s249 = sshll.u32 %s241, 4
          %s250 = int_to_ptr.vmem [resolvable:$true] %s249
          %255 = dma.hbm_to_vmem [thread:$0]  %s248, 1024, %s250, %s238, 128, 128, 8
        $region32: #{tpu_custom_call.1} parent=23 // pred_fallthru
          _
      $region24: #{tpu_custom_call.1} parent=5 // pred_fallthru
        _
      %p256 = scmp.le.s32.totalorder 1, %s19
      %p257 = scmp.lt.s32.totalorder %s19, 3
      %p258 = pnand %p256, %p257
      %p259 = pneg %p258
      // Predicated region
      $region33: #{tpu_custom_call.1} parent=5 // pred_check
        _
      $region34: #{tpu_custom_call.1} parent=5 // pred_check_branch
        %261 = sbr.rel (%p258) target = $region36
      $region35: #{tpu_custom_call.1} parent=5 // pred_region
        %s262 = ssub.s32 %s19, 1
        %s263 = sand.u32 %s32, 1
        %s264 = scalar_lea.sflag [#allocation3], %s263
        %s265 = sand.u32 %s32, 1
        %s266 = smul.addr %s265, 64
        %s267 = scalar_lea.vmem [#allocation2], %s266
        // Predicated region
        $region37: #{tpu_custom_call.1} parent=35 // pred_check
          %p268 = pneg %p45
        $region38: #{tpu_custom_call.1} parent=35 // pred_check_branch
          %270 = sbr.rel (%p268) target = $region40
        $region39: #{tpu_custom_call.1} parent=35 // pred_region
          %272 = dma.done %s264, 1024
        $region40: #{tpu_custom_call.1} parent=35 // pred_fallthru
          _
        %s273 = sand.u32 %s24, 1
        %s274 = scalar_lea.sflag [#allocation5], %s273
        %s275 = sand.u32 %s58, 1
        %s276 = smul.addr %s275, 64
        %s277 = scalar_lea.vmem [#allocation4], %s276
        // Predicated region
        $region41: #{tpu_custom_call.1} parent=35 // pred_check
          %p278 = pneg %p71
        $region42: #{tpu_custom_call.1} parent=35 // pred_check_branch
          %280 = sbr.rel (%p278) target = $region44
        $region43: #{tpu_custom_call.1} parent=35 // pred_region
          %282 = dma.done %s274, 1024
        $region44: #{tpu_custom_call.1} parent=35 // pred_fallthru
          _
        // Predicated region
        $region45: #{tpu_custom_call.1} parent=35 // pred_check
          %p283 = pneg %p92
        $region46: #{tpu_custom_call.1} parent=35 // pred_check_branch
          %285 = sbr.rel (%p283) target = $region48
        $region47: #{tpu_custom_call.1} parent=35 // pred_region
          %287 = dma.done [#allocation5], 256
        $region48: #{tpu_custom_call.1} parent=35 // pred_fallthru
          _
        // Predicated region
        $region49: #{tpu_custom_call.1} parent=35 // pred_check
          %p288 = pneg %p113
        $region50: #{tpu_custom_call.1} parent=35 // pred_check_branch
          %290 = sbr.rel (%p288) target = $region52
        $region51: #{tpu_custom_call.1} parent=35 // pred_region
          %292 = dma.done [#allocation8], 256
        $region52: #{tpu_custom_call.1} parent=35 // pred_fallthru
          _
        %s293 = sand.u32 %s32, 1
        %s294 = scalar_lea.sflag [#allocation3], %s293
        %s295 = sand.u32 %s32, 1
        %s296 = smul.addr %s295, 64
        %s297 = scalar_lea.vmem [#allocation2], %s296
        %p298 = pneg %p45
        %p299 = pneg %p42
        %s300 = sand.u32 %s24, 1
        %s301 = scalar_lea.sflag [#allocation5], %s300
        %s302 = sand.u32 %s58, 1
        %s303 = smul.addr %s302, 64
        %s304 = scalar_lea.vmem [#allocation4], %s303
        %p305 = pneg %p71
        %p306 = pneg %p68
        %p307 = pneg %p92
        %p308 = pneg %p89
        %p309 = pneg %p113
        %p310 = pneg %p110
        %p311 = pneg %p139
        %p312 = pneg %p136
        %p313 = scmp.lt.s32.totalorder %s24, 1
        %s314 = scalar_select %p313, %s24, 1
        %s315 = scalar_lea.vmem %s4, %s314
        %p316 = pneg %p165
        %p317 = pneg %p162
        %p318 = scmp.lt.s32.totalorder %s24, 1
        %s319 = scalar_select %p318, %s24, 1
        %s320 = scalar_lea.vmem %s5, %s319
        %p321 = scmp.lt.s32.totalorder %s24, 1
        %s322 = scalar_select %p321, %s24, 1
        %s323 = scalar_lea.vmem %s4, %s322
        %p324 = scmp.lt.s32.totalorder %s24, 1
        %s325 = scalar_select %p324, %s24, 1
        %s326 = scalar_lea.vmem %s5, %s325
        %v327 = vld [vmem:[%s267] sm:$0xff]
        %v328 = vld [vmem:[%s267 + $0x8] sm:$0xff]
        %v329 = vld [vmem:[%s267 + $0x10] sm:$0xff]
        %v330 = vld [vmem:[%s267 + $0x18] sm:$0xff]
        %v331 = vld [vmem:[%s267 + $0x20] sm:$0xff]
        %v332 = vld [vmem:[%s267 + $0x28] sm:$0xff]
        %v333 = vld [vmem:[%s267 + $0x30] sm:$0xff]
        %v334 = vld [vmem:[%s267 + $0x38] sm:$0xff]
        %v335 = vld [vmem:[%s277] sm:$0xff]
        %v336 = vld [vmem:[%s277 + $0x8] sm:$0xff]
        %v337 = vld [vmem:[%s277 + $0x10] sm:$0xff]
        %v338 = vld [vmem:[%s277 + $0x18] sm:$0xff]
        %v339 = vld [vmem:[%s277 + $0x20] sm:$0xff]
        %v340 = vld [vmem:[%s277 + $0x28] sm:$0xff]
        %v341 = vld [vmem:[%s277 + $0x30] sm:$0xff]
        %v342 = vld [vmem:[%s277 + $0x38] sm:$0xff]
        %v343 = vsub.f32 %v327, %v335
        %v344 = vsub.f32 %v328, %v336
        %v345 = vsub.f32 %v329, %v337
        %v346 = vsub.f32 %v330, %v338
        %v347 = vsub.f32 %v331, %v339
        %v348 = vsub.f32 %v332, %v340
        %v349 = vsub.f32 %v333, %v341
        %v350 = vsub.f32 %v334, %v342
        %v351 = vmul.f32 %v343, %v343
        %v352 = vmul.f32 %v344, %v344
        %v353 = vmul.f32 %v345, %v345
        %v354 = vmul.f32 %v346, %v346
        %v355 = vmul.f32 %v347, %v347
        %v356 = vmul.f32 %v348, %v348
        %v357 = vmul.f32 %v349, %v349
        %v358 = vmul.f32 %v350, %v350
        %vm359 = vcmask 130048
        %v360 = vsel %vm359, %v351, 0.0
        %v361 = vsel %vm359, %v352, 0.0
        %v362 = vadd.f32 %v360, %v361
        %v363 = vsel %vm359, %v353, 0.0
        %v364 = vadd.f32 %v362, %v363
        %v365 = vsel %vm359, %v354, 0.0
        %v366 = vadd.f32 %v364, %v365
        %v367 = vsel %vm359, %v355, 0.0
        %v368 = vadd.f32 %v366, %v367
        %v369 = vsel %vm359, %v356, 0.0
        %v370 = vadd.f32 %v368, %v369
        %v371 = vsel %vm359, %v357, 0.0
        %v372 = vadd.f32 %v370, %v371
        %v373 = vsel %vm359, %v358, 0.0
        %v374 = vadd.f32 %v372, %v373
        %375 = vadd.xlane.f32.xlu0 %v374
        %v376 = vpop.xlane.xlu0 %375
        %v377 = vrot.slane %v376, 4
        %v378 = vadd.f32 %v376, %v377
        %v379 = vrot.slane %v378, 2
        %v380 = vadd.f32 %v378, %v379
        %v381 = vrot.slane %v380, 1
        %v382 = vadd.f32 %v380, %v381
        %v383 = vmul.f32 %v382, 0.0009765625
        %vm384 = vcmask 0
        %385 = vst.msk [vmem:[%s323] sm:$0x1] %vm384, %v383
        %v386 = vld [vmem:[#allocation6] sm:$0xff]
        %v387 = vld [vmem:[#allocation6 + $0x8] sm:$0xff]
        %v388 = vld [vmem:[#allocation7] sm:$0xff]
        %v389 = vld [vmem:[#allocation7 + $0x8] sm:$0xff]
        %v391 = vsel %vm359, %v327, 0
        %v394 = vsel %vm359, %v328, 0
        %v397 = vsel %vm359, %v329, 0
        %v400 = vsel %vm359, %v330, 0
        %v403 = vsel %vm359, %v331, 0
        %v406 = vsel %vm359, %v332, 0
        %v409 = vsel %vm359, %v333, 0
        %v412 = vsel %vm359, %v334, 0
        %414 = vmatpush.msra.mxu0 0.0
        %415 = vmatpush.msra.mxu0 0.0
        %416 = vmatpush.msra.mxu0 0.0
        %417 = vmatpush.msra.mxu0 0.0
        %418 = vmatpush.msra.mxu0 0.0
        %419 = vmatpush.msra.mxu0 0.0
        %420 = vmatpush.msra.mxu0 0.0
        %421 = vmatpush.msra.mxu0 0.0
        %422 = vmatpush.msra.mxu0 0.0
        %423 = vmatpush.msra.mxu0 0.0
        %424 = vmatpush.msra.mxu0 0.0
        %425 = vmatpush.msra.mxu0 0.0
        %426 = vmatpush.msra.mxu0 0.0
        %427 = vmatpush.msra.mxu0 0.0
        %428 = vmatpush.msra.mxu0 %v387
        %429 = vmatpush.msra.mxu0 %v386
        %430 = vmatmul.f32.gmra.mxu0 %v391
        %v431 = vpop.f32.mrf.mxu0
        %v432 = vadd.f32 0.0, %v431
        %433 = vmatmul.f32.gmra.mxu0 %v394
        %v434 = vpop.f32.mrf.mxu0
        %v435 = vadd.f32 0.0, %v434
        %436 = vmatmul.f32.gmra.mxu0 %v397
        %v437 = vpop.f32.mrf.mxu0
        %v438 = vadd.f32 0.0, %v437
        %439 = vmatmul.f32.gmra.mxu0 %v400
        %v440 = vpop.f32.mrf.mxu0
        %v441 = vadd.f32 0.0, %v440
        %442 = vmatmul.f32.gmra.mxu0 %v403
        %v443 = vpop.f32.mrf.mxu0
        %v444 = vadd.f32 0.0, %v443
        %445 = vmatmul.f32.gmra.mxu0 %v406
        %v446 = vpop.f32.mrf.mxu0
        %v447 = vadd.f32 0.0, %v446
        %448 = vmatmul.f32.gmra.mxu0 %v409
        %v449 = vpop.f32.mrf.mxu0
        %v450 = vadd.f32 0.0, %v449
        %451 = vmatmul.f32.gmra.mxu0 %v412
        %v452 = vpop.f32.mrf.mxu0
        %v453 = vadd.f32 0.0, %v452
        %454 = vdwg.mxu0
        %455 = vxpose.xlu0.b32.start [1/16] %v432, 128
        %456 = vxpose.xlu0.b32.cont [2/16] %v435, 128
        %457 = vxpose.xlu0.b32.cont [3/16] 0.0, 128
        %458 = vxpose.xlu0.b32.cont [4/16] 0.0, 128
        %459 = vxpose.xlu0.b32.cont [5/16] 0.0, 128
        %460 = vxpose.xlu0.b32.cont [6/16] 0.0, 128
        %461 = vxpose.xlu0.b32.cont [7/16] 0.0, 128
        %462 = vxpose.xlu0.b32.cont [8/16] 0.0, 128
        %463 = vxpose.xlu0.b32.cont [9/16] 0.0, 128
        %464 = vxpose.xlu0.b32.cont [10/16] 0.0, 128
        %465 = vxpose.xlu0.b32.cont [11/16] 0.0, 128
        %466 = vxpose.xlu0.b32.cont [12/16] 0.0, 128
        %467 = vxpose.xlu0.b32.cont [13/16] 0.0, 128
        %468 = vxpose.xlu0.b32.cont [14/16] 0.0, 128
        %469 = vxpose.xlu0.b32.cont [15/16] 0.0, 128
        %470 = vxpose.xlu0.b32.end [16/16] 0.0, 128
        %v471 = vpop.trf.xlu0
        %v472 = vpop.trf.xlu0
        %v473 = vpop.trf.xlu0
        %v474 = vpop.trf.xlu0
        %v475 = vpop.trf.xlu0
        %v476 = vpop.trf.xlu0
        %v477 = vpop.trf.xlu0
        %v478 = vpop.trf.xlu0
        %v479 = vpop.trf.xlu0
        %v480 = vpop.trf.xlu0
        %v481 = vpop.trf.xlu0
        %v482 = vpop.trf.xlu0
        %v483 = vpop.trf.xlu0
        %v484 = vpop.trf.xlu0
        %v485 = vpop.trf.xlu0
        %v486 = vpop.trf.xlu0
        %487 = vxpose.xlu0.b32.start [1/16] %v438, 128
        %488 = vxpose.xlu0.b32.cont [2/16] %v441, 128
        %489 = vxpose.xlu0.b32.cont [3/16] 0.0, 128
        %490 = vxpose.xlu0.b32.cont [4/16] 0.0, 128
        %491 = vxpose.xlu0.b32.cont [5/16] 0.0, 128
        %492 = vxpose.xlu0.b32.cont [6/16] 0.0, 128
        %493 = vxpose.xlu0.b32.cont [7/16] 0.0, 128
        %494 = vxpose.xlu0.b32.cont [8/16] 0.0, 128
        %495 = vxpose.xlu0.b32.cont [9/16] 0.0, 128
        %496 = vxpose.xlu0.b32.cont [10/16] 0.0, 128
        %497 = vxpose.xlu0.b32.cont [11/16] 0.0, 128
        %498 = vxpose.xlu0.b32.cont [12/16] 0.0, 128
        %499 = vxpose.xlu0.b32.cont [13/16] 0.0, 128
        %500 = vxpose.xlu0.b32.cont [14/16] 0.0, 128
        %501 = vxpose.xlu0.b32.cont [15/16] 0.0, 128
        %502 = vxpose.xlu0.b32.end [16/16] 0.0, 128
        %v503 = vpop.trf.xlu0
        %v504 = vpop.trf.xlu0
        %v505 = vpop.trf.xlu0
        %v506 = vpop.trf.xlu0
        %v507 = vpop.trf.xlu0
        %v508 = vpop.trf.xlu0
        %v509 = vpop.trf.xlu0
        %v510 = vpop.trf.xlu0
        %v511 = vpop.trf.xlu0
        %v512 = vpop.trf.xlu0
        %v513 = vpop.trf.xlu0
        %v514 = vpop.trf.xlu0
        %v515 = vpop.trf.xlu0
        %v516 = vpop.trf.xlu0
        %v517 = vpop.trf.xlu0
        %v518 = vpop.trf.xlu0
        %519 = vxpose.xlu0.b32.start [1/16] %v444, 128
        %520 = vxpose.xlu0.b32.cont [2/16] %v447, 128
        %521 = vxpose.xlu0.b32.cont [3/16] 0.0, 128
        %522 = vxpose.xlu0.b32.cont [4/16] 0.0, 128
        %523 = vxpose.xlu0.b32.cont [5/16] 0.0, 128
        %524 = vxpose.xlu0.b32.cont [6/16] 0.0, 128
        %525 = vxpose.xlu0.b32.cont [7/16] 0.0, 128
        %526 = vxpose.xlu0.b32.cont [8/16] 0.0, 128
        %527 = vxpose.xlu0.b32.cont [9/16] 0.0, 128
        %528 = vxpose.xlu0.b32.cont [10/16] 0.0, 128
        %529 = vxpose.xlu0.b32.cont [11/16] 0.0, 128
        %530 = vxpose.xlu0.b32.cont [12/16] 0.0, 128
        %531 = vxpose.xlu0.b32.cont [13/16] 0.0, 128
        %532 = vxpose.xlu0.b32.cont [14/16] 0.0, 128
        %533 = vxpose.xlu0.b32.cont [15/16] 0.0, 128
        %534 = vxpose.xlu0.b32.end [16/16] 0.0, 128
        %v535 = vpop.trf.xlu0
        %v536 = vpop.trf.xlu0
        %v537 = vpop.trf.xlu0
        %v538 = vpop.trf.xlu0
        %v539 = vpop.trf.xlu0
        %v540 = vpop.trf.xlu0
        %v541 = vpop.trf.xlu0
        %v542 = vpop.trf.xlu0
        %v543 = vpop.trf.xlu0
        %v544 = vpop.trf.xlu0
        %v545 = vpop.trf.xlu0
        %v546 = vpop.trf.xlu0
        %v547 = vpop.trf.xlu0
        %v548 = vpop.trf.xlu0
        %v549 = vpop.trf.xlu0
        %v550 = vpop.trf.xlu0
        %551 = vxpose.xlu0.b32.start [1/16] %v450, 128
        %552 = vxpose.xlu0.b32.cont [2/16] %v453, 128
        %553 = vxpose.xlu0.b32.cont [3/16] 0.0, 128
        %554 = vxpose.xlu0.b32.cont [4/16] 0.0, 128
        %555 = vxpose.xlu0.b32.cont [5/16] 0.0, 128
        %556 = vxpose.xlu0.b32.cont [6/16] 0.0, 128
        %557 = vxpose.xlu0.b32.cont [7/16] 0.0, 128
        %558 = vxpose.xlu0.b32.cont [8/16] 0.0, 128
        %559 = vxpose.xlu0.b32.cont [9/16] 0.0, 128
        %560 = vxpose.xlu0.b32.cont [10/16] 0.0, 128
        %561 = vxpose.xlu0.b32.cont [11/16] 0.0, 128
        %562 = vxpose.xlu0.b32.cont [12/16] 0.0, 128
        %563 = vxpose.xlu0.b32.cont [13/16] 0.0, 128
        %564 = vxpose.xlu0.b32.cont [14/16] 0.0, 128
        %565 = vxpose.xlu0.b32.cont [15/16] 0.0, 128
        %566 = vxpose.xlu0.b32.end [16/16] 0.0, 128
        %v567 = vpop.trf.xlu0
        %v568 = vpop.trf.xlu0
        %v569 = vpop.trf.xlu0
        %v570 = vpop.trf.xlu0
        %v571 = vpop.trf.xlu0
        %v572 = vpop.trf.xlu0
        %v573 = vpop.trf.xlu0
        %v574 = vpop.trf.xlu0
        %v575 = vpop.trf.xlu0
        %v576 = vpop.trf.xlu0
        %v577 = vpop.trf.xlu0
        %v578 = vpop.trf.xlu0
        %v579 = vpop.trf.xlu0
        %v580 = vpop.trf.xlu0
        %v581 = vpop.trf.xlu0
        %v582 = vpop.trf.xlu0
        %v584 = vsel %vm359, %v471, 0
        %v587 = vsel %vm359, %v472, 0
        %v590 = vsel %vm359, %v473, 0
        %v593 = vsel %vm359, %v474, 0
        %v596 = vsel %vm359, %v475, 0
        %v599 = vsel %vm359, %v476, 0
        %v602 = vsel %vm359, %v477, 0
        %v605 = vsel %vm359, %v478, 0
        %v608 = vsel %vm359, %v479, 0
        %v611 = vsel %vm359, %v480, 0
        %v614 = vsel %vm359, %v481, 0
        %v617 = vsel %vm359, %v482, 0
        %v620 = vsel %vm359, %v483, 0
        %v623 = vsel %vm359, %v484, 0
        %v626 = vsel %vm359, %v485, 0
        %v629 = vsel %vm359, %v486, 0
        %v632 = vsel %vm359, %v503, 0
        %v635 = vsel %vm359, %v504, 0
        %v638 = vsel %vm359, %v505, 0
        %v641 = vsel %vm359, %v506, 0
        %v644 = vsel %vm359, %v507, 0
        %v647 = vsel %vm359, %v508, 0
        %v650 = vsel %vm359, %v509, 0
        %v653 = vsel %vm359, %v510, 0
        %v656 = vsel %vm359, %v511, 0
        %v659 = vsel %vm359, %v512, 0
        %v662 = vsel %vm359, %v513, 0
        %v665 = vsel %vm359, %v514, 0
        %v668 = vsel %vm359, %v515, 0
        %v671 = vsel %vm359, %v516, 0
        %v674 = vsel %vm359, %v517, 0
        %v677 = vsel %vm359, %v518, 0
        %v680 = vsel %vm359, %v535, 0
        %v683 = vsel %vm359, %v536, 0
        %v686 = vsel %vm359, %v537, 0
        %v689 = vsel %vm359, %v538, 0
        %v692 = vsel %vm359, %v539, 0
        %v695 = vsel %vm359, %v540, 0
        %v698 = vsel %vm359, %v541, 0
        %v701 = vsel %vm359, %v542, 0
        %v704 = vsel %vm359, %v543, 0
        %v707 = vsel %vm359, %v544, 0
        %v710 = vsel %vm359, %v545, 0
        %v713 = vsel %vm359, %v546, 0
        %v716 = vsel %vm359, %v547, 0
        %v719 = vsel %vm359, %v548, 0
        %v722 = vsel %vm359, %v549, 0
        %v725 = vsel %vm359, %v550, 0
        %v728 = vsel %vm359, %v567, 0
        %v731 = vsel %vm359, %v568, 0
        %v734 = vsel %vm359, %v569, 0
        %v737 = vsel %vm359, %v570, 0
        %v740 = vsel %vm359, %v571, 0
        %v743 = vsel %vm359, %v572, 0
        %v746 = vsel %vm359, %v573, 0
        %v749 = vsel %vm359, %v574, 0
        %v752 = vsel %vm359, %v575, 0
        %v755 = vsel %vm359, %v576, 0
        %v758 = vsel %vm359, %v577, 0
        %v761 = vsel %vm359, %v578, 0
        %v764 = vsel %vm359, %v579, 0
        %v767 = vsel %vm359, %v580, 0
        %v770 = vsel %vm359, %v581, 0
        %v773 = vsel %vm359, %v582, 0
        %775 = vmatpush.msra.mxu0 0.0
        %776 = vmatpush.msra.mxu0 0.0
        %777 = vmatpush.msra.mxu0 0.0
        %778 = vmatpush.msra.mxu0 0.0
        %779 = vmatpush.msra.mxu0 0.0
        %780 = vmatpush.msra.mxu0 0.0
        %781 = vmatpush.msra.mxu0 0.0
        %782 = vmatpush.msra.mxu0 0.0
        %783 = vmatpush.msra.mxu0 0.0
        %784 = vmatpush.msra.mxu0 0.0
        %785 = vmatpush.msra.mxu0 0.0
        %786 = vmatpush.msra.mxu0 0.0
        %787 = vmatpush.msra.mxu0 0.0
        %788 = vmatpush.msra.mxu0 0.0
        %789 = vmatpush.msra.mxu0 %v389
        %790 = vmatpush.msra.mxu0 %v388
        %791 = vmatmul.f32.gmra.mxu0 %v584
        %v792 = vpop.f32.mrf.mxu0
        %v793 = vadd.f32 0.0, %v792
        %794 = vmatmul.f32.gmra.mxu0 %v587
        %v795 = vpop.f32.mrf.mxu0
        %v796 = vadd.f32 0.0, %v795
        %797 = vmatmul.f32.gmra.mxu0 %v590
        %v798 = vpop.f32.mrf.mxu0
        %v799 = vadd.f32 0.0, %v798
        %800 = vmatmul.f32.gmra.mxu0 %v593
        %v801 = vpop.f32.mrf.mxu0
        %v802 = vadd.f32 0.0, %v801
        %803 = vmatmul.f32.gmra.mxu0 %v596
        %v804 = vpop.f32.mrf.mxu0
        %v805 = vadd.f32 0.0, %v804
        %806 = vmatmul.f32.gmra.mxu0 %v599
        %v807 = vpop.f32.mrf.mxu0
        %v808 = vadd.f32 0.0, %v807
        %809 = vmatmul.f32.gmra.mxu0 %v602
        %v810 = vpop.f32.mrf.mxu0
        %v811 = vadd.f32 0.0, %v810
        %812 = vmatmul.f32.gmra.mxu0 %v605
        %v813 = vpop.f32.mrf.mxu0
        %v814 = vadd.f32 0.0, %v813
        %815 = vmatmul.f32.gmra.mxu0 %v608
        %v816 = vpop.f32.mrf.mxu0
        %v817 = vadd.f32 0.0, %v816
        %818 = vmatmul.f32.gmra.mxu0 %v611
        %v819 = vpop.f32.mrf.mxu0
        %v820 = vadd.f32 0.0, %v819
        %821 = vmatmul.f32.gmra.mxu0 %v614
        %v822 = vpop.f32.mrf.mxu0
        %v823 = vadd.f32 0.0, %v822
        %824 = vmatmul.f32.gmra.mxu0 %v617
        %v825 = vpop.f32.mrf.mxu0
        %v826 = vadd.f32 0.0, %v825
        %827 = vmatmul.f32.gmra.mxu0 %v620
        %v828 = vpop.f32.mrf.mxu0
        %v829 = vadd.f32 0.0, %v828
        %830 = vmatmul.f32.gmra.mxu0 %v623
        %v831 = vpop.f32.mrf.mxu0
        %v832 = vadd.f32 0.0, %v831
        %833 = vmatmul.f32.gmra.mxu0 %v626
        %v834 = vpop.f32.mrf.mxu0
        %v835 = vadd.f32 0.0, %v834
        %836 = vmatmul.f32.gmra.mxu0 %v629
        %v837 = vpop.f32.mrf.mxu0
        %v838 = vadd.f32 0.0, %v837
        %839 = vmatmul.f32.gmra.mxu0 %v632
        %v840 = vpop.f32.mrf.mxu0
        %v841 = vadd.f32 0.0, %v840
        %842 = vmatmul.f32.gmra.mxu0 %v635
        %v843 = vpop.f32.mrf.mxu0
        %v844 = vadd.f32 0.0, %v843
        %845 = vmatmul.f32.gmra.mxu0 %v638
        %v846 = vpop.f32.mrf.mxu0
        %v847 = vadd.f32 0.0, %v846
        %848 = vmatmul.f32.gmra.mxu0 %v641
        %v849 = vpop.f32.mrf.mxu0
        %v850 = vadd.f32 0.0, %v849
        %851 = vmatmul.f32.gmra.mxu0 %v644
        %v852 = vpop.f32.mrf.mxu0
        %v853 = vadd.f32 0.0, %v852
        %854 = vmatmul.f32.gmra.mxu0 %v647
        %v855 = vpop.f32.mrf.mxu0
        %v856 = vadd.f32 0.0, %v855
        %857 = vmatmul.f32.gmra.mxu0 %v650
        %v858 = vpop.f32.mrf.mxu0
        %v859 = vadd.f32 0.0, %v858
        %860 = vmatmul.f32.gmra.mxu0 %v653
        %v861 = vpop.f32.mrf.mxu0
        %v862 = vadd.f32 0.0, %v861
        %863 = vmatmul.f32.gmra.mxu0 %v656
        %v864 = vpop.f32.mrf.mxu0
        %v865 = vadd.f32 0.0, %v864
        %866 = vmatmul.f32.gmra.mxu0 %v659
        %v867 = vpop.f32.mrf.mxu0
        %v868 = vadd.f32 0.0, %v867
        %869 = vmatmul.f32.gmra.mxu0 %v662
        %v870 = vpop.f32.mrf.mxu0
        %v871 = vadd.f32 0.0, %v870
        %872 = vmatmul.f32.gmra.mxu0 %v665
        %v873 = vpop.f32.mrf.mxu0
        %v874 = vadd.f32 0.0, %v873
        %875 = vmatmul.f32.gmra.mxu0 %v668
        %v876 = vpop.f32.mrf.mxu0
        %v877 = vadd.f32 0.0, %v876
        %878 = vmatmul.f32.gmra.mxu0 %v671
        %v879 = vpop.f32.mrf.mxu0
        %v880 = vadd.f32 0.0, %v879
        %881 = vmatmul.f32.gmra.mxu0 %v674
        %v882 = vpop.f32.mrf.mxu0
        %v883 = vadd.f32 0.0, %v882
        %884 = vmatmul.f32.gmra.mxu0 %v677
        %v885 = vpop.f32.mrf.mxu0
        %v886 = vadd.f32 0.0, %v885
        %887 = vmatmul.f32.gmra.mxu0 %v680
        %v888 = vpop.f32.mrf.mxu0
        %v889 = vadd.f32 0.0, %v888
        %890 = vmatmul.f32.gmra.mxu0 %v683
        %v891 = vpop.f32.mrf.mxu0
        %v892 = vadd.f32 0.0, %v891
        %893 = vmatmul.f32.gmra.mxu0 %v686
        %v894 = vpop.f32.mrf.mxu0
        %v895 = vadd.f32 0.0, %v894
        %896 = vmatmul.f32.gmra.mxu0 %v689
        %v897 = vpop.f32.mrf.mxu0
        %v898 = vadd.f32 0.0, %v897
        %899 = vmatmul.f32.gmra.mxu0 %v692
        %v900 = vpop.f32.mrf.mxu0
        %v901 = vadd.f32 0.0, %v900
        %902 = vmatmul.f32.gmra.mxu0 %v695
        %v903 = vpop.f32.mrf.mxu0
        %v904 = vadd.f32 0.0, %v903
        %905 = vmatmul.f32.gmra.mxu0 %v698
        %v906 = vpop.f32.mrf.mxu0
        %v907 = vadd.f32 0.0, %v906
        %908 = vmatmul.f32.gmra.mxu0 %v701
        %v909 = vpop.f32.mrf.mxu0
        %v910 = vadd.f32 0.0, %v909
        %911 = vmatmul.f32.gmra.mxu0 %v704
        %v912 = vpop.f32.mrf.mxu0
        %v913 = vadd.f32 0.0, %v912
        %914 = vmatmul.f32.gmra.mxu0 %v707
        %v915 = vpop.f32.mrf.mxu0
        %v916 = vadd.f32 0.0, %v915
        %917 = vmatmul.f32.gmra.mxu0 %v710
        %v918 = vpop.f32.mrf.mxu0
        %v919 = vadd.f32 0.0, %v918
        %920 = vmatmul.f32.gmra.mxu0 %v713
        %v921 = vpop.f32.mrf.mxu0
        %v922 = vadd.f32 0.0, %v921
        %923 = vmatmul.f32.gmra.mxu0 %v716
        %v924 = vpop.f32.mrf.mxu0
        %v925 = vadd.f32 0.0, %v924
        %926 = vmatmul.f32.gmra.mxu0 %v719
        %v927 = vpop.f32.mrf.mxu0
        %v928 = vadd.f32 0.0, %v927
        %929 = vmatmul.f32.gmra.mxu0 %v722
        %v930 = vpop.f32.mrf.mxu0
        %v931 = vadd.f32 0.0, %v930
        %932 = vmatmul.f32.gmra.mxu0 %v725
        %v933 = vpop.f32.mrf.mxu0
        %v934 = vadd.f32 0.0, %v933
        %935 = vmatmul.f32.gmra.mxu0 %v728
        %v936 = vpop.f32.mrf.mxu0
        %v937 = vadd.f32 0.0, %v936
        %938 = vmatmul.f32.gmra.mxu0 %v731
        %v939 = vpop.f32.mrf.mxu0
        %v940 = vadd.f32 0.0, %v939
        %941 = vmatmul.f32.gmra.mxu0 %v734
        %v942 = vpop.f32.mrf.mxu0
        %v943 = vadd.f32 0.0, %v942
        %944 = vmatmul.f32.gmra.mxu0 %v737
        %v945 = vpop.f32.mrf.mxu0
        %v946 = vadd.f32 0.0, %v945
        %947 = vmatmul.f32.gmra.mxu0 %v740
        %v948 = vpop.f32.mrf.mxu0
        %v949 = vadd.f32 0.0, %v948
        %950 = vmatmul.f32.gmra.mxu0 %v743
        %v951 = vpop.f32.mrf.mxu0
        %v952 = vadd.f32 0.0, %v951
        %953 = vmatmul.f32.gmra.mxu0 %v746
        %v954 = vpop.f32.mrf.mxu0
        %v955 = vadd.f32 0.0, %v954
        %956 = vmatmul.f32.gmra.mxu0 %v749
        %v957 = vpop.f32.mrf.mxu0
        %v958 = vadd.f32 0.0, %v957
        %959 = vmatmul.f32.gmra.mxu0 %v752
        %v960 = vpop.f32.mrf.mxu0
        %v961 = vadd.f32 0.0, %v960
        %962 = vmatmul.f32.gmra.mxu0 %v755
        %v963 = vpop.f32.mrf.mxu0
        %v964 = vadd.f32 0.0, %v963
        %965 = vmatmul.f32.gmra.mxu0 %v758
        %v966 = vpop.f32.mrf.mxu0
        %v967 = vadd.f32 0.0, %v966
        %968 = vmatmul.f32.gmra.mxu0 %v761
        %v969 = vpop.f32.mrf.mxu0
        %v970 = vadd.f32 0.0, %v969
        %971 = vmatmul.f32.gmra.mxu0 %v764
        %v972 = vpop.f32.mrf.mxu0
        %v973 = vadd.f32 0.0, %v972
        %974 = vmatmul.f32.gmra.mxu0 %v767
        %v975 = vpop.f32.mrf.mxu0
        %v976 = vadd.f32 0.0, %v975
        %977 = vmatmul.f32.gmra.mxu0 %v770
        %v978 = vpop.f32.mrf.mxu0
        %v979 = vadd.f32 0.0, %v978
        %980 = vmatmul.f32.gmra.mxu0 %v773
        %v981 = vpop.f32.mrf.mxu0
        %v982 = vadd.f32 0.0, %v981
        %983 = vdwg.mxu0
        %v985 = vsel %vm359, %v335, 0
        %v988 = vsel %vm359, %v336, 0
        %v991 = vsel %vm359, %v337, 0
        %v994 = vsel %vm359, %v338, 0
        %v997 = vsel %vm359, %v339, 0
        %v1000 = vsel %vm359, %v340, 0
        %v1003 = vsel %vm359, %v341, 0
        %v1006 = vsel %vm359, %v342, 0
        %1008 = vmatpush.msra.mxu0 0.0
        %1009 = vmatpush.msra.mxu0 0.0
        %1010 = vmatpush.msra.mxu0 0.0
        %1011 = vmatpush.msra.mxu0 0.0
        %1012 = vmatpush.msra.mxu0 0.0
        %1013 = vmatpush.msra.mxu0 0.0
        %1014 = vmatpush.msra.mxu0 0.0
        %1015 = vmatpush.msra.mxu0 0.0
        %1016 = vmatpush.msra.mxu0 0.0
        %1017 = vmatpush.msra.mxu0 0.0
        %1018 = vmatpush.msra.mxu0 0.0
        %1019 = vmatpush.msra.mxu0 0.0
        %1020 = vmatpush.msra.mxu0 0.0
        %1021 = vmatpush.msra.mxu0 0.0
        %1022 = vmatpush.msra.mxu0 %v387
        %1023 = vmatpush.msra.mxu0 %v386
        %1024 = vmatmul.f32.gmra.mxu0 %v985
        %v1025 = vpop.f32.mrf.mxu0
        %v1026 = vadd.f32 0.0, %v1025
        %1027 = vmatmul.f32.gmra.mxu0 %v988
        %v1028 = vpop.f32.mrf.mxu0
        %v1029 = vadd.f32 0.0, %v1028
        %1030 = vmatmul.f32.gmra.mxu0 %v991
        %v1031 = vpop.f32.mrf.mxu0
        %v1032 = vadd.f32 0.0, %v1031
        %1033 = vmatmul.f32.gmra.mxu0 %v994
        %v1034 = vpop.f32.mrf.mxu0
        %v1035 = vadd.f32 0.0, %v1034
        %1036 = vmatmul.f32.gmra.mxu0 %v997
        %v1037 = vpop.f32.mrf.mxu0
        %v1038 = vadd.f32 0.0, %v1037
        %1039 = vmatmul.f32.gmra.mxu0 %v1000
        %v1040 = vpop.f32.mrf.mxu0
        %v1041 = vadd.f32 0.0, %v1040
        %1042 = vmatmul.f32.gmra.mxu0 %v1003
        %v1043 = vpop.f32.mrf.mxu0
        %v1044 = vadd.f32 0.0, %v1043
        %1045 = vmatmul.f32.gmra.mxu0 %v1006
        %v1046 = vpop.f32.mrf.mxu0
        %v1047 = vadd.f32 0.0, %v1046
        %1048 = vdwg.mxu0
        %1049 = vxpose.xlu0.b32.start [1/16] %v1026, 128
        %1050 = vxpose.xlu0.b32.cont [2/16] %v1029, 128
        %1051 = vxpose.xlu0.b32.cont [3/16] 0.0, 128
        %1052 = vxpose.xlu0.b32.cont [4/16] 0.0, 128
        %1053 = vxpose.xlu0.b32.cont [5/16] 0.0, 128
        %1054 = vxpose.xlu0.b32.cont [6/16] 0.0, 128
        %1055 = vxpose.xlu0.b32.cont [7/16] 0.0, 128
        %1056 = vxpose.xlu0.b32.cont [8/16] 0.0, 128
        %1057 = vxpose.xlu0.b32.cont [9/16] 0.0, 128
        %1058 = vxpose.xlu0.b32.cont [10/16] 0.0, 128
        %1059 = vxpose.xlu0.b32.cont [11/16] 0.0, 128
        %1060 = vxpose.xlu0.b32.cont [12/16] 0.0, 128
        %1061 = vxpose.xlu0.b32.cont [13/16] 0.0, 128
        %1062 = vxpose.xlu0.b32.cont [14/16] 0.0, 128
        %1063 = vxpose.xlu0.b32.cont [15/16] 0.0, 128
        %1064 = vxpose.xlu0.b32.end [16/16] 0.0, 128
        %v1065 = vpop.trf.xlu0
        %v1066 = vpop.trf.xlu0
        %v1067 = vpop.trf.xlu0
        %v1068 = vpop.trf.xlu0
        %v1069 = vpop.trf.xlu0
        %v1070 = vpop.trf.xlu0
        %v1071 = vpop.trf.xlu0
        %v1072 = vpop.trf.xlu0
        %v1073 = vpop.trf.xlu0
        %v1074 = vpop.trf.xlu0
        %v1075 = vpop.trf.xlu0
        %v1076 = vpop.trf.xlu0
        %v1077 = vpop.trf.xlu0
        %v1078 = vpop.trf.xlu0
        %v1079 = vpop.trf.xlu0
        %v1080 = vpop.trf.xlu0
        %1081 = vxpose.xlu0.b32.start [1/16] %v1032, 128
        %1082 = vxpose.xlu0.b32.cont [2/16] %v1035, 128
        %1083 = vxpose.xlu0.b32.cont [3/16] 0.0, 128
        %1084 = vxpose.xlu0.b32.cont [4/16] 0.0, 128
        %1085 = vxpose.xlu0.b32.cont [5/16] 0.0, 128
        %1086 = vxpose.xlu0.b32.cont [6/16] 0.0, 128
        %1087 = vxpose.xlu0.b32.cont [7/16] 0.0, 128
        %1088 = vxpose.xlu0.b32.cont [8/16] 0.0, 128
        %1089 = vxpose.xlu0.b32.cont [9/16] 0.0, 128
        %1090 = vxpose.xlu0.b32.cont [10/16] 0.0, 128
        %1091 = vxpose.xlu0.b32.cont [11/16] 0.0, 128
        %1092 = vxpose.xlu0.b32.cont [12/16] 0.0, 128
        %1093 = vxpose.xlu0.b32.cont [13/16] 0.0, 128
        %1094 = vxpose.xlu0.b32.cont [14/16] 0.0, 128
        %1095 = vxpose.xlu0.b32.cont [15/16] 0.0, 128
        %1096 = vxpose.xlu0.b32.end [16/16] 0.0, 128
        %v1097 = vpop.trf.xlu0
        %v1098 = vpop.trf.xlu0
        %v1099 = vpop.trf.xlu0
        %v1100 = vpop.trf.xlu0
        %v1101 = vpop.trf.xlu0
        %v1102 = vpop.trf.xlu0
        %v1103 = vpop.trf.xlu0
        %v1104 = vpop.trf.xlu0
        %v1105 = vpop.trf.xlu0
        %v1106 = vpop.trf.xlu0
        %v1107 = vpop.trf.xlu0
        %v1108 = vpop.trf.xlu0
        %v1109 = vpop.trf.xlu0
        %v1110 = vpop.trf.xlu0
        %v1111 = vpop.trf.xlu0
        %v1112 = vpop.trf.xlu0
        %1113 = vxpose.xlu0.b32.start [1/16] %v1038, 128
        %1114 = vxpose.xlu0.b32.cont [2/16] %v1041, 128
        %1115 = vxpose.xlu0.b32.cont [3/16] 0.0, 128
        %1116 = vxpose.xlu0.b32.cont [4/16] 0.0, 128
        %1117 = vxpose.xlu0.b32.cont [5/16] 0.0, 128
        %1118 = vxpose.xlu0.b32.cont [6/16] 0.0, 128
        %1119 = vxpose.xlu0.b32.cont [7/16] 0.0, 128
        %1120 = vxpose.xlu0.b32.cont [8/16] 0.0, 128
        %1121 = vxpose.xlu0.b32.cont [9/16] 0.0, 128
        %1122 = vxpose.xlu0.b32.cont [10/16] 0.0, 128
        %1123 = vxpose.xlu0.b32.cont [11/16] 0.0, 128
        %1124 = vxpose.xlu0.b32.cont [12/16] 0.0, 128
        %1125 = vxpose.xlu0.b32.cont [13/16] 0.0, 128
        %1126 = vxpose.xlu0.b32.cont [14/16] 0.0, 128
        %1127 = vxpose.xlu0.b32.cont [15/16] 0.0, 128
        %1128 = vxpose.xlu0.b32.end [16/16] 0.0, 128
        %v1129 = vpop.trf.xlu0
        %v1130 = vpop.trf.xlu0
        %v1131 = vpop.trf.xlu0
        %v1132 = vpop.trf.xlu0
        %v1133 = vpop.trf.xlu0
        %v1134 = vpop.trf.xlu0
        %v1135 = vpop.trf.xlu0
        %v1136 = vpop.trf.xlu0
        %v1137 = vpop.trf.xlu0
        %v1138 = vpop.trf.xlu0
        %v1139 = vpop.trf.xlu0
        %v1140 = vpop.trf.xlu0
        %v1141 = vpop.trf.xlu0
        %v1142 = vpop.trf.xlu0
        %v1143 = vpop.trf.xlu0
        %v1144 = vpop.trf.xlu0
        %1145 = vxpose.xlu0.b32.start [1/16] %v1044, 128
        %1146 = vxpose.xlu0.b32.cont [2/16] %v1047, 128
        %1147 = vxpose.xlu0.b32.cont [3/16] 0.0, 128
        %1148 = vxpose.xlu0.b32.cont [4/16] 0.0, 128
        %1149 = vxpose.xlu0.b32.cont [5/16] 0.0, 128
        %1150 = vxpose.xlu0.b32.cont [6/16] 0.0, 128
        %1151 = vxpose.xlu0.b32.cont [7/16] 0.0, 128
        %1152 = vxpose.xlu0.b32.cont [8/16] 0.0, 128
        %1153 = vxpose.xlu0.b32.cont [9/16] 0.0, 128
        %1154 = vxpose.xlu0.b32.cont [10/16] 0.0, 128
        %1155 = vxpose.xlu0.b32.cont [11/16] 0.0, 128
        %1156 = vxpose.xlu0.b32.cont [12/16] 0.0, 128
        %1157 = vxpose.xlu0.b32.cont [13/16] 0.0, 128
        %1158 = vxpose.xlu0.b32.cont [14/16] 0.0, 128
        %1159 = vxpose.xlu0.b32.cont [15/16] 0.0, 128
        %1160 = vxpose.xlu0.b32.end [16/16] 0.0, 128
        %v1161 = vpop.trf.xlu0
        %v1162 = vpop.trf.xlu0
        %v1163 = vpop.trf.xlu0
        %v1164 = vpop.trf.xlu0
        %v1165 = vpop.trf.xlu0
        %v1166 = vpop.trf.xlu0
        %v1167 = vpop.trf.xlu0
        %v1168 = vpop.trf.xlu0
        %v1169 = vpop.trf.xlu0
        %v1170 = vpop.trf.xlu0
        %v1171 = vpop.trf.xlu0
        %v1172 = vpop.trf.xlu0
        %v1173 = vpop.trf.xlu0
        %v1174 = vpop.trf.xlu0
        %v1175 = vpop.trf.xlu0
        %v1176 = vpop.trf.xlu0
        %v1178 = vsel %vm359, %v1065, 0
        %v1181 = vsel %vm359, %v1066, 0
        %v1184 = vsel %vm359, %v1067, 0
        %v1187 = vsel %vm359, %v1068, 0
        %v1190 = vsel %vm359, %v1069, 0
        %v1193 = vsel %vm359, %v1070, 0
        %v1196 = vsel %vm359, %v1071, 0
        %v1199 = vsel %vm359, %v1072, 0
        %v1202 = vsel %vm359, %v1073, 0
        %v1205 = vsel %vm359, %v1074, 0
        %v1208 = vsel %vm359, %v1075, 0
        %v1211 = vsel %vm359, %v1076, 0
        %v1214 = vsel %vm359, %v1077, 0
        %v1217 = vsel %vm359, %v1078, 0
        %v1220 = vsel %vm359, %v1079, 0
        %v1223 = vsel %vm359, %v1080, 0
        %v1226 = vsel %vm359, %v1097, 0
        %v1229 = vsel %vm359, %v1098, 0
        %v1232 = vsel %vm359, %v1099, 0
        %v1235 = vsel %vm359, %v1100, 0
        %v1238 = vsel %vm359, %v1101, 0
        %v1241 = vsel %vm359, %v1102, 0
        %v1244 = vsel %vm359, %v1103, 0
        %v1247 = vsel %vm359, %v1104, 0
        %v1250 = vsel %vm359, %v1105, 0
        %v1253 = vsel %vm359, %v1106, 0
        %v1256 = vsel %vm359, %v1107, 0
        %v1259 = vsel %vm359, %v1108, 0
        %v1262 = vsel %vm359, %v1109, 0
        %v1265 = vsel %vm359, %v1110, 0
        %v1268 = vsel %vm359, %v1111, 0
        %v1271 = vsel %vm359, %v1112, 0
        %v1274 = vsel %vm359, %v1129, 0
        %v1277 = vsel %vm359, %v1130, 0
        %v1280 = vsel %vm359, %v1131, 0
        %v1283 = vsel %vm359, %v1132, 0
        %v1286 = vsel %vm359, %v1133, 0
        %v1289 = vsel %vm359, %v1134, 0
        %v1292 = vsel %vm359, %v1135, 0
        %v1295 = vsel %vm359, %v1136, 0
        %v1298 = vsel %vm359, %v1137, 0
        %v1301 = vsel %vm359, %v1138, 0
        %v1304 = vsel %vm359, %v1139, 0
        %v1307 = vsel %vm359, %v1140, 0
        %v1310 = vsel %vm359, %v1141, 0
        %v1313 = vsel %vm359, %v1142, 0
        %v1316 = vsel %vm359, %v1143, 0
        %v1319 = vsel %vm359, %v1144, 0
        %v1322 = vsel %vm359, %v1161, 0
        %v1325 = vsel %vm359, %v1162, 0
        %v1328 = vsel %vm359, %v1163, 0
        %v1331 = vsel %vm359, %v1164, 0
        %v1334 = vsel %vm359, %v1165, 0
        %v1337 = vsel %vm359, %v1166, 0
        %v1340 = vsel %vm359, %v1167, 0
        %v1343 = vsel %vm359, %v1168, 0
        %v1346 = vsel %vm359, %v1169, 0
        %v1349 = vsel %vm359, %v1170, 0
        %v1352 = vsel %vm359, %v1171, 0
        %v1355 = vsel %vm359, %v1172, 0
        %v1358 = vsel %vm359, %v1173, 0
        %v1361 = vsel %vm359, %v1174, 0
        %v1364 = vsel %vm359, %v1175, 0
        %v1367 = vsel %vm359, %v1176, 0
        %1369 = vmatpush.msra.mxu0 0.0
        %1370 = vmatpush.msra.mxu0 0.0
        %1371 = vmatpush.msra.mxu0 0.0
        %1372 = vmatpush.msra.mxu0 0.0
        %1373 = vmatpush.msra.mxu0 0.0
        %1374 = vmatpush.msra.mxu0 0.0
        %1375 = vmatpush.msra.mxu0 0.0
        %1376 = vmatpush.msra.mxu0 0.0
        %1377 = vmatpush.msra.mxu0 0.0
        %1378 = vmatpush.msra.mxu0 0.0
        %1379 = vmatpush.msra.mxu0 0.0
        %1380 = vmatpush.msra.mxu0 0.0
        %1381 = vmatpush.msra.mxu0 0.0
        %1382 = vmatpush.msra.mxu0 0.0
        %1383 = vmatpush.msra.mxu0 %v389
        %1384 = vmatpush.msra.mxu0 %v388
        %1385 = vmatmul.f32.gmra.mxu0 %v1178
        %v1386 = vpop.f32.mrf.mxu0
        %v1387 = vadd.f32 0.0, %v1386
        %1388 = vmatmul.f32.gmra.mxu0 %v1181
        %v1389 = vpop.f32.mrf.mxu0
        %v1390 = vadd.f32 0.0, %v1389
        %1391 = vmatmul.f32.gmra.mxu0 %v1184
        %v1392 = vpop.f32.mrf.mxu0
        %v1393 = vadd.f32 0.0, %v1392
        %1394 = vmatmul.f32.gmra.mxu0 %v1187
        %v1395 = vpop.f32.mrf.mxu0
        %v1396 = vadd.f32 0.0, %v1395
        %1397 = vmatmul.f32.gmra.mxu0 %v1190
        %v1398 = vpop.f32.mrf.mxu0
        %v1399 = vadd.f32 0.0, %v1398
        %1400 = vmatmul.f32.gmra.mxu0 %v1193
        %v1401 = vpop.f32.mrf.mxu0
        %v1402 = vadd.f32 0.0, %v1401
        %1403 = vmatmul.f32.gmra.mxu0 %v1196
        %v1404 = vpop.f32.mrf.mxu0
        %v1405 = vadd.f32 0.0, %v1404
        %1406 = vmatmul.f32.gmra.mxu0 %v1199
        %v1407 = vpop.f32.mrf.mxu0
        %v1408 = vadd.f32 0.0, %v1407
        %1409 = vmatmul.f32.gmra.mxu0 %v1202
        %v1410 = vpop.f32.mrf.mxu0
        %v1411 = vadd.f32 0.0, %v1410
        %1412 = vmatmul.f32.gmra.mxu0 %v1205
        %v1413 = vpop.f32.mrf.mxu0
        %v1414 = vadd.f32 0.0, %v1413
        %1415 = vmatmul.f32.gmra.mxu0 %v1208
        %v1416 = vpop.f32.mrf.mxu0
        %v1417 = vadd.f32 0.0, %v1416
        %1418 = vmatmul.f32.gmra.mxu0 %v1211
        %v1419 = vpop.f32.mrf.mxu0
        %v1420 = vadd.f32 0.0, %v1419
        %1421 = vmatmul.f32.gmra.mxu0 %v1214
        %v1422 = vpop.f32.mrf.mxu0
        %v1423 = vadd.f32 0.0, %v1422
        %1424 = vmatmul.f32.gmra.mxu0 %v1217
        %v1425 = vpop.f32.mrf.mxu0
        %v1426 = vadd.f32 0.0, %v1425
        %1427 = vmatmul.f32.gmra.mxu0 %v1220
        %v1428 = vpop.f32.mrf.mxu0
        %v1429 = vadd.f32 0.0, %v1428
        %1430 = vmatmul.f32.gmra.mxu0 %v1223
        %v1431 = vpop.f32.mrf.mxu0
        %v1432 = vadd.f32 0.0, %v1431
        %1433 = vmatmul.f32.gmra.mxu0 %v1226
        %v1434 = vpop.f32.mrf.mxu0
        %v1435 = vadd.f32 0.0, %v1434
        %1436 = vmatmul.f32.gmra.mxu0 %v1229
        %v1437 = vpop.f32.mrf.mxu0
        %v1438 = vadd.f32 0.0, %v1437
        %1439 = vmatmul.f32.gmra.mxu0 %v1232
        %v1440 = vpop.f32.mrf.mxu0
        %v1441 = vadd.f32 0.0, %v1440
        %1442 = vmatmul.f32.gmra.mxu0 %v1235
        %v1443 = vpop.f32.mrf.mxu0
        %v1444 = vadd.f32 0.0, %v1443
        %1445 = vmatmul.f32.gmra.mxu0 %v1238
        %v1446 = vpop.f32.mrf.mxu0
        %v1447 = vadd.f32 0.0, %v1446
        %1448 = vmatmul.f32.gmra.mxu0 %v1241
        %v1449 = vpop.f32.mrf.mxu0
        %v1450 = vadd.f32 0.0, %v1449
        %1451 = vmatmul.f32.gmra.mxu0 %v1244
        %v1452 = vpop.f32.mrf.mxu0
        %v1453 = vadd.f32 0.0, %v1452
        %1454 = vmatmul.f32.gmra.mxu0 %v1247
        %v1455 = vpop.f32.mrf.mxu0
        %v1456 = vadd.f32 0.0, %v1455
        %1457 = vmatmul.f32.gmra.mxu0 %v1250
        %v1458 = vpop.f32.mrf.mxu0
        %v1459 = vadd.f32 0.0, %v1458
        %1460 = vmatmul.f32.gmra.mxu0 %v1253
        %v1461 = vpop.f32.mrf.mxu0
        %v1462 = vadd.f32 0.0, %v1461
        %1463 = vmatmul.f32.gmra.mxu0 %v1256
        %v1464 = vpop.f32.mrf.mxu0
        %v1465 = vadd.f32 0.0, %v1464
        %1466 = vmatmul.f32.gmra.mxu0 %v1259
        %v1467 = vpop.f32.mrf.mxu0
        %v1468 = vadd.f32 0.0, %v1467
        %1469 = vmatmul.f32.gmra.mxu0 %v1262
        %v1470 = vpop.f32.mrf.mxu0
        %v1471 = vadd.f32 0.0, %v1470
        %1472 = vmatmul.f32.gmra.mxu0 %v1265
        %v1473 = vpop.f32.mrf.mxu0
        %v1474 = vadd.f32 0.0, %v1473
        %1475 = vmatmul.f32.gmra.mxu0 %v1268
        %v1476 = vpop.f32.mrf.mxu0
        %v1477 = vadd.f32 0.0, %v1476
        %1478 = vmatmul.f32.gmra.mxu0 %v1271
        %v1479 = vpop.f32.mrf.mxu0
        %v1480 = vadd.f32 0.0, %v1479
        %1481 = vmatmul.f32.gmra.mxu0 %v1274
        %v1482 = vpop.f32.mrf.mxu0
        %v1483 = vadd.f32 0.0, %v1482
        %1484 = vmatmul.f32.gmra.mxu0 %v1277
        %v1485 = vpop.f32.mrf.mxu0
        %v1486 = vadd.f32 0.0, %v1485
        %1487 = vmatmul.f32.gmra.mxu0 %v1280
        %v1488 = vpop.f32.mrf.mxu0
        %v1489 = vadd.f32 0.0, %v1488
        %1490 = vmatmul.f32.gmra.mxu0 %v1283
        %v1491 = vpop.f32.mrf.mxu0
        %v1492 = vadd.f32 0.0, %v1491
        %1493 = vmatmul.f32.gmra.mxu0 %v1286
        %v1494 = vpop.f32.mrf.mxu0
        %v1495 = vadd.f32 0.0, %v1494
        %1496 = vmatmul.f32.gmra.mxu0 %v1289
        %v1497 = vpop.f32.mrf.mxu0
        %v1498 = vadd.f32 0.0, %v1497
        %1499 = vmatmul.f32.gmra.mxu0 %v1292
        %v1500 = vpop.f32.mrf.mxu0
        %v1501 = vadd.f32 0.0, %v1500
        %1502 = vmatmul.f32.gmra.mxu0 %v1295
        %v1503 = vpop.f32.mrf.mxu0
        %v1504 = vadd.f32 0.0, %v1503
        %1505 = vmatmul.f32.gmra.mxu0 %v1298
        %v1506 = vpop.f32.mrf.mxu0
        %v1507 = vadd.f32 0.0, %v1506
        %1508 = vmatmul.f32.gmra.mxu0 %v1301
        %v1509 = vpop.f32.mrf.mxu0
        %v1510 = vadd.f32 0.0, %v1509
        %1511 = vmatmul.f32.gmra.mxu0 %v1304
        %v1512 = vpop.f32.mrf.mxu0
        %v1513 = vadd.f32 0.0, %v1512
        %1514 = vmatmul.f32.gmra.mxu0 %v1307
        %v1515 = vpop.f32.mrf.mxu0
        %v1516 = vadd.f32 0.0, %v1515
        %1517 = vmatmul.f32.gmra.mxu0 %v1310
        %v1518 = vpop.f32.mrf.mxu0
        %v1519 = vadd.f32 0.0, %v1518
        %1520 = vmatmul.f32.gmra.mxu0 %v1313
        %v1521 = vpop.f32.mrf.mxu0
        %v1522 = vadd.f32 0.0, %v1521
        %1523 = vmatmul.f32.gmra.mxu0 %v1316
        %v1524 = vpop.f32.mrf.mxu0
        %v1525 = vadd.f32 0.0, %v1524
        %1526 = vmatmul.f32.gmra.mxu0 %v1319
        %v1527 = vpop.f32.mrf.mxu0
        %v1528 = vadd.f32 0.0, %v1527
        %1529 = vmatmul.f32.gmra.mxu0 %v1322
        %v1530 = vpop.f32.mrf.mxu0
        %v1531 = vadd.f32 0.0, %v1530
        %1532 = vmatmul.f32.gmra.mxu0 %v1325
        %v1533 = vpop.f32.mrf.mxu0
        %v1534 = vadd.f32 0.0, %v1533
        %1535 = vmatmul.f32.gmra.mxu0 %v1328
        %v1536 = vpop.f32.mrf.mxu0
        %v1537 = vadd.f32 0.0, %v1536
        %1538 = vmatmul.f32.gmra.mxu0 %v1331
        %v1539 = vpop.f32.mrf.mxu0
        %v1540 = vadd.f32 0.0, %v1539
        %1541 = vmatmul.f32.gmra.mxu0 %v1334
        %v1542 = vpop.f32.mrf.mxu0
        %v1543 = vadd.f32 0.0, %v1542
        %1544 = vmatmul.f32.gmra.mxu0 %v1337
        %v1545 = vpop.f32.mrf.mxu0
        %v1546 = vadd.f32 0.0, %v1545
        %1547 = vmatmul.f32.gmra.mxu0 %v1340
        %v1548 = vpop.f32.mrf.mxu0
        %v1549 = vadd.f32 0.0, %v1548
        %1550 = vmatmul.f32.gmra.mxu0 %v1343
        %v1551 = vpop.f32.mrf.mxu0
        %v1552 = vadd.f32 0.0, %v1551
        %1553 = vmatmul.f32.gmra.mxu0 %v1346
        %v1554 = vpop.f32.mrf.mxu0
        %v1555 = vadd.f32 0.0, %v1554
        %1556 = vmatmul.f32.gmra.mxu0 %v1349
        %v1557 = vpop.f32.mrf.mxu0
        %v1558 = vadd.f32 0.0, %v1557
        %1559 = vmatmul.f32.gmra.mxu0 %v1352
        %v1560 = vpop.f32.mrf.mxu0
        %v1561 = vadd.f32 0.0, %v1560
        %1562 = vmatmul.f32.gmra.mxu0 %v1355
        %v1563 = vpop.f32.mrf.mxu0
        %v1564 = vadd.f32 0.0, %v1563
        %1565 = vmatmul.f32.gmra.mxu0 %v1358
        %v1566 = vpop.f32.mrf.mxu0
        %v1567 = vadd.f32 0.0, %v1566
        %1568 = vmatmul.f32.gmra.mxu0 %v1361
        %v1569 = vpop.f32.mrf.mxu0
        %v1570 = vadd.f32 0.0, %v1569
        %1571 = vmatmul.f32.gmra.mxu0 %v1364
        %v1572 = vpop.f32.mrf.mxu0
        %v1573 = vadd.f32 0.0, %v1572
        %1574 = vmatmul.f32.gmra.mxu0 %v1367
        %v1575 = vpop.f32.mrf.mxu0
        %v1576 = vadd.f32 0.0, %v1575
        %1577 = vdwg.mxu0
        %v1578 = vmul.f32 %v793, %v793
        %v1579 = vmul.f32 %v796, %v796
        %v1580 = vmul.f32 %v799, %v799
        %v1581 = vmul.f32 %v802, %v802
        %v1582 = vmul.f32 %v805, %v805
        %v1583 = vmul.f32 %v808, %v808
        %v1584 = vmul.f32 %v811, %v811
        %v1585 = vmul.f32 %v814, %v814
        %v1586 = vmul.f32 %v817, %v817
        %v1587 = vmul.f32 %v820, %v820
        %v1588 = vmul.f32 %v823, %v823
        %v1589 = vmul.f32 %v826, %v826
        %v1590 = vmul.f32 %v829, %v829
        %v1591 = vmul.f32 %v832, %v832
        %v1592 = vmul.f32 %v835, %v835
        %v1593 = vmul.f32 %v838, %v838
        %v1594 = vmul.f32 %v841, %v841
        %v1595 = vmul.f32 %v844, %v844
        %v1596 = vmul.f32 %v847, %v847
        %v1597 = vmul.f32 %v850, %v850
        %v1598 = vmul.f32 %v853, %v853
        %v1599 = vmul.f32 %v856, %v856
        %v1600 = vmul.f32 %v859, %v859
        %v1601 = vmul.f32 %v862, %v862
        %v1602 = vmul.f32 %v865, %v865
        %v1603 = vmul.f32 %v868, %v868
        %v1604 = vmul.f32 %v871, %v871
        %v1605 = vmul.f32 %v874, %v874
        %v1606 = vmul.f32 %v877, %v877
        %v1607 = vmul.f32 %v880, %v880
        %v1608 = vmul.f32 %v883, %v883
        %v1609 = vmul.f32 %v886, %v886
        %v1610 = vmul.f32 %v889, %v889
        %v1611 = vmul.f32 %v892, %v892
        %v1612 = vmul.f32 %v895, %v895
        %v1613 = vmul.f32 %v898, %v898
        %v1614 = vmul.f32 %v901, %v901
        %v1615 = vmul.f32 %v904, %v904
        %v1616 = vmul.f32 %v907, %v907
        %v1617 = vmul.f32 %v910, %v910
        %v1618 = vmul.f32 %v913, %v913
        %v1619 = vmul.f32 %v916, %v916
        %v1620 = vmul.f32 %v919, %v919
        %v1621 = vmul.f32 %v922, %v922
        %v1622 = vmul.f32 %v925, %v925
        %v1623 = vmul.f32 %v928, %v928
        %v1624 = vmul.f32 %v931, %v931
        %v1625 = vmul.f32 %v934, %v934
        %v1626 = vmul.f32 %v937, %v937
        %v1627 = vmul.f32 %v940, %v940
        %v1628 = vmul.f32 %v943, %v943
        %v1629 = vmul.f32 %v946, %v946
        %v1630 = vmul.f32 %v949, %v949
        %v1631 = vmul.f32 %v952, %v952
        %v1632 = vmul.f32 %v955, %v955
        %v1633 = vmul.f32 %v958, %v958
        %v1634 = vmul.f32 %v961, %v961
        %v1635 = vmul.f32 %v964, %v964
        %v1636 = vmul.f32 %v967, %v967
        %v1637 = vmul.f32 %v970, %v970
        %v1638 = vmul.f32 %v973, %v973
        %v1639 = vmul.f32 %v976, %v976
        %v1640 = vmul.f32 %v979, %v979
        %v1641 = vmul.f32 %v982, %v982
        %v1642 = vmul.f32 %v1387, %v1387
        %v1643 = vmul.f32 %v1390, %v1390
        %v1644 = vmul.f32 %v1393, %v1393
        %v1645 = vmul.f32 %v1396, %v1396
        %v1646 = vmul.f32 %v1399, %v1399
        %v1647 = vmul.f32 %v1402, %v1402
        %v1648 = vmul.f32 %v1405, %v1405
        %v1649 = vmul.f32 %v1408, %v1408
        %v1650 = vmul.f32 %v1411, %v1411
        %v1651 = vmul.f32 %v1414, %v1414
        %v1652 = vmul.f32 %v1417, %v1417
        %v1653 = vmul.f32 %v1420, %v1420
        %v1654 = vmul.f32 %v1423, %v1423
        %v1655 = vmul.f32 %v1426, %v1426
        %v1656 = vmul.f32 %v1429, %v1429
        %v1657 = vmul.f32 %v1432, %v1432
        %v1658 = vmul.f32 %v1435, %v1435
        %v1659 = vmul.f32 %v1438, %v1438
        %v1660 = vmul.f32 %v1441, %v1441
        %v1661 = vmul.f32 %v1444, %v1444
        %v1662 = vmul.f32 %v1447, %v1447
        %v1663 = vmul.f32 %v1450, %v1450
        %v1664 = vmul.f32 %v1453, %v1453
        %v1665 = vmul.f32 %v1456, %v1456
        %v1666 = vmul.f32 %v1459, %v1459
        %v1667 = vmul.f32 %v1462, %v1462
        %v1668 = vmul.f32 %v1465, %v1465
        %v1669 = vmul.f32 %v1468, %v1468
        %v1670 = vmul.f32 %v1471, %v1471
        %v1671 = vmul.f32 %v1474, %v1474
        %v1672 = vmul.f32 %v1477, %v1477
        %v1673 = vmul.f32 %v1480, %v1480
        %v1674 = vmul.f32 %v1483, %v1483
        %v1675 = vmul.f32 %v1486, %v1486
        %v1676 = vmul.f32 %v1489, %v1489
        %v1677 = vmul.f32 %v1492, %v1492
        %v1678 = vmul.f32 %v1495, %v1495
        %v1679 = vmul.f32 %v1498, %v1498
        %v1680 = vmul.f32 %v1501, %v1501
        %v1681 = vmul.f32 %v1504, %v1504
        %v1682 = vmul.f32 %v1507, %v1507
        %v1683 = vmul.f32 %v1510, %v1510
        %v1684 = vmul.f32 %v1513, %v1513
        %v1685 = vmul.f32 %v1516, %v1516
        %v1686 = vmul.f32 %v1519, %v1519
        %v1687 = vmul.f32 %v1522, %v1522
        %v1688 = vmul.f32 %v1525, %v1525
        %v1689 = vmul.f32 %v1528, %v1528
        %v1690 = vmul.f32 %v1531, %v1531
        %v1691 = vmul.f32 %v1534, %v1534
        %v1692 = vmul.f32 %v1537, %v1537
        %v1693 = vmul.f32 %v1540, %v1540
        %v1694 = vmul.f32 %v1543, %v1543
        %v1695 = vmul.f32 %v1546, %v1546
        %v1696 = vmul.f32 %v1549, %v1549
        %v1697 = vmul.f32 %v1552, %v1552
        %v1698 = vmul.f32 %v1555, %v1555
        %v1699 = vmul.f32 %v1558, %v1558
        %v1700 = vmul.f32 %v1561, %v1561
        %v1701 = vmul.f32 %v1564, %v1564
        %v1702 = vmul.f32 %v1567, %v1567
        %v1703 = vmul.f32 %v1570, %v1570
        %v1704 = vmul.f32 %v1573, %v1573
        %v1705 = vmul.f32 %v1576, %v1576
        %v1706 = vmul.f32 %v793, %v1387
        %v1707 = vmul.f32 %v796, %v1390
        %v1708 = vmul.f32 %v799, %v1393
        %v1709 = vmul.f32 %v802, %v1396
        %v1710 = vmul.f32 %v805, %v1399
        %v1711 = vmul.f32 %v808, %v1402
        %v1712 = vmul.f32 %v811, %v1405
        %v1713 = vmul.f32 %v814, %v1408
        %v1714 = vmul.f32 %v817, %v1411
        %v1715 = vmul.f32 %v820, %v1414
        %v1716 = vmul.f32 %v823, %v1417
        %v1717 = vmul.f32 %v826, %v1420
        %v1718 = vmul.f32 %v829, %v1423
        %v1719 = vmul.f32 %v832, %v1426
        %v1720 = vmul.f32 %v835, %v1429
        %v1721 = vmul.f32 %v838, %v1432
        %v1722 = vmul.f32 %v841, %v1435
        %v1723 = vmul.f32 %v844, %v1438
        %v1724 = vmul.f32 %v847, %v1441
        %v1725 = vmul.f32 %v850, %v1444
        %v1726 = vmul.f32 %v853, %v1447
        %v1727 = vmul.f32 %v856, %v1450
        %v1728 = vmul.f32 %v859, %v1453
        %v1729 = vmul.f32 %v862, %v1456
        %v1730 = vmul.f32 %v865, %v1459
        %v1731 = vmul.f32 %v868, %v1462
        %v1732 = vmul.f32 %v871, %v1465
        %v1733 = vmul.f32 %v874, %v1468
        %v1734 = vmul.f32 %v877, %v1471
        %v1735 = vmul.f32 %v880, %v1474
        %v1736 = vmul.f32 %v883, %v1477
        %v1737 = vmul.f32 %v886, %v1480
        %v1738 = vmul.f32 %v889, %v1483
        %v1739 = vmul.f32 %v892, %v1486
        %v1740 = vmul.f32 %v895, %v1489
        %v1741 = vmul.f32 %v898, %v1492
        %v1742 = vmul.f32 %v901, %v1495
        %v1743 = vmul.f32 %v904, %v1498
        %v1744 = vmul.f32 %v907, %v1501
        %v1745 = vmul.f32 %v910, %v1504
        %v1746 = vmul.f32 %v913, %v1507
        %v1747 = vmul.f32 %v916, %v1510
        %v1748 = vmul.f32 %v919, %v1513
        %v1749 = vmul.f32 %v922, %v1516
        %v1750 = vmul.f32 %v925, %v1519
        %v1751 = vmul.f32 %v928, %v1522
        %v1752 = vmul.f32 %v931, %v1525
        %v1753 = vmul.f32 %v934, %v1528
        %v1754 = vmul.f32 %v937, %v1531
        %v1755 = vmul.f32 %v940, %v1534
        %v1756 = vmul.f32 %v943, %v1537
        %v1757 = vmul.f32 %v946, %v1540
        %v1758 = vmul.f32 %v949, %v1543
        %v1759 = vmul.f32 %v952, %v1546
        %v1760 = vmul.f32 %v955, %v1549
        %v1761 = vmul.f32 %v958, %v1552
        %v1762 = vmul.f32 %v961, %v1555
        %v1763 = vmul.f32 %v964, %v1558
        %v1764 = vmul.f32 %v967, %v1561
        %v1765 = vmul.f32 %v970, %v1564
        %v1766 = vmul.f32 %v973, %v1567
        %v1767 = vmul.f32 %v976, %v1570
        %v1768 = vmul.f32 %v979, %v1573
        %v1769 = vmul.f32 %v982, %v1576
        %v1770 = vmul.f32 %v327, %v327
        %v1771 = vmul.f32 %v328, %v328
        %v1772 = vmul.f32 %v329, %v329
        %v1773 = vmul.f32 %v330, %v330
        %v1774 = vmul.f32 %v331, %v331
        %v1775 = vmul.f32 %v332, %v332
        %v1776 = vmul.f32 %v333, %v333
        %v1777 = vmul.f32 %v334, %v334
        %v1778 = vmul.f32 %v335, %v335
        %v1779 = vmul.f32 %v336, %v336
        %v1780 = vmul.f32 %v337, %v337
        %v1781 = vmul.f32 %v338, %v338
        %v1782 = vmul.f32 %v339, %v339
        %v1783 = vmul.f32 %v340, %v340
        %v1784 = vmul.f32 %v341, %v341
        %v1785 = vmul.f32 %v342, %v342
        %v1786 = vadd.f32 %v1770, %v1778
        %v1787 = vadd.f32 %v1771, %v1779
        %v1788 = vadd.f32 %v1772, %v1780
        %v1789 = vadd.f32 %v1773, %v1781
        %v1790 = vadd.f32 %v1774, %v1782
        %v1791 = vadd.f32 %v1775, %v1783
        %v1792 = vadd.f32 %v1776, %v1784
        %v1793 = vadd.f32 %v1777, %v1785
        %v1795 = vsel %vm359, %v1786, 0
        %v1798 = vsel %vm359, %v1787, 0
        %v1801 = vsel %vm359, %v1788, 0
        %v1804 = vsel %vm359, %v1789, 0
        %v1807 = vsel %vm359, %v1790, 0
        %v1810 = vsel %vm359, %v1791, 0
        %v1813 = vsel %vm359, %v1792, 0
        %v1816 = vsel %vm359, %v1793, 0
        %1818 = vmatpush.msra.mxu0 0.0
        %1819 = vmatpush.msra.mxu0 0.0
        %1820 = vmatpush.msra.mxu0 0.0
        %1821 = vmatpush.msra.mxu0 0.0
        %1822 = vmatpush.msra.mxu0 0.0
        %1823 = vmatpush.msra.mxu0 0.0
        %1824 = vmatpush.msra.mxu0 0.0
        %1825 = vmatpush.msra.mxu0 0.0
        %1826 = vmatpush.msra.mxu0 0.0
        %1827 = vmatpush.msra.mxu0 0.0
        %1828 = vmatpush.msra.mxu0 0.0
        %1829 = vmatpush.msra.mxu0 0.0
        %1830 = vmatpush.msra.mxu0 0.0
        %1831 = vmatpush.msra.mxu0 0.0
        %1832 = vmatpush.msra.mxu0 %v387
        %1833 = vmatpush.msra.mxu0 %v386
        %1834 = vmatmul.f32.gmra.mxu0 %v1795
        %v1835 = vpop.f32.mrf.mxu0
        %v1836 = vadd.f32 0.0, %v1835
        %1837 = vmatmul.f32.gmra.mxu0 %v1798
        %v1838 = vpop.f32.mrf.mxu0
        %v1839 = vadd.f32 0.0, %v1838
        %1840 = vmatmul.f32.gmra.mxu0 %v1801
        %v1841 = vpop.f32.mrf.mxu0
        %v1842 = vadd.f32 0.0, %v1841
        %1843 = vmatmul.f32.gmra.mxu0 %v1804
        %v1844 = vpop.f32.mrf.mxu0
        %v1845 = vadd.f32 0.0, %v1844
        %1846 = vmatmul.f32.gmra.mxu0 %v1807
        %v1847 = vpop.f32.mrf.mxu0
        %v1848 = vadd.f32 0.0, %v1847
        %1849 = vmatmul.f32.gmra.mxu0 %v1810
        %v1850 = vpop.f32.mrf.mxu0
        %v1851 = vadd.f32 0.0, %v1850
        %1852 = vmatmul.f32.gmra.mxu0 %v1813
        %v1853 = vpop.f32.mrf.mxu0
        %v1854 = vadd.f32 0.0, %v1853
        %1855 = vmatmul.f32.gmra.mxu0 %v1816
        %v1856 = vpop.f32.mrf.mxu0
        %v1857 = vadd.f32 0.0, %v1856
        %1858 = vdwg.mxu0
        %1859 = vxpose.xlu0.b32.start [1/16] %v1836, 128
        %1860 = vxpose.xlu0.b32.cont [2/16] %v1839, 128
        %1861 = vxpose.xlu0.b32.cont [3/16] 0.0, 128
        %1862 = vxpose.xlu0.b32.cont [4/16] 0.0, 128
        %1863 = vxpose.xlu0.b32.cont [5/16] 0.0, 128
        %1864 = vxpose.xlu0.b32.cont [6/16] 0.0, 128
        %1865 = vxpose.xlu0.b32.cont [7/16] 0.0, 128
        %1866 = vxpose.xlu0.b32.cont [8/16] 0.0, 128
        %1867 = vxpose.xlu0.b32.cont [9/16] 0.0, 128
        %1868 = vxpose.xlu0.b32.cont [10/16] 0.0, 128
        %1869 = vxpose.xlu0.b32.cont [11/16] 0.0, 128
        %1870 = vxpose.xlu0.b32.cont [12/16] 0.0, 128
        %1871 = vxpose.xlu0.b32.cont [13/16] 0.0, 128
        %1872 = vxpose.xlu0.b32.cont [14/16] 0.0, 128
        %1873 = vxpose.xlu0.b32.cont [15/16] 0.0, 128
        %1874 = vxpose.xlu0.b32.end [16/16] 0.0, 128
        %v1875 = vpop.trf.xlu0
        %v1876 = vpop.trf.xlu0
        %v1877 = vpop.trf.xlu0
        %v1878 = vpop.trf.xlu0
        %v1879 = vpop.trf.xlu0
        %v1880 = vpop.trf.xlu0
        %v1881 = vpop.trf.xlu0
        %v1882 = vpop.trf.xlu0
        %v1883 = vpop.trf.xlu0
        %v1884 = vpop.trf.xlu0
        %v1885 = vpop.trf.xlu0
        %v1886 = vpop.trf.xlu0
        %v1887 = vpop.trf.xlu0
        %v1888 = vpop.trf.xlu0
        %v1889 = vpop.trf.xlu0
        %v1890 = vpop.trf.xlu0
        %1891 = vxpose.xlu0.b32.start [1/16] %v1842, 128
        %1892 = vxpose.xlu0.b32.cont [2/16] %v1845, 128
        %1893 = vxpose.xlu0.b32.cont [3/16] 0.0, 128
        %1894 = vxpose.xlu0.b32.cont [4/16] 0.0, 128
        %1895 = vxpose.xlu0.b32.cont [5/16] 0.0, 128
        %1896 = vxpose.xlu0.b32.cont [6/16] 0.0, 128
        %1897 = vxpose.xlu0.b32.cont [7/16] 0.0, 128
        %1898 = vxpose.xlu0.b32.cont [8/16] 0.0, 128
        %1899 = vxpose.xlu0.b32.cont [9/16] 0.0, 128
        %1900 = vxpose.xlu0.b32.cont [10/16] 0.0, 128
        %1901 = vxpose.xlu0.b32.cont [11/16] 0.0, 128
        %1902 = vxpose.xlu0.b32.cont [12/16] 0.0, 128
        %1903 = vxpose.xlu0.b32.cont [13/16] 0.0, 128
        %1904 = vxpose.xlu0.b32.cont [14/16] 0.0, 128
        %1905 = vxpose.xlu0.b32.cont [15/16] 0.0, 128
        %1906 = vxpose.xlu0.b32.end [16/16] 0.0, 128
        %v1907 = vpop.trf.xlu0
        %v1908 = vpop.trf.xlu0
        %v1909 = vpop.trf.xlu0
        %v1910 = vpop.trf.xlu0
        %v1911 = vpop.trf.xlu0
        %v1912 = vpop.trf.xlu0
        %v1913 = vpop.trf.xlu0
        %v1914 = vpop.trf.xlu0
        %v1915 = vpop.trf.xlu0
        %v1916 = vpop.trf.xlu0
        %v1917 = vpop.trf.xlu0
        %v1918 = vpop.trf.xlu0
        %v1919 = vpop.trf.xlu0
        %v1920 = vpop.trf.xlu0
        %v1921 = vpop.trf.xlu0
        %v1922 = vpop.trf.xlu0
        %1923 = vxpose.xlu0.b32.start [1/16] %v1848, 128
        %1924 = vxpose.xlu0.b32.cont [2/16] %v1851, 128
        %1925 = vxpose.xlu0.b32.cont [3/16] 0.0, 128
        %1926 = vxpose.xlu0.b32.cont [4/16] 0.0, 128
        %1927 = vxpose.xlu0.b32.cont [5/16] 0.0, 128
        %1928 = vxpose.xlu0.b32.cont [6/16] 0.0, 128
        %1929 = vxpose.xlu0.b32.cont [7/16] 0.0, 128
        %1930 = vxpose.xlu0.b32.cont [8/16] 0.0, 128
        %1931 = vxpose.xlu0.b32.cont [9/16] 0.0, 128
        %1932 = vxpose.xlu0.b32.cont [10/16] 0.0, 128
        %1933 = vxpose.xlu0.b32.cont [11/16] 0.0, 128
        %1934 = vxpose.xlu0.b32.cont [12/16] 0.0, 128
        %1935 = vxpose.xlu0.b32.cont [13/16] 0.0, 128
        %1936 = vxpose.xlu0.b32.cont [14/16] 0.0, 128
        %1937 = vxpose.xlu0.b32.cont [15/16] 0.0, 128
        %1938 = vxpose.xlu0.b32.end [16/16] 0.0, 128
        %v1939 = vpop.trf.xlu0
        %v1940 = vpop.trf.xlu0
        %v1941 = vpop.trf.xlu0
        %v1942 = vpop.trf.xlu0
        %v1943 = vpop.trf.xlu0
        %v1944 = vpop.trf.xlu0
        %v1945 = vpop.trf.xlu0
        %v1946 = vpop.trf.xlu0
        %v1947 = vpop.trf.xlu0
        %v1948 = vpop.trf.xlu0
        %v1949 = vpop.trf.xlu0
        %v1950 = vpop.trf.xlu0
        %v1951 = vpop.trf.xlu0
        %v1952 = vpop.trf.xlu0
        %v1953 = vpop.trf.xlu0
        %v1954 = vpop.trf.xlu0
        %1955 = vxpose.xlu0.b32.start [1/16] %v1854, 128
        %1956 = vxpose.xlu0.b32.cont [2/16] %v1857, 128
        %1957 = vxpose.xlu0.b32.cont [3/16] 0.0, 128
        %1958 = vxpose.xlu0.b32.cont [4/16] 0.0, 128
        %1959 = vxpose.xlu0.b32.cont [5/16] 0.0, 128
        %1960 = vxpose.xlu0.b32.cont [6/16] 0.0, 128
        %1961 = vxpose.xlu0.b32.cont [7/16] 0.0, 128
        %1962 = vxpose.xlu0.b32.cont [8/16] 0.0, 128
        %1963 = vxpose.xlu0.b32.cont [9/16] 0.0, 128
        %1964 = vxpose.xlu0.b32.cont [10/16] 0.0, 128
        %1965 = vxpose.xlu0.b32.cont [11/16] 0.0, 128
        %1966 = vxpose.xlu0.b32.cont [12/16] 0.0, 128
        %1967 = vxpose.xlu0.b32.cont [13/16] 0.0, 128
        %1968 = vxpose.xlu0.b32.cont [14/16] 0.0, 128
        %1969 = vxpose.xlu0.b32.cont [15/16] 0.0, 128
        %1970 = vxpose.xlu0.b32.end [16/16] 0.0, 128
        %v1971 = vpop.trf.xlu0
        %v1972 = vpop.trf.xlu0
        %v1973 = vpop.trf.xlu0
        %v1974 = vpop.trf.xlu0
        %v1975 = vpop.trf.xlu0
        %v1976 = vpop.trf.xlu0
        %v1977 = vpop.trf.xlu0
        %v1978 = vpop.trf.xlu0
        %v1979 = vpop.trf.xlu0
        %v1980 = vpop.trf.xlu0
        %v1981 = vpop.trf.xlu0
        %v1982 = vpop.trf.xlu0
        %v1983 = vpop.trf.xlu0
        %v1984 = vpop.trf.xlu0
        %v1985 = vpop.trf.xlu0
        %v1986 = vpop.trf.xlu0
        %v1988 = vsel %vm359, %v1875, 0
        %v1991 = vsel %vm359, %v1876, 0
        %v1994 = vsel %vm359, %v1877, 0
        %v1997 = vsel %vm359, %v1878, 0
        %v2000 = vsel %vm359, %v1879, 0
        %v2003 = vsel %vm359, %v1880, 0
        %v2006 = vsel %vm359, %v1881, 0
        %v2009 = vsel %vm359, %v1882, 0
        %v2012 = vsel %vm359, %v1883, 0
        %v2015 = vsel %vm359, %v1884, 0
        %v2018 = vsel %vm359, %v1885, 0
        %v2021 = vsel %vm359, %v1886, 0
        %v2024 = vsel %vm359, %v1887, 0
        %v2027 = vsel %vm359, %v1888, 0
        %v2030 = vsel %vm359, %v1889, 0
        %v2033 = vsel %vm359, %v1890, 0
        %v2036 = vsel %vm359, %v1907, 0
        %v2039 = vsel %vm359, %v1908, 0
        %v2042 = vsel %vm359, %v1909, 0
        %v2045 = vsel %vm359, %v1910, 0
        %v2048 = vsel %vm359, %v1911, 0
        %v2051 = vsel %vm359, %v1912, 0
        %v2054 = vsel %vm359, %v1913, 0
        %v2057 = vsel %vm359, %v1914, 0
        %v2060 = vsel %vm359, %v1915, 0
        %v2063 = vsel %vm359, %v1916, 0
        %v2066 = vsel %vm359, %v1917, 0
        %v2069 = vsel %vm359, %v1918, 0
        %v2072 = vsel %vm359, %v1919, 0
        %v2075 = vsel %vm359, %v1920, 0
        %v2078 = vsel %vm359, %v1921, 0
        %v2081 = vsel %vm359, %v1922, 0
        %v2084 = vsel %vm359, %v1939, 0
        %v2087 = vsel %vm359, %v1940, 0
        %v2090 = vsel %vm359, %v1941, 0
        %v2093 = vsel %vm359, %v1942, 0
        %v2096 = vsel %vm359, %v1943, 0
        %v2099 = vsel %vm359, %v1944, 0
        %v2102 = vsel %vm359, %v1945, 0
        %v2105 = vsel %vm359, %v1946, 0
        %v2108 = vsel %vm359, %v1947, 0
        %v2111 = vsel %vm359, %v1948, 0
        %v2114 = vsel %vm359, %v1949, 0
        %v2117 = vsel %vm359, %v1950, 0
        %v2120 = vsel %vm359, %v1951, 0
        %v2123 = vsel %vm359, %v1952, 0
        %v2126 = vsel %vm359, %v1953, 0
        %v2129 = vsel %vm359, %v1954, 0
        %v2132 = vsel %vm359, %v1971, 0
        %v2135 = vsel %vm359, %v1972, 0
        %v2138 = vsel %vm359, %v1973, 0
        %v2141 = vsel %vm359, %v1974, 0
        %v2144 = vsel %vm359, %v1975, 0
        %v2147 = vsel %vm359, %v1976, 0
        %v2150 = vsel %vm359, %v1977, 0
        %v2153 = vsel %vm359, %v1978, 0
        %v2156 = vsel %vm359, %v1979, 0
        %v2159 = vsel %vm359, %v1980, 0
        %v2162 = vsel %vm359, %v1981, 0
        %v2165 = vsel %vm359, %v1982, 0
        %v2168 = vsel %vm359, %v1983, 0
        %v2171 = vsel %vm359, %v1984, 0
        %v2174 = vsel %vm359, %v1985, 0
        %v2177 = vsel %vm359, %v1986, 0
        %2179 = vmatpush.msra.mxu0 0.0
        %2180 = vmatpush.msra.mxu0 0.0
        %2181 = vmatpush.msra.mxu0 0.0
        %2182 = vmatpush.msra.mxu0 0.0
        %2183 = vmatpush.msra.mxu0 0.0
        %2184 = vmatpush.msra.mxu0 0.0
        %2185 = vmatpush.msra.mxu0 0.0
        %2186 = vmatpush.msra.mxu0 0.0
        %2187 = vmatpush.msra.mxu0 0.0
        %2188 = vmatpush.msra.mxu0 0.0
        %2189 = vmatpush.msra.mxu0 0.0
        %2190 = vmatpush.msra.mxu0 0.0
        %2191 = vmatpush.msra.mxu0 0.0
        %2192 = vmatpush.msra.mxu0 0.0
        %2193 = vmatpush.msra.mxu0 %v389
        %2194 = vmatpush.msra.mxu0 %v388
        %2195 = vmatmul.f32.gmra.mxu0 %v1988
        %v2196 = vpop.f32.mrf.mxu0
        %v2197 = vadd.f32 0.0, %v2196
        %2198 = vmatmul.f32.gmra.mxu0 %v1991
        %v2199 = vpop.f32.mrf.mxu0
        %v2200 = vadd.f32 0.0, %v2199
        %2201 = vmatmul.f32.gmra.mxu0 %v1994
        %v2202 = vpop.f32.mrf.mxu0
        %v2203 = vadd.f32 0.0, %v2202
        %2204 = vmatmul.f32.gmra.mxu0 %v1997
        %v2205 = vpop.f32.mrf.mxu0
        %v2206 = vadd.f32 0.0, %v2205
        %2207 = vmatmul.f32.gmra.mxu0 %v2000
        %v2208 = vpop.f32.mrf.mxu0
        %v2209 = vadd.f32 0.0, %v2208
        %2210 = vmatmul.f32.gmra.mxu0 %v2003
        %v2211 = vpop.f32.mrf.mxu0
        %v2212 = vadd.f32 0.0, %v2211
        %2213 = vmatmul.f32.gmra.mxu0 %v2006
        %v2214 = vpop.f32.mrf.mxu0
        %v2215 = vadd.f32 0.0, %v2214
        %2216 = vmatmul.f32.gmra.mxu0 %v2009
        %v2217 = vpop.f32.mrf.mxu0
        %v2218 = vadd.f32 0.0, %v2217
        %2219 = vmatmul.f32.gmra.mxu0 %v2012
        %v2220 = vpop.f32.mrf.mxu0
        %v2221 = vadd.f32 0.0, %v2220
        %2222 = vmatmul.f32.gmra.mxu0 %v2015
        %v2223 = vpop.f32.mrf.mxu0
        %v2224 = vadd.f32 0.0, %v2223
        %2225 = vmatmul.f32.gmra.mxu0 %v2018
        %v2226 = vpop.f32.mrf.mxu0
        %v2227 = vadd.f32 0.0, %v2226
        %2228 = vmatmul.f32.gmra.mxu0 %v2021
        %v2229 = vpop.f32.mrf.mxu0
        %v2230 = vadd.f32 0.0, %v2229
        %2231 = vmatmul.f32.gmra.mxu0 %v2024
        %v2232 = vpop.f32.mrf.mxu0
        %v2233 = vadd.f32 0.0, %v2232
        %2234 = vmatmul.f32.gmra.mxu0 %v2027
        %v2235 = vpop.f32.mrf.mxu0
        %v2236 = vadd.f32 0.0, %v2235
        %2237 = vmatmul.f32.gmra.mxu0 %v2030
        %v2238 = vpop.f32.mrf.mxu0
        %v2239 = vadd.f32 0.0, %v2238
        %2240 = vmatmul.f32.gmra.mxu0 %v2033
        %v2241 = vpop.f32.mrf.mxu0
        %v2242 = vadd.f32 0.0, %v2241
        %2243 = vmatmul.f32.gmra.mxu0 %v2036
        %v2244 = vpop.f32.mrf.mxu0
        %v2245 = vadd.f32 0.0, %v2244
        %2246 = vmatmul.f32.gmra.mxu0 %v2039
        %v2247 = vpop.f32.mrf.mxu0
        %v2248 = vadd.f32 0.0, %v2247
        %2249 = vmatmul.f32.gmra.mxu0 %v2042
        %v2250 = vpop.f32.mrf.mxu0
        %v2251 = vadd.f32 0.0, %v2250
        %2252 = vmatmul.f32.gmra.mxu0 %v2045
        %v2253 = vpop.f32.mrf.mxu0
        %v2254 = vadd.f32 0.0, %v2253
        %2255 = vmatmul.f32.gmra.mxu0 %v2048
        %v2256 = vpop.f32.mrf.mxu0
        %v2257 = vadd.f32 0.0, %v2256
        %2258 = vmatmul.f32.gmra.mxu0 %v2051
        %v2259 = vpop.f32.mrf.mxu0
        %v2260 = vadd.f32 0.0, %v2259
        %2261 = vmatmul.f32.gmra.mxu0 %v2054
        %v2262 = vpop.f32.mrf.mxu0
        %v2263 = vadd.f32 0.0, %v2262
        %2264 = vmatmul.f32.gmra.mxu0 %v2057
        %v2265 = vpop.f32.mrf.mxu0
        %v2266 = vadd.f32 0.0, %v2265
        %2267 = vmatmul.f32.gmra.mxu0 %v2060
        %v2268 = vpop.f32.mrf.mxu0
        %v2269 = vadd.f32 0.0, %v2268
        %2270 = vmatmul.f32.gmra.mxu0 %v2063
        %v2271 = vpop.f32.mrf.mxu0
        %v2272 = vadd.f32 0.0, %v2271
        %2273 = vmatmul.f32.gmra.mxu0 %v2066
        %v2274 = vpop.f32.mrf.mxu0
        %v2275 = vadd.f32 0.0, %v2274
        %2276 = vmatmul.f32.gmra.mxu0 %v2069
        %v2277 = vpop.f32.mrf.mxu0
        %v2278 = vadd.f32 0.0, %v2277
        %2279 = vmatmul.f32.gmra.mxu0 %v2072
        %v2280 = vpop.f32.mrf.mxu0
        %v2281 = vadd.f32 0.0, %v2280
        %2282 = vmatmul.f32.gmra.mxu0 %v2075
        %v2283 = vpop.f32.mrf.mxu0
        %v2284 = vadd.f32 0.0, %v2283
        %2285 = vmatmul.f32.gmra.mxu0 %v2078
        %v2286 = vpop.f32.mrf.mxu0
        %v2287 = vadd.f32 0.0, %v2286
        %2288 = vmatmul.f32.gmra.mxu0 %v2081
        %v2289 = vpop.f32.mrf.mxu0
        %v2290 = vadd.f32 0.0, %v2289
        %2291 = vmatmul.f32.gmra.mxu0 %v2084
        %v2292 = vpop.f32.mrf.mxu0
        %v2293 = vadd.f32 0.0, %v2292
        %2294 = vmatmul.f32.gmra.mxu0 %v2087
        %v2295 = vpop.f32.mrf.mxu0
        %v2296 = vadd.f32 0.0, %v2295
        %2297 = vmatmul.f32.gmra.mxu0 %v2090
        %v2298 = vpop.f32.mrf.mxu0
        %v2299 = vadd.f32 0.0, %v2298
        %2300 = vmatmul.f32.gmra.mxu0 %v2093
        %v2301 = vpop.f32.mrf.mxu0
        %v2302 = vadd.f32 0.0, %v2301
        %2303 = vmatmul.f32.gmra.mxu0 %v2096
        %v2304 = vpop.f32.mrf.mxu0
        %v2305 = vadd.f32 0.0, %v2304
        %2306 = vmatmul.f32.gmra.mxu0 %v2099
        %v2307 = vpop.f32.mrf.mxu0
        %v2308 = vadd.f32 0.0, %v2307
        %2309 = vmatmul.f32.gmra.mxu0 %v2102
        %v2310 = vpop.f32.mrf.mxu0
        %v2311 = vadd.f32 0.0, %v2310
        %2312 = vmatmul.f32.gmra.mxu0 %v2105
        %v2313 = vpop.f32.mrf.mxu0
        %v2314 = vadd.f32 0.0, %v2313
        %2315 = vmatmul.f32.gmra.mxu0 %v2108
        %v2316 = vpop.f32.mrf.mxu0
        %v2317 = vadd.f32 0.0, %v2316
        %2318 = vmatmul.f32.gmra.mxu0 %v2111
        %v2319 = vpop.f32.mrf.mxu0
        %v2320 = vadd.f32 0.0, %v2319
        %2321 = vmatmul.f32.gmra.mxu0 %v2114
        %v2322 = vpop.f32.mrf.mxu0
        %v2323 = vadd.f32 0.0, %v2322
        %2324 = vmatmul.f32.gmra.mxu0 %v2117
        %v2325 = vpop.f32.mrf.mxu0
        %v2326 = vadd.f32 0.0, %v2325
        %2327 = vmatmul.f32.gmra.mxu0 %v2120
        %v2328 = vpop.f32.mrf.mxu0
        %v2329 = vadd.f32 0.0, %v2328
        %2330 = vmatmul.f32.gmra.mxu0 %v2123
        %v2331 = vpop.f32.mrf.mxu0
        %v2332 = vadd.f32 0.0, %v2331
        %2333 = vmatmul.f32.gmra.mxu0 %v2126
        %v2334 = vpop.f32.mrf.mxu0
        %v2335 = vadd.f32 0.0, %v2334
        %2336 = vmatmul.f32.gmra.mxu0 %v2129
        %v2337 = vpop.f32.mrf.mxu0
        %v2338 = vadd.f32 0.0, %v2337
        %2339 = vmatmul.f32.gmra.mxu0 %v2132
        %v2340 = vpop.f32.mrf.mxu0
        %v2341 = vadd.f32 0.0, %v2340
        %2342 = vmatmul.f32.gmra.mxu0 %v2135
        %v2343 = vpop.f32.mrf.mxu0
        %v2344 = vadd.f32 0.0, %v2343
        %2345 = vmatmul.f32.gmra.mxu0 %v2138
        %v2346 = vpop.f32.mrf.mxu0
        %v2347 = vadd.f32 0.0, %v2346
        %2348 = vmatmul.f32.gmra.mxu0 %v2141
        %v2349 = vpop.f32.mrf.mxu0
        %v2350 = vadd.f32 0.0, %v2349
        %2351 = vmatmul.f32.gmra.mxu0 %v2144
        %v2352 = vpop.f32.mrf.mxu0
        %v2353 = vadd.f32 0.0, %v2352
        %2354 = vmatmul.f32.gmra.mxu0 %v2147
        %v2355 = vpop.f32.mrf.mxu0
        %v2356 = vadd.f32 0.0, %v2355
        %2357 = vmatmul.f32.gmra.mxu0 %v2150
        %v2358 = vpop.f32.mrf.mxu0
        %v2359 = vadd.f32 0.0, %v2358
        %2360 = vmatmul.f32.gmra.mxu0 %v2153
        %v2361 = vpop.f32.mrf.mxu0
        %v2362 = vadd.f32 0.0, %v2361
        %2363 = vmatmul.f32.gmra.mxu0 %v2156
        %v2364 = vpop.f32.mrf.mxu0
        %v2365 = vadd.f32 0.0, %v2364
        %2366 = vmatmul.f32.gmra.mxu0 %v2159
        %v2367 = vpop.f32.mrf.mxu0
        %v2368 = vadd.f32 0.0, %v2367
        %2369 = vmatmul.f32.gmra.mxu0 %v2162
        %v2370 = vpop.f32.mrf.mxu0
        %v2371 = vadd.f32 0.0, %v2370
        %2372 = vmatmul.f32.gmra.mxu0 %v2165
        %v2373 = vpop.f32.mrf.mxu0
        %v2374 = vadd.f32 0.0, %v2373
        %2375 = vmatmul.f32.gmra.mxu0 %v2168
        %v2376 = vpop.f32.mrf.mxu0
        %v2377 = vadd.f32 0.0, %v2376
        %2378 = vmatmul.f32.gmra.mxu0 %v2171
        %v2379 = vpop.f32.mrf.mxu0
        %v2380 = vadd.f32 0.0, %v2379
        %2381 = vmatmul.f32.gmra.mxu0 %v2174
        %v2382 = vpop.f32.mrf.mxu0
        %v2383 = vadd.f32 0.0, %v2382
        %2384 = vmatmul.f32.gmra.mxu0 %v2177
        %v2385 = vpop.f32.mrf.mxu0
        %v2386 = vadd.f32 0.0, %v2385
        %2387 = vdwg.mxu0
        %v2388 = vsub.f32 %v2197, %v1578
        %v2389 = vsub.f32 %v2200, %v1579
        %v2390 = vsub.f32 %v2203, %v1580
        %v2391 = vsub.f32 %v2206, %v1581
        %v2392 = vsub.f32 %v2209, %v1582
        %v2393 = vsub.f32 %v2212, %v1583
        %v2394 = vsub.f32 %v2215, %v1584
        %v2395 = vsub.f32 %v2218, %v1585
        %v2396 = vsub.f32 %v2221, %v1586
        %v2397 = vsub.f32 %v2224, %v1587
        %v2398 = vsub.f32 %v2227, %v1588
        %v2399 = vsub.f32 %v2230, %v1589
        %v2400 = vsub.f32 %v2233, %v1590
        %v2401 = vsub.f32 %v2236, %v1591
        %v2402 = vsub.f32 %v2239, %v1592
        %v2403 = vsub.f32 %v2242, %v1593
        %v2404 = vsub.f32 %v2245, %v1594
        %v2405 = vsub.f32 %v2248, %v1595
        %v2406 = vsub.f32 %v2251, %v1596
        %v2407 = vsub.f32 %v2254, %v1597
        %v2408 = vsub.f32 %v2257, %v1598
        %v2409 = vsub.f32 %v2260, %v1599
        %v2410 = vsub.f32 %v2263, %v1600
        %v2411 = vsub.f32 %v2266, %v1601
        %v2412 = vsub.f32 %v2269, %v1602
        %v2413 = vsub.f32 %v2272, %v1603
        %v2414 = vsub.f32 %v2275, %v1604
        %v2415 = vsub.f32 %v2278, %v1605
        %v2416 = vsub.f32 %v2281, %v1606
        %v2417 = vsub.f32 %v2284, %v1607
        %v2418 = vsub.f32 %v2287, %v1608
        %v2419 = vsub.f32 %v2290, %v1609
        %v2420 = vsub.f32 %v2293, %v1610
        %v2421 = vsub.f32 %v2296, %v1611
        %v2422 = vsub.f32 %v2299, %v1612
        %v2423 = vsub.f32 %v2302, %v1613
        %v2424 = vsub.f32 %v2305, %v1614
        %v2425 = vsub.f32 %v2308, %v1615
        %v2426 = vsub.f32 %v2311, %v1616
        %v2427 = vsub.f32 %v2314, %v1617
        %v2428 = vsub.f32 %v2317, %v1618
        %v2429 = vsub.f32 %v2320, %v1619
        %v2430 = vsub.f32 %v2323, %v1620
        %v2431 = vsub.f32 %v2326, %v1621
        %v2432 = vsub.f32 %v2329, %v1622
        %v2433 = vsub.f32 %v2332, %v1623
        %v2434 = vsub.f32 %v2335, %v1624
        %v2435 = vsub.f32 %v2338, %v1625
        %v2436 = vsub.f32 %v2341, %v1626
        %v2437 = vsub.f32 %v2344, %v1627
        %v2438 = vsub.f32 %v2347, %v1628
        %v2439 = vsub.f32 %v2350, %v1629
        %v2440 = vsub.f32 %v2353, %v1630
        %v2441 = vsub.f32 %v2356, %v1631
        %v2442 = vsub.f32 %v2359, %v1632
        %v2443 = vsub.f32 %v2362, %v1633
        %v2444 = vsub.f32 %v2365, %v1634
        %v2445 = vsub.f32 %v2368, %v1635
        %v2446 = vsub.f32 %v2371, %v1636
        %v2447 = vsub.f32 %v2374, %v1637
        %v2448 = vsub.f32 %v2377, %v1638
        %v2449 = vsub.f32 %v2380, %v1639
        %v2450 = vsub.f32 %v2383, %v1640
        %v2451 = vsub.f32 %v2386, %v1641
        %v2452 = vsub.f32 %v2388, %v1642
        %v2453 = vsub.f32 %v2389, %v1643
        %v2454 = vsub.f32 %v2390, %v1644
        %v2455 = vsub.f32 %v2391, %v1645
        %v2456 = vsub.f32 %v2392, %v1646
        %v2457 = vsub.f32 %v2393, %v1647
        %v2458 = vsub.f32 %v2394, %v1648
        %v2459 = vsub.f32 %v2395, %v1649
        %v2460 = vsub.f32 %v2396, %v1650
        %v2461 = vsub.f32 %v2397, %v1651
        %v2462 = vsub.f32 %v2398, %v1652
        %v2463 = vsub.f32 %v2399, %v1653
        %v2464 = vsub.f32 %v2400, %v1654
        %v2465 = vsub.f32 %v2401, %v1655
        %v2466 = vsub.f32 %v2402, %v1656
        %v2467 = vsub.f32 %v2403, %v1657
        %v2468 = vsub.f32 %v2404, %v1658
        %v2469 = vsub.f32 %v2405, %v1659
        %v2470 = vsub.f32 %v2406, %v1660
        %v2471 = vsub.f32 %v2407, %v1661
        %v2472 = vsub.f32 %v2408, %v1662
        %v2473 = vsub.f32 %v2409, %v1663
        %v2474 = vsub.f32 %v2410, %v1664
        %v2475 = vsub.f32 %v2411, %v1665
        %v2476 = vsub.f32 %v2412, %v1666
        %v2477 = vsub.f32 %v2413, %v1667
        %v2478 = vsub.f32 %v2414, %v1668
        %v2479 = vsub.f32 %v2415, %v1669
        %v2480 = vsub.f32 %v2416, %v1670
        %v2481 = vsub.f32 %v2417, %v1671
        %v2482 = vsub.f32 %v2418, %v1672
        %v2483 = vsub.f32 %v2419, %v1673
        %v2484 = vsub.f32 %v2420, %v1674
        %v2485 = vsub.f32 %v2421, %v1675
        %v2486 = vsub.f32 %v2422, %v1676
        %v2487 = vsub.f32 %v2423, %v1677
        %v2488 = vsub.f32 %v2424, %v1678
        %v2489 = vsub.f32 %v2425, %v1679
        %v2490 = vsub.f32 %v2426, %v1680
        %v2491 = vsub.f32 %v2427, %v1681
        %v2492 = vsub.f32 %v2428, %v1682
        %v2493 = vsub.f32 %v2429, %v1683
        %v2494 = vsub.f32 %v2430, %v1684
        %v2495 = vsub.f32 %v2431, %v1685
        %v2496 = vsub.f32 %v2432, %v1686
        %v2497 = vsub.f32 %v2433, %v1687
        %v2498 = vsub.f32 %v2434, %v1688
        %v2499 = vsub.f32 %v2435, %v1689
        %v2500 = vsub.f32 %v2436, %v1690
        %v2501 = vsub.f32 %v2437, %v1691
        %v2502 = vsub.f32 %v2438, %v1692
        %v2503 = vsub.f32 %v2439, %v1693
        %v2504 = vsub.f32 %v2440, %v1694
        %v2505 = vsub.f32 %v2441, %v1695
        %v2506 = vsub.f32 %v2442, %v1696
        %v2507 = vsub.f32 %v2443, %v1697
        %v2508 = vsub.f32 %v2444, %v1698
        %v2509 = vsub.f32 %v2445, %v1699
        %v2510 = vsub.f32 %v2446, %v1700
        %v2511 = vsub.f32 %v2447, %v1701
        %v2512 = vsub.f32 %v2448, %v1702
        %v2513 = vsub.f32 %v2449, %v1703
        %v2514 = vsub.f32 %v2450, %v1704
        %v2515 = vsub.f32 %v2451, %v1705
        %v2516 = vmul.f32 %v327, %v335
        %v2517 = vmul.f32 %v328, %v336
        %v2518 = vmul.f32 %v329, %v337
        %v2519 = vmul.f32 %v330, %v338
        %v2520 = vmul.f32 %v331, %v339
        %v2521 = vmul.f32 %v332, %v340
        %v2522 = vmul.f32 %v333, %v341
        %v2523 = vmul.f32 %v334, %v342
        %v2525 = vsel %vm359, %v2516, 0
        %v2528 = vsel %vm359, %v2517, 0
        %v2531 = vsel %vm359, %v2518, 0
        %v2534 = vsel %vm359, %v2519, 0
        %v2537 = vsel %vm359, %v2520, 0
        %v2540 = vsel %vm359, %v2521, 0
        %v2543 = vsel %vm359, %v2522, 0
        %v2546 = vsel %vm359, %v2523, 0
        %2548 = vmatpush.msra.mxu0 0.0
        %2549 = vmatpush.msra.mxu0 0.0
        %2550 = vmatpush.msra.mxu0 0.0
        %2551 = vmatpush.msra.mxu0 0.0
        %2552 = vmatpush.msra.mxu0 0.0
        %2553 = vmatpush.msra.mxu0 0.0
        %2554 = vmatpush.msra.mxu0 0.0
        %2555 = vmatpush.msra.mxu0 0.0
        %2556 = vmatpush.msra.mxu0 0.0
        %2557 = vmatpush.msra.mxu0 0.0
        %2558 = vmatpush.msra.mxu0 0.0
        %2559 = vmatpush.msra.mxu0 0.0
        %2560 = vmatpush.msra.mxu0 0.0
        %2561 = vmatpush.msra.mxu0 0.0
        %2562 = vmatpush.msra.mxu0 %v387
        %2563 = vmatpush.msra.mxu0 %v386
        %2564 = vmatmul.f32.gmra.mxu0 %v2525
        %v2565 = vpop.f32.mrf.mxu0
        %v2566 = vadd.f32 0.0, %v2565
        %2567 = vmatmul.f32.gmra.mxu0 %v2528
        %v2568 = vpop.f32.mrf.mxu0
        %v2569 = vadd.f32 0.0, %v2568
        %2570 = vmatmul.f32.gmra.mxu0 %v2531
        %v2571 = vpop.f32.mrf.mxu0
        %v2572 = vadd.f32 0.0, %v2571
        %2573 = vmatmul.f32.gmra.mxu0 %v2534
        %v2574 = vpop.f32.mrf.mxu0
        %v2575 = vadd.f32 0.0, %v2574
        %2576 = vmatmul.f32.gmra.mxu0 %v2537
        %v2577 = vpop.f32.mrf.mxu0
        %v2578 = vadd.f32 0.0, %v2577
        %2579 = vmatmul.f32.gmra.mxu0 %v2540
        %v2580 = vpop.f32.mrf.mxu0
        %v2581 = vadd.f32 0.0, %v2580
        %2582 = vmatmul.f32.gmra.mxu0 %v2543
        %v2583 = vpop.f32.mrf.mxu0
        %v2584 = vadd.f32 0.0, %v2583
        %2585 = vmatmul.f32.gmra.mxu0 %v2546
        %v2586 = vpop.f32.mrf.mxu0
        %v2587 = vadd.f32 0.0, %v2586
        %2588 = vdwg.mxu0
        %2589 = vxpose.xlu0.b32.start [1/16] %v2566, 128
        %2590 = vxpose.xlu0.b32.cont [2/16] %v2569, 128
        %2591 = vxpose.xlu0.b32.cont [3/16] 0.0, 128
        %2592 = vxpose.xlu0.b32.cont [4/16] 0.0, 128
        %2593 = vxpose.xlu0.b32.cont [5/16] 0.0, 128
        %2594 = vxpose.xlu0.b32.cont [6/16] 0.0, 128
        %2595 = vxpose.xlu0.b32.cont [7/16] 0.0, 128
        %2596 = vxpose.xlu0.b32.cont [8/16] 0.0, 128
        %2597 = vxpose.xlu0.b32.cont [9/16] 0.0, 128
        %2598 = vxpose.xlu0.b32.cont [10/16] 0.0, 128
        %2599 = vxpose.xlu0.b32.cont [11/16] 0.0, 128
        %2600 = vxpose.xlu0.b32.cont [12/16] 0.0, 128
        %2601 = vxpose.xlu0.b32.cont [13/16] 0.0, 128
        %2602 = vxpose.xlu0.b32.cont [14/16] 0.0, 128
        %2603 = vxpose.xlu0.b32.cont [15/16] 0.0, 128
        %2604 = vxpose.xlu0.b32.end [16/16] 0.0, 128
        %v2605 = vpop.trf.xlu0
        %v2606 = vpop.trf.xlu0
        %v2607 = vpop.trf.xlu0
        %v2608 = vpop.trf.xlu0
        %v2609 = vpop.trf.xlu0
        %v2610 = vpop.trf.xlu0
        %v2611 = vpop.trf.xlu0
        %v2612 = vpop.trf.xlu0
        %v2613 = vpop.trf.xlu0
        %v2614 = vpop.trf.xlu0
        %v2615 = vpop.trf.xlu0
        %v2616 = vpop.trf.xlu0
        %v2617 = vpop.trf.xlu0
        %v2618 = vpop.trf.xlu0
        %v2619 = vpop.trf.xlu0
        %v2620 = vpop.trf.xlu0
        %2621 = vxpose.xlu0.b32.start [1/16] %v2572, 128
        %2622 = vxpose.xlu0.b32.cont [2/16] %v2575, 128
        %2623 = vxpose.xlu0.b32.cont [3/16] 0.0, 128
        %2624 = vxpose.xlu0.b32.cont [4/16] 0.0, 128
        %2625 = vxpose.xlu0.b32.cont [5/16] 0.0, 128
        %2626 = vxpose.xlu0.b32.cont [6/16] 0.0, 128
        %2627 = vxpose.xlu0.b32.cont [7/16] 0.0, 128
        %2628 = vxpose.xlu0.b32.cont [8/16] 0.0, 128
        %2629 = vxpose.xlu0.b32.cont [9/16] 0.0, 128
        %2630 = vxpose.xlu0.b32.cont [10/16] 0.0, 128
        %2631 = vxpose.xlu0.b32.cont [11/16] 0.0, 128
        %2632 = vxpose.xlu0.b32.cont [12/16] 0.0, 128
        %2633 = vxpose.xlu0.b32.cont [13/16] 0.0, 128
        %2634 = vxpose.xlu0.b32.cont [14/16] 0.0, 128
        %2635 = vxpose.xlu0.b32.cont [15/16] 0.0, 128
        %2636 = vxpose.xlu0.b32.end [16/16] 0.0, 128
        %v2637 = vpop.trf.xlu0
        %v2638 = vpop.trf.xlu0
        %v2639 = vpop.trf.xlu0
        %v2640 = vpop.trf.xlu0
        %v2641 = vpop.trf.xlu0
        %v2642 = vpop.trf.xlu0
        %v2643 = vpop.trf.xlu0
        %v2644 = vpop.trf.xlu0
        %v2645 = vpop.trf.xlu0
        %v2646 = vpop.trf.xlu0
        %v2647 = vpop.trf.xlu0
        %v2648 = vpop.trf.xlu0
        %v2649 = vpop.trf.xlu0
        %v2650 = vpop.trf.xlu0
        %v2651 = vpop.trf.xlu0
        %v2652 = vpop.trf.xlu0
        %2653 = vxpose.xlu0.b32.start [1/16] %v2578, 128
        %2654 = vxpose.xlu0.b32.cont [2/16] %v2581, 128
        %2655 = vxpose.xlu0.b32.cont [3/16] 0.0, 128
        %2656 = vxpose.xlu0.b32.cont [4/16] 0.0, 128
        %2657 = vxpose.xlu0.b32.cont [5/16] 0.0, 128
        %2658 = vxpose.xlu0.b32.cont [6/16] 0.0, 128
        %2659 = vxpose.xlu0.b32.cont [7/16] 0.0, 128
        %2660 = vxpose.xlu0.b32.cont [8/16] 0.0, 128
        %2661 = vxpose.xlu0.b32.cont [9/16] 0.0, 128
        %2662 = vxpose.xlu0.b32.cont [10/16] 0.0, 128
        %2663 = vxpose.xlu0.b32.cont [11/16] 0.0, 128
        %2664 = vxpose.xlu0.b32.cont [12/16] 0.0, 128
        %2665 = vxpose.xlu0.b32.cont [13/16] 0.0, 128
        %2666 = vxpose.xlu0.b32.cont [14/16] 0.0, 128
        %2667 = vxpose.xlu0.b32.cont [15/16] 0.0, 128
        %2668 = vxpose.xlu0.b32.end [16/16] 0.0, 128
        %v2669 = vpop.trf.xlu0
        %v2670 = vpop.trf.xlu0
        %v2671 = vpop.trf.xlu0
        %v2672 = vpop.trf.xlu0
        %v2673 = vpop.trf.xlu0
        %v2674 = vpop.trf.xlu0
        %v2675 = vpop.trf.xlu0
        %v2676 = vpop.trf.xlu0
        %v2677 = vpop.trf.xlu0
        %v2678 = vpop.trf.xlu0
        %v2679 = vpop.trf.xlu0
        %v2680 = vpop.trf.xlu0
        %v2681 = vpop.trf.xlu0
        %v2682 = vpop.trf.xlu0
        %v2683 = vpop.trf.xlu0
        %v2684 = vpop.trf.xlu0
        %2685 = vxpose.xlu0.b32.start [1/16] %v2584, 128
        %2686 = vxpose.xlu0.b32.cont [2/16] %v2587, 128
        %2687 = vxpose.xlu0.b32.cont [3/16] 0.0, 128
        %2688 = vxpose.xlu0.b32.cont [4/16] 0.0, 128
        %2689 = vxpose.xlu0.b32.cont [5/16] 0.0, 128
        %2690 = vxpose.xlu0.b32.cont [6/16] 0.0, 128
        %2691 = vxpose.xlu0.b32.cont [7/16] 0.0, 128
        %2692 = vxpose.xlu0.b32.cont [8/16] 0.0, 128
        %2693 = vxpose.xlu0.b32.cont [9/16] 0.0, 128
        %2694 = vxpose.xlu0.b32.cont [10/16] 0.0, 128
        %2695 = vxpose.xlu0.b32.cont [11/16] 0.0, 128
        %2696 = vxpose.xlu0.b32.cont [12/16] 0.0, 128
        %2697 = vxpose.xlu0.b32.cont [13/16] 0.0, 128
        %2698 = vxpose.xlu0.b32.cont [14/16] 0.0, 128
        %2699 = vxpose.xlu0.b32.cont [15/16] 0.0, 128
        %2700 = vxpose.xlu0.b32.end [16/16] 0.0, 128
        %v2701 = vpop.trf.xlu0
        %v2702 = vpop.trf.xlu0
        %v2703 = vpop.trf.xlu0
        %v2704 = vpop.trf.xlu0
        %v2705 = vpop.trf.xlu0
        %v2706 = vpop.trf.xlu0
        %v2707 = vpop.trf.xlu0
        %v2708 = vpop.trf.xlu0
        %v2709 = vpop.trf.xlu0
        %v2710 = vpop.trf.xlu0
        %v2711 = vpop.trf.xlu0
        %v2712 = vpop.trf.xlu0
        %v2713 = vpop.trf.xlu0
        %v2714 = vpop.trf.xlu0
        %v2715 = vpop.trf.xlu0
        %v2716 = vpop.trf.xlu0
        %v2718 = vsel %vm359, %v2605, 0
        %v2721 = vsel %vm359, %v2606, 0
        %v2724 = vsel %vm359, %v2607, 0
        %v2727 = vsel %vm359, %v2608, 0
        %v2730 = vsel %vm359, %v2609, 0
        %v2733 = vsel %vm359, %v2610, 0
        %v2736 = vsel %vm359, %v2611, 0
        %v2739 = vsel %vm359, %v2612, 0
        %v2742 = vsel %vm359, %v2613, 0
        %v2745 = vsel %vm359, %v2614, 0
        %v2748 = vsel %vm359, %v2615, 0
        %v2751 = vsel %vm359, %v2616, 0
        %v2754 = vsel %vm359, %v2617, 0
        %v2757 = vsel %vm359, %v2618, 0
        %v2760 = vsel %vm359, %v2619, 0
        %v2763 = vsel %vm359, %v2620, 0
        %v2766 = vsel %vm359, %v2637, 0
        %v2769 = vsel %vm359, %v2638, 0
        %v2772 = vsel %vm359, %v2639, 0
        %v2775 = vsel %vm359, %v2640, 0
        %v2778 = vsel %vm359, %v2641, 0
        %v2781 = vsel %vm359, %v2642, 0
        %v2784 = vsel %vm359, %v2643, 0
        %v2787 = vsel %vm359, %v2644, 0
        %v2790 = vsel %vm359, %v2645, 0
        %v2793 = vsel %vm359, %v2646, 0
        %v2796 = vsel %vm359, %v2647, 0
        %v2799 = vsel %vm359, %v2648, 0
        %v2802 = vsel %vm359, %v2649, 0
        %v2805 = vsel %vm359, %v2650, 0
        %v2808 = vsel %vm359, %v2651, 0
        %v2811 = vsel %vm359, %v2652, 0
        %v2814 = vsel %vm359, %v2669, 0
        %v2817 = vsel %vm359, %v2670, 0
        %v2820 = vsel %vm359, %v2671, 0
        %v2823 = vsel %vm359, %v2672, 0
        %v2826 = vsel %vm359, %v2673, 0
        %v2829 = vsel %vm359, %v2674, 0
        %v2832 = vsel %vm359, %v2675, 0
        %v2835 = vsel %vm359, %v2676, 0
        %v2838 = vsel %vm359, %v2677, 0
        %v2841 = vsel %vm359, %v2678, 0
        %v2844 = vsel %vm359, %v2679, 0
        %v2847 = vsel %vm359, %v2680, 0
        %v2850 = vsel %vm359, %v2681, 0
        %v2853 = vsel %vm359, %v2682, 0
        %v2856 = vsel %vm359, %v2683, 0
        %v2859 = vsel %vm359, %v2684, 0
        %v2862 = vsel %vm359, %v2701, 0
        %v2865 = vsel %vm359, %v2702, 0
        %v2868 = vsel %vm359, %v2703, 0
        %v2871 = vsel %vm359, %v2704, 0
        %v2874 = vsel %vm359, %v2705, 0
        %v2877 = vsel %vm359, %v2706, 0
        %v2880 = vsel %vm359, %v2707, 0
        %v2883 = vsel %vm359, %v2708, 0
        %v2886 = vsel %vm359, %v2709, 0
        %v2889 = vsel %vm359, %v2710, 0
        %v2892 = vsel %vm359, %v2711, 0
        %v2895 = vsel %vm359, %v2712, 0
        %v2898 = vsel %vm359, %v2713, 0
        %v2901 = vsel %vm359, %v2714, 0
        %v2904 = vsel %vm359, %v2715, 0
        %v2907 = vsel %vm359, %v2716, 0
        %2909 = vmatpush.msra.mxu0 0.0
        %2910 = vmatpush.msra.mxu0 0.0
        %2911 = vmatpush.msra.mxu0 0.0
        %2912 = vmatpush.msra.mxu0 0.0
        %2913 = vmatpush.msra.mxu0 0.0
        %2914 = vmatpush.msra.mxu0 0.0
        %2915 = vmatpush.msra.mxu0 0.0
        %2916 = vmatpush.msra.mxu0 0.0
        %2917 = vmatpush.msra.mxu0 0.0
        %2918 = vmatpush.msra.mxu0 0.0
        %2919 = vmatpush.msra.mxu0 0.0
        %2920 = vmatpush.msra.mxu0 0.0
        %2921 = vmatpush.msra.mxu0 0.0
        %2922 = vmatpush.msra.mxu0 0.0
        %2923 = vmatpush.msra.mxu0 %v389
        %2924 = vmatpush.msra.mxu0 %v388
        %2925 = vmatmul.f32.gmra.mxu0 %v2718
        %v2926 = vpop.f32.mrf.mxu0
        %v2927 = vadd.f32 0.0, %v2926
        %2928 = vmatmul.f32.gmra.mxu0 %v2721
        %v2929 = vpop.f32.mrf.mxu0
        %v2930 = vadd.f32 0.0, %v2929
        %2931 = vmatmul.f32.gmra.mxu0 %v2724
        %v2932 = vpop.f32.mrf.mxu0
        %v2933 = vadd.f32 0.0, %v2932
        %2934 = vmatmul.f32.gmra.mxu0 %v2727
        %v2935 = vpop.f32.mrf.mxu0
        %v2936 = vadd.f32 0.0, %v2935
        %2937 = vmatmul.f32.gmra.mxu0 %v2730
        %v2938 = vpop.f32.mrf.mxu0
        %v2939 = vadd.f32 0.0, %v2938
        %2940 = vmatmul.f32.gmra.mxu0 %v2733
        %v2941 = vpop.f32.mrf.mxu0
        %v2942 = vadd.f32 0.0, %v2941
        %2943 = vmatmul.f32.gmra.mxu0 %v2736
        %v2944 = vpop.f32.mrf.mxu0
        %v2945 = vadd.f32 0.0, %v2944
        %2946 = vmatmul.f32.gmra.mxu0 %v2739
        %v2947 = vpop.f32.mrf.mxu0
        %v2948 = vadd.f32 0.0, %v2947
        %2949 = vmatmul.f32.gmra.mxu0 %v2742
        %v2950 = vpop.f32.mrf.mxu0
        %v2951 = vadd.f32 0.0, %v2950
        %2952 = vmatmul.f32.gmra.mxu0 %v2745
        %v2953 = vpop.f32.mrf.mxu0
        %v2954 = vadd.f32 0.0, %v2953
        %2955 = vmatmul.f32.gmra.mxu0 %v2748
        %v2956 = vpop.f32.mrf.mxu0
        %v2957 = vadd.f32 0.0, %v2956
        %2958 = vmatmul.f32.gmra.mxu0 %v2751
        %v2959 = vpop.f32.mrf.mxu0
        %v2960 = vadd.f32 0.0, %v2959
        %2961 = vmatmul.f32.gmra.mxu0 %v2754
        %v2962 = vpop.f32.mrf.mxu0
        %v2963 = vadd.f32 0.0, %v2962
        %2964 = vmatmul.f32.gmra.mxu0 %v2757
        %v2965 = vpop.f32.mrf.mxu0
        %v2966 = vadd.f32 0.0, %v2965
        %2967 = vmatmul.f32.gmra.mxu0 %v2760
        %v2968 = vpop.f32.mrf.mxu0
        %v2969 = vadd.f32 0.0, %v2968
        %2970 = vmatmul.f32.gmra.mxu0 %v2763
        %v2971 = vpop.f32.mrf.mxu0
        %v2972 = vadd.f32 0.0, %v2971
        %2973 = vmatmul.f32.gmra.mxu0 %v2766
        %v2974 = vpop.f32.mrf.mxu0
        %v2975 = vadd.f32 0.0, %v2974
        %2976 = vmatmul.f32.gmra.mxu0 %v2769
        %v2977 = vpop.f32.mrf.mxu0
        %v2978 = vadd.f32 0.0, %v2977
        %2979 = vmatmul.f32.gmra.mxu0 %v2772
        %v2980 = vpop.f32.mrf.mxu0
        %v2981 = vadd.f32 0.0, %v2980
        %2982 = vmatmul.f32.gmra.mxu0 %v2775
        %v2983 = vpop.f32.mrf.mxu0
        %v2984 = vadd.f32 0.0, %v2983
        %2985 = vmatmul.f32.gmra.mxu0 %v2778
        %v2986 = vpop.f32.mrf.mxu0
        %v2987 = vadd.f32 0.0, %v2986
        %2988 = vmatmul.f32.gmra.mxu0 %v2781
        %v2989 = vpop.f32.mrf.mxu0
        %v2990 = vadd.f32 0.0, %v2989
        %2991 = vmatmul.f32.gmra.mxu0 %v2784
        %v2992 = vpop.f32.mrf.mxu0
        %v2993 = vadd.f32 0.0, %v2992
        %2994 = vmatmul.f32.gmra.mxu0 %v2787
        %v2995 = vpop.f32.mrf.mxu0
        %v2996 = vadd.f32 0.0, %v2995
        %2997 = vmatmul.f32.gmra.mxu0 %v2790
        %v2998 = vpop.f32.mrf.mxu0
        %v2999 = vadd.f32 0.0, %v2998
        %3000 = vmatmul.f32.gmra.mxu0 %v2793
        %v3001 = vpop.f32.mrf.mxu0
        %v3002 = vadd.f32 0.0, %v3001
        %3003 = vmatmul.f32.gmra.mxu0 %v2796
        %v3004 = vpop.f32.mrf.mxu0
        %v3005 = vadd.f32 0.0, %v3004
        %3006 = vmatmul.f32.gmra.mxu0 %v2799
        %v3007 = vpop.f32.mrf.mxu0
        %v3008 = vadd.f32 0.0, %v3007
        %3009 = vmatmul.f32.gmra.mxu0 %v2802
        %v3010 = vpop.f32.mrf.mxu0
        %v3011 = vadd.f32 0.0, %v3010
        %3012 = vmatmul.f32.gmra.mxu0 %v2805
        %v3013 = vpop.f32.mrf.mxu0
        %v3014 = vadd.f32 0.0, %v3013
        %3015 = vmatmul.f32.gmra.mxu0 %v2808
        %v3016 = vpop.f32.mrf.mxu0
        %v3017 = vadd.f32 0.0, %v3016
        %3018 = vmatmul.f32.gmra.mxu0 %v2811
        %v3019 = vpop.f32.mrf.mxu0
        %v3020 = vadd.f32 0.0, %v3019
        %3021 = vmatmul.f32.gmra.mxu0 %v2814
        %v3022 = vpop.f32.mrf.mxu0
        %v3023 = vadd.f32 0.0, %v3022
        %3024 = vmatmul.f32.gmra.mxu0 %v2817
        %v3025 = vpop.f32.mrf.mxu0
        %v3026 = vadd.f32 0.0, %v3025
        %3027 = vmatmul.f32.gmra.mxu0 %v2820
        %v3028 = vpop.f32.mrf.mxu0
        %v3029 = vadd.f32 0.0, %v3028
        %3030 = vmatmul.f32.gmra.mxu0 %v2823
        %v3031 = vpop.f32.mrf.mxu0
        %v3032 = vadd.f32 0.0, %v3031
        %3033 = vmatmul.f32.gmra.mxu0 %v2826
        %v3034 = vpop.f32.mrf.mxu0
        %v3035 = vadd.f32 0.0, %v3034
        %3036 = vmatmul.f32.gmra.mxu0 %v2829
        %v3037 = vpop.f32.mrf.mxu0
        %v3038 = vadd.f32 0.0, %v3037
        %3039 = vmatmul.f32.gmra.mxu0 %v2832
        %v3040 = vpop.f32.mrf.mxu0
        %v3041 = vadd.f32 0.0, %v3040
        %3042 = vmatmul.f32.gmra.mxu0 %v2835
        %v3043 = vpop.f32.mrf.mxu0
        %v3044 = vadd.f32 0.0, %v3043
        %3045 = vmatmul.f32.gmra.mxu0 %v2838
        %v3046 = vpop.f32.mrf.mxu0
        %v3047 = vadd.f32 0.0, %v3046
        %3048 = vmatmul.f32.gmra.mxu0 %v2841
        %v3049 = vpop.f32.mrf.mxu0
        %v3050 = vadd.f32 0.0, %v3049
        %3051 = vmatmul.f32.gmra.mxu0 %v2844
        %v3052 = vpop.f32.mrf.mxu0
        %v3053 = vadd.f32 0.0, %v3052
        %3054 = vmatmul.f32.gmra.mxu0 %v2847
        %v3055 = vpop.f32.mrf.mxu0
        %v3056 = vadd.f32 0.0, %v3055
        %3057 = vmatmul.f32.gmra.mxu0 %v2850
        %v3058 = vpop.f32.mrf.mxu0
        %v3059 = vadd.f32 0.0, %v3058
        %3060 = vmatmul.f32.gmra.mxu0 %v2853
        %v3061 = vpop.f32.mrf.mxu0
        %v3062 = vadd.f32 0.0, %v3061
        %3063 = vmatmul.f32.gmra.mxu0 %v2856
        %v3064 = vpop.f32.mrf.mxu0
        %v3065 = vadd.f32 0.0, %v3064
        %3066 = vmatmul.f32.gmra.mxu0 %v2859
        %v3067 = vpop.f32.mrf.mxu0
        %v3068 = vadd.f32 0.0, %v3067
        %3069 = vmatmul.f32.gmra.mxu0 %v2862
        %v3070 = vpop.f32.mrf.mxu0
        %v3071 = vadd.f32 0.0, %v3070
        %3072 = vmatmul.f32.gmra.mxu0 %v2865
        %v3073 = vpop.f32.mrf.mxu0
        %v3074 = vadd.f32 0.0, %v3073
        %3075 = vmatmul.f32.gmra.mxu0 %v2868
        %v3076 = vpop.f32.mrf.mxu0
        %v3077 = vadd.f32 0.0, %v3076
        %3078 = vmatmul.f32.gmra.mxu0 %v2871
        %v3079 = vpop.f32.mrf.mxu0
        %v3080 = vadd.f32 0.0, %v3079
        %3081 = vmatmul.f32.gmra.mxu0 %v2874
        %v3082 = vpop.f32.mrf.mxu0
        %v3083 = vadd.f32 0.0, %v3082
        %3084 = vmatmul.f32.gmra.mxu0 %v2877
        %v3085 = vpop.f32.mrf.mxu0
        %v3086 = vadd.f32 0.0, %v3085
        %3087 = vmatmul.f32.gmra.mxu0 %v2880
        %v3088 = vpop.f32.mrf.mxu0
        %v3089 = vadd.f32 0.0, %v3088
        %3090 = vmatmul.f32.gmra.mxu0 %v2883
        %v3091 = vpop.f32.mrf.mxu0
        %v3092 = vadd.f32 0.0, %v3091
        %3093 = vmatmul.f32.gmra.mxu0 %v2886
        %v3094 = vpop.f32.mrf.mxu0
        %v3095 = vadd.f32 0.0, %v3094
        %3096 = vmatmul.f32.gmra.mxu0 %v2889
        %v3097 = vpop.f32.mrf.mxu0
        %v3098 = vadd.f32 0.0, %v3097
        %3099 = vmatmul.f32.gmra.mxu0 %v2892
        %v3100 = vpop.f32.mrf.mxu0
        %v3101 = vadd.f32 0.0, %v3100
        %3102 = vmatmul.f32.gmra.mxu0 %v2895
        %v3103 = vpop.f32.mrf.mxu0
        %v3104 = vadd.f32 0.0, %v3103
        %3105 = vmatmul.f32.gmra.mxu0 %v2898
        %v3106 = vpop.f32.mrf.mxu0
        %v3107 = vadd.f32 0.0, %v3106
        %3108 = vmatmul.f32.gmra.mxu0 %v2901
        %v3109 = vpop.f32.mrf.mxu0
        %v3110 = vadd.f32 0.0, %v3109
        %3111 = vmatmul.f32.gmra.mxu0 %v2904
        %v3112 = vpop.f32.mrf.mxu0
        %v3113 = vadd.f32 0.0, %v3112
        %3114 = vmatmul.f32.gmra.mxu0 %v2907
        %v3115 = vpop.f32.mrf.mxu0
        %v3116 = vadd.f32 0.0, %v3115
        %3117 = vdwg.mxu0
        %v3118 = vsub.f32 %v2927, %v1706
        %v3119 = vsub.f32 %v2930, %v1707
        %v3120 = vsub.f32 %v2933, %v1708
        %v3121 = vsub.f32 %v2936, %v1709
        %v3122 = vsub.f32 %v2939, %v1710
        %v3123 = vsub.f32 %v2942, %v1711
        %v3124 = vsub.f32 %v2945, %v1712
        %v3125 = vsub.f32 %v2948, %v1713
        %v3126 = vsub.f32 %v2951, %v1714
        %v3127 = vsub.f32 %v2954, %v1715
        %v3128 = vsub.f32 %v2957, %v1716
        %v3129 = vsub.f32 %v2960, %v1717
        %v3130 = vsub.f32 %v2963, %v1718
        %v3131 = vsub.f32 %v2966, %v1719
        %v3132 = vsub.f32 %v2969, %v1720
        %v3133 = vsub.f32 %v2972, %v1721
        %v3134 = vsub.f32 %v2975, %v1722
        %v3135 = vsub.f32 %v2978, %v1723
        %v3136 = vsub.f32 %v2981, %v1724
        %v3137 = vsub.f32 %v2984, %v1725
        %v3138 = vsub.f32 %v2987, %v1726
        %v3139 = vsub.f32 %v2990, %v1727
        %v3140 = vsub.f32 %v2993, %v1728
        %v3141 = vsub.f32 %v2996, %v1729
        %v3142 = vsub.f32 %v2999, %v1730
        %v3143 = vsub.f32 %v3002, %v1731
        %v3144 = vsub.f32 %v3005, %v1732
        %v3145 = vsub.f32 %v3008, %v1733
        %v3146 = vsub.f32 %v3011, %v1734
        %v3147 = vsub.f32 %v3014, %v1735
        %v3148 = vsub.f32 %v3017, %v1736
        %v3149 = vsub.f32 %v3020, %v1737
        %v3150 = vsub.f32 %v3023, %v1738
        %v3151 = vsub.f32 %v3026, %v1739
        %v3152 = vsub.f32 %v3029, %v1740
        %v3153 = vsub.f32 %v3032, %v1741
        %v3154 = vsub.f32 %v3035, %v1742
        %v3155 = vsub.f32 %v3038, %v1743
        %v3156 = vsub.f32 %v3041, %v1744
        %v3157 = vsub.f32 %v3044, %v1745
        %v3158 = vsub.f32 %v3047, %v1746
        %v3159 = vsub.f32 %v3050, %v1747
        %v3160 = vsub.f32 %v3053, %v1748
        %v3161 = vsub.f32 %v3056, %v1749
        %v3162 = vsub.f32 %v3059, %v1750
        %v3163 = vsub.f32 %v3062, %v1751
        %v3164 = vsub.f32 %v3065, %v1752
        %v3165 = vsub.f32 %v3068, %v1753
        %v3166 = vsub.f32 %v3071, %v1754
        %v3167 = vsub.f32 %v3074, %v1755
        %v3168 = vsub.f32 %v3077, %v1756
        %v3169 = vsub.f32 %v3080, %v1757
        %v3170 = vsub.f32 %v3083, %v1758
        %v3171 = vsub.f32 %v3086, %v1759
        %v3172 = vsub.f32 %v3089, %v1760
        %v3173 = vsub.f32 %v3092, %v1761
        %v3174 = vsub.f32 %v3095, %v1762
        %v3175 = vsub.f32 %v3098, %v1763
        %v3176 = vsub.f32 %v3101, %v1764
        %v3177 = vsub.f32 %v3104, %v1765
        %v3178 = vsub.f32 %v3107, %v1766
        %v3179 = vsub.f32 %v3110, %v1767
        %v3180 = vsub.f32 %v3113, %v1768
        %v3181 = vsub.f32 %v3116, %v1769
        %v3182 = vmul.f32 %v1706, 2.0
        %v3183 = vmul.f32 %v1707, 2.0
        %v3184 = vmul.f32 %v1708, 2.0
        %v3185 = vmul.f32 %v1709, 2.0
        %v3186 = vmul.f32 %v1710, 2.0
        %v3187 = vmul.f32 %v1711, 2.0
        %v3188 = vmul.f32 %v1712, 2.0
        %v3189 = vmul.f32 %v1713, 2.0
        %v3190 = vmul.f32 %v1714, 2.0
        %v3191 = vmul.f32 %v1715, 2.0
        %v3192 = vmul.f32 %v1716, 2.0
        %v3193 = vmul.f32 %v1717, 2.0
        %v3194 = vmul.f32 %v1718, 2.0
        %v3195 = vmul.f32 %v1719, 2.0
        %v3196 = vmul.f32 %v1720, 2.0
        %v3197 = vmul.f32 %v1721, 2.0
        %v3198 = vmul.f32 %v1722, 2.0
        %v3199 = vmul.f32 %v1723, 2.0
        %v3200 = vmul.f32 %v1724, 2.0
        %v3201 = vmul.f32 %v1725, 2.0
        %v3202 = vmul.f32 %v1726, 2.0
        %v3203 = vmul.f32 %v1727, 2.0
        %v3204 = vmul.f32 %v1728, 2.0
        %v3205 = vmul.f32 %v1729, 2.0
        %v3206 = vmul.f32 %v1730, 2.0
        %v3207 = vmul.f32 %v1731, 2.0
        %v3208 = vmul.f32 %v1732, 2.0
        %v3209 = vmul.f32 %v1733, 2.0
        %v3210 = vmul.f32 %v1734, 2.0
        %v3211 = vmul.f32 %v1735, 2.0
        %v3212 = vmul.f32 %v1736, 2.0
        %v3213 = vmul.f32 %v1737, 2.0
        %v3214 = vmul.f32 %v1738, 2.0
        %v3215 = vmul.f32 %v1739, 2.0
        %v3216 = vmul.f32 %v1740, 2.0
        %v3217 = vmul.f32 %v1741, 2.0
        %v3218 = vmul.f32 %v1742, 2.0
        %v3219 = vmul.f32 %v1743, 2.0
        %v3220 = vmul.f32 %v1744, 2.0
        %v3221 = vmul.f32 %v1745, 2.0
        %v3222 = vmul.f32 %v1746, 2.0
        %v3223 = vmul.f32 %v1747, 2.0
        %v3224 = vmul.f32 %v1748, 2.0
        %v3225 = vmul.f32 %v1749, 2.0
        %v3226 = vmul.f32 %v1750, 2.0
        %v3227 = vmul.f32 %v1751, 2.0
        %v3228 = vmul.f32 %v1752, 2.0
        %v3229 = vmul.f32 %v1753, 2.0
        %v3230 = vmul.f32 %v1754, 2.0
        %v3231 = vmul.f32 %v1755, 2.0
        %v3232 = vmul.f32 %v1756, 2.0
        %v3233 = vmul.f32 %v1757, 2.0
        %v3234 = vmul.f32 %v1758, 2.0
        %v3235 = vmul.f32 %v1759, 2.0
        %v3236 = vmul.f32 %v1760, 2.0
        %v3237 = vmul.f32 %v1761, 2.0
        %v3238 = vmul.f32 %v1762, 2.0
        %v3239 = vmul.f32 %v1763, 2.0
        %v3240 = vmul.f32 %v1764, 2.0
        %v3241 = vmul.f32 %v1765, 2.0
        %v3242 = vmul.f32 %v1766, 2.0
        %v3243 = vmul.f32 %v1767, 2.0
        %v3244 = vmul.f32 %v1768, 2.0
        %v3245 = vmul.f32 %v1769, 2.0
        %v3246 = vadd.f32 %v3182, 0.0001
        %v3247 = vadd.f32 %v3183, 0.0001
        %v3248 = vadd.f32 %v3184, 0.0001
        %v3249 = vadd.f32 %v3185, 0.0001
        %v3250 = vadd.f32 %v3186, 0.0001
        %v3251 = vadd.f32 %v3187, 0.0001
        %v3252 = vadd.f32 %v3188, 0.0001
        %v3253 = vadd.f32 %v3189, 0.0001
        %v3254 = vadd.f32 %v3190, 0.0001
        %v3255 = vadd.f32 %v3191, 0.0001
        %v3256 = vadd.f32 %v3192, 0.0001
        %v3257 = vadd.f32 %v3193, 0.0001
        %v3258 = vadd.f32 %v3194, 0.0001
        %v3259 = vadd.f32 %v3195, 0.0001
        %v3260 = vadd.f32 %v3196, 0.0001
        %v3261 = vadd.f32 %v3197, 0.0001
        %v3262 = vadd.f32 %v3198, 0.0001
        %v3263 = vadd.f32 %v3199, 0.0001
        %v3264 = vadd.f32 %v3200, 0.0001
        %v3265 = vadd.f32 %v3201, 0.0001
        %v3266 = vadd.f32 %v3202, 0.0001
        %v3267 = vadd.f32 %v3203, 0.0001
        %v3268 = vadd.f32 %v3204, 0.0001
        %v3269 = vadd.f32 %v3205, 0.0001
        %v3270 = vadd.f32 %v3206, 0.0001
        %v3271 = vadd.f32 %v3207, 0.0001
        %v3272 = vadd.f32 %v3208, 0.0001
        %v3273 = vadd.f32 %v3209, 0.0001
        %v3274 = vadd.f32 %v3210, 0.0001
        %v3275 = vadd.f32 %v3211, 0.0001
        %v3276 = vadd.f32 %v3212, 0.0001
        %v3277 = vadd.f32 %v3213, 0.0001
        %v3278 = vadd.f32 %v3214, 0.0001
        %v3279 = vadd.f32 %v3215, 0.0001
        %v3280 = vadd.f32 %v3216, 0.0001
        %v3281 = vadd.f32 %v3217, 0.0001
        %v3282 = vadd.f32 %v3218, 0.0001
        %v3283 = vadd.f32 %v3219, 0.0001
        %v3284 = vadd.f32 %v3220, 0.0001
        %v3285 = vadd.f32 %v3221, 0.0001
        %v3286 = vadd.f32 %v3222, 0.0001
        %v3287 = vadd.f32 %v3223, 0.0001
        %v3288 = vadd.f32 %v3224, 0.0001
        %v3289 = vadd.f32 %v3225, 0.0001
        %v3290 = vadd.f32 %v3226, 0.0001
        %v3291 = vadd.f32 %v3227, 0.0001
        %v3292 = vadd.f32 %v3228, 0.0001
        %v3293 = vadd.f32 %v3229, 0.0001
        %v3294 = vadd.f32 %v3230, 0.0001
        %v3295 = vadd.f32 %v3231, 0.0001
        %v3296 = vadd.f32 %v3232, 0.0001
        %v3297 = vadd.f32 %v3233, 0.0001
        %v3298 = vadd.f32 %v3234, 0.0001
        %v3299 = vadd.f32 %v3235, 0.0001
        %v3300 = vadd.f32 %v3236, 0.0001
        %v3301 = vadd.f32 %v3237, 0.0001
        %v3302 = vadd.f32 %v3238, 0.0001
        %v3303 = vadd.f32 %v3239, 0.0001
        %v3304 = vadd.f32 %v3240, 0.0001
        %v3305 = vadd.f32 %v3241, 0.0001
        %v3306 = vadd.f32 %v3242, 0.0001
        %v3307 = vadd.f32 %v3243, 0.0001
        %v3308 = vadd.f32 %v3244, 0.0001
        %v3309 = vadd.f32 %v3245, 0.0001
        %v3310 = vmul.f32 %v3118, 2.0
        %v3311 = vmul.f32 %v3119, 2.0
        %v3312 = vmul.f32 %v3120, 2.0
        %v3313 = vmul.f32 %v3121, 2.0
        %v3314 = vmul.f32 %v3122, 2.0
        %v3315 = vmul.f32 %v3123, 2.0
        %v3316 = vmul.f32 %v3124, 2.0
        %v3317 = vmul.f32 %v3125, 2.0
        %v3318 = vmul.f32 %v3126, 2.0
        %v3319 = vmul.f32 %v3127, 2.0
        %v3320 = vmul.f32 %v3128, 2.0
        %v3321 = vmul.f32 %v3129, 2.0
        %v3322 = vmul.f32 %v3130, 2.0
        %v3323 = vmul.f32 %v3131, 2.0
        %v3324 = vmul.f32 %v3132, 2.0
        %v3325 = vmul.f32 %v3133, 2.0
        %v3326 = vmul.f32 %v3134, 2.0
        %v3327 = vmul.f32 %v3135, 2.0
        %v3328 = vmul.f32 %v3136, 2.0
        %v3329 = vmul.f32 %v3137, 2.0
        %v3330 = vmul.f32 %v3138, 2.0
        %v3331 = vmul.f32 %v3139, 2.0
        %v3332 = vmul.f32 %v3140, 2.0
        %v3333 = vmul.f32 %v3141, 2.0
        %v3334 = vmul.f32 %v3142, 2.0
        %v3335 = vmul.f32 %v3143, 2.0
        %v3336 = vmul.f32 %v3144, 2.0
        %v3337 = vmul.f32 %v3145, 2.0
        %v3338 = vmul.f32 %v3146, 2.0
        %v3339 = vmul.f32 %v3147, 2.0
        %v3340 = vmul.f32 %v3148, 2.0
        %v3341 = vmul.f32 %v3149, 2.0
        %v3342 = vmul.f32 %v3150, 2.0
        %v3343 = vmul.f32 %v3151, 2.0
        %v3344 = vmul.f32 %v3152, 2.0
        %v3345 = vmul.f32 %v3153, 2.0
        %v3346 = vmul.f32 %v3154, 2.0
        %v3347 = vmul.f32 %v3155, 2.0
        %v3348 = vmul.f32 %v3156, 2.0
        %v3349 = vmul.f32 %v3157, 2.0
        %v3350 = vmul.f32 %v3158, 2.0
        %v3351 = vmul.f32 %v3159, 2.0
        %v3352 = vmul.f32 %v3160, 2.0
        %v3353 = vmul.f32 %v3161, 2.0
        %v3354 = vmul.f32 %v3162, 2.0
        %v3355 = vmul.f32 %v3163, 2.0
        %v3356 = vmul.f32 %v3164, 2.0
        %v3357 = vmul.f32 %v3165, 2.0
        %v3358 = vmul.f32 %v3166, 2.0
        %v3359 = vmul.f32 %v3167, 2.0
        %v3360 = vmul.f32 %v3168, 2.0
        %v3361 = vmul.f32 %v3169, 2.0
        %v3362 = vmul.f32 %v3170, 2.0
        %v3363 = vmul.f32 %v3171, 2.0
        %v3364 = vmul.f32 %v3172, 2.0
        %v3365 = vmul.f32 %v3173, 2.0
        %v3366 = vmul.f32 %v3174, 2.0
        %v3367 = vmul.f32 %v3175, 2.0
        %v3368 = vmul.f32 %v3176, 2.0
        %v3369 = vmul.f32 %v3177, 2.0
        %v3370 = vmul.f32 %v3178, 2.0
        %v3371 = vmul.f32 %v3179, 2.0
        %v3372 = vmul.f32 %v3180, 2.0
        %v3373 = vmul.f32 %v3181, 2.0
        %v3374 = vadd.f32 %v3310, 0.0009
        %v3375 = vadd.f32 %v3311, 0.0009
        %v3376 = vadd.f32 %v3312, 0.0009
        %v3377 = vadd.f32 %v3313, 0.0009
        %v3378 = vadd.f32 %v3314, 0.0009
        %v3379 = vadd.f32 %v3315, 0.0009
        %v3380 = vadd.f32 %v3316, 0.0009
        %v3381 = vadd.f32 %v3317, 0.0009
        %v3382 = vadd.f32 %v3318, 0.0009
        %v3383 = vadd.f32 %v3319, 0.0009
        %v3384 = vadd.f32 %v3320, 0.0009
        %v3385 = vadd.f32 %v3321, 0.0009
        %v3386 = vadd.f32 %v3322, 0.0009
        %v3387 = vadd.f32 %v3323, 0.0009
        %v3388 = vadd.f32 %v3324, 0.0009
        %v3389 = vadd.f32 %v3325, 0.0009
        %v3390 = vadd.f32 %v3326, 0.0009
        %v3391 = vadd.f32 %v3327, 0.0009
        %v3392 = vadd.f32 %v3328, 0.0009
        %v3393 = vadd.f32 %v3329, 0.0009
        %v3394 = vadd.f32 %v3330, 0.0009
        %v3395 = vadd.f32 %v3331, 0.0009
        %v3396 = vadd.f32 %v3332, 0.0009
        %v3397 = vadd.f32 %v3333, 0.0009
        %v3398 = vadd.f32 %v3334, 0.0009
        %v3399 = vadd.f32 %v3335, 0.0009
        %v3400 = vadd.f32 %v3336, 0.0009
        %v3401 = vadd.f32 %v3337, 0.0009
        %v3402 = vadd.f32 %v3338, 0.0009
        %v3403 = vadd.f32 %v3339, 0.0009
        %v3404 = vadd.f32 %v3340, 0.0009
        %v3405 = vadd.f32 %v3341, 0.0009
        %v3406 = vadd.f32 %v3342, 0.0009
        %v3407 = vadd.f32 %v3343, 0.0009
        %v3408 = vadd.f32 %v3344, 0.0009
        %v3409 = vadd.f32 %v3345, 0.0009
        %v3410 = vadd.f32 %v3346, 0.0009
        %v3411 = vadd.f32 %v3347, 0.0009
        %v3412 = vadd.f32 %v3348, 0.0009
        %v3413 = vadd.f32 %v3349, 0.0009
        %v3414 = vadd.f32 %v3350, 0.0009
        %v3415 = vadd.f32 %v3351, 0.0009
        %v3416 = vadd.f32 %v3352, 0.0009
        %v3417 = vadd.f32 %v3353, 0.0009
        %v3418 = vadd.f32 %v3354, 0.0009
        %v3419 = vadd.f32 %v3355, 0.0009
        %v3420 = vadd.f32 %v3356, 0.0009
        %v3421 = vadd.f32 %v3357, 0.0009
        %v3422 = vadd.f32 %v3358, 0.0009
        %v3423 = vadd.f32 %v3359, 0.0009
        %v3424 = vadd.f32 %v3360, 0.0009
        %v3425 = vadd.f32 %v3361, 0.0009
        %v3426 = vadd.f32 %v3362, 0.0009
        %v3427 = vadd.f32 %v3363, 0.0009
        %v3428 = vadd.f32 %v3364, 0.0009
        %v3429 = vadd.f32 %v3365, 0.0009
        %v3430 = vadd.f32 %v3366, 0.0009
        %v3431 = vadd.f32 %v3367, 0.0009
        %v3432 = vadd.f32 %v3368, 0.0009
        %v3433 = vadd.f32 %v3369, 0.0009
        %v3434 = vadd.f32 %v3370, 0.0009
        %v3435 = vadd.f32 %v3371, 0.0009
        %v3436 = vadd.f32 %v3372, 0.0009
        %v3437 = vadd.f32 %v3373, 0.0009
        %v3438 = vmul.f32 %v3246, %v3374
        %v3439 = vmul.f32 %v3247, %v3375
        %v3440 = vmul.f32 %v3248, %v3376
        %v3441 = vmul.f32 %v3249, %v3377
        %v3442 = vmul.f32 %v3250, %v3378
        %v3443 = vmul.f32 %v3251, %v3379
        %v3444 = vmul.f32 %v3252, %v3380
        %v3445 = vmul.f32 %v3253, %v3381
        %v3446 = vmul.f32 %v3254, %v3382
        %v3447 = vmul.f32 %v3255, %v3383
        %v3448 = vmul.f32 %v3256, %v3384
        %v3449 = vmul.f32 %v3257, %v3385
        %v3450 = vmul.f32 %v3258, %v3386
        %v3451 = vmul.f32 %v3259, %v3387
        %v3452 = vmul.f32 %v3260, %v3388
        %v3453 = vmul.f32 %v3261, %v3389
        %v3454 = vmul.f32 %v3262, %v3390
        %v3455 = vmul.f32 %v3263, %v3391
        %v3456 = vmul.f32 %v3264, %v3392
        %v3457 = vmul.f32 %v3265, %v3393
        %v3458 = vmul.f32 %v3266, %v3394
        %v3459 = vmul.f32 %v3267, %v3395
        %v3460 = vmul.f32 %v3268, %v3396
        %v3461 = vmul.f32 %v3269, %v3397
        %v3462 = vmul.f32 %v3270, %v3398
        %v3463 = vmul.f32 %v3271, %v3399
        %v3464 = vmul.f32 %v3272, %v3400
        %v3465 = vmul.f32 %v3273, %v3401
        %v3466 = vmul.f32 %v3274, %v3402
        %v3467 = vmul.f32 %v3275, %v3403
        %v3468 = vmul.f32 %v3276, %v3404
        %v3469 = vmul.f32 %v3277, %v3405
        %v3470 = vmul.f32 %v3278, %v3406
        %v3471 = vmul.f32 %v3279, %v3407
        %v3472 = vmul.f32 %v3280, %v3408
        %v3473 = vmul.f32 %v3281, %v3409
        %v3474 = vmul.f32 %v3282, %v3410
        %v3475 = vmul.f32 %v3283, %v3411
        %v3476 = vmul.f32 %v3284, %v3412
        %v3477 = vmul.f32 %v3285, %v3413
        %v3478 = vmul.f32 %v3286, %v3414
        %v3479 = vmul.f32 %v3287, %v3415
        %v3480 = vmul.f32 %v3288, %v3416
        %v3481 = vmul.f32 %v3289, %v3417
        %v3482 = vmul.f32 %v3290, %v3418
        %v3483 = vmul.f32 %v3291, %v3419
        %v3484 = vmul.f32 %v3292, %v3420
        %v3485 = vmul.f32 %v3293, %v3421
        %v3486 = vmul.f32 %v3294, %v3422
        %v3487 = vmul.f32 %v3295, %v3423
        %v3488 = vmul.f32 %v3296, %v3424
        %v3489 = vmul.f32 %v3297, %v3425
        %v3490 = vmul.f32 %v3298, %v3426
        %v3491 = vmul.f32 %v3299, %v3427
        %v3492 = vmul.f32 %v3300, %v3428
        %v3493 = vmul.f32 %v3301, %v3429
        %v3494 = vmul.f32 %v3302, %v3430
        %v3495 = vmul.f32 %v3303, %v3431
        %v3496 = vmul.f32 %v3304, %v3432
        %v3497 = vmul.f32 %v3305, %v3433
        %v3498 = vmul.f32 %v3306, %v3434
        %v3499 = vmul.f32 %v3307, %v3435
        %v3500 = vmul.f32 %v3308, %v3436
        %v3501 = vmul.f32 %v3309, %v3437
        %v3502 = vadd.f32 %v1578, %v1642
        %v3503 = vadd.f32 %v1579, %v1643
        %v3504 = vadd.f32 %v1580, %v1644
        %v3505 = vadd.f32 %v1581, %v1645
        %v3506 = vadd.f32 %v1582, %v1646
        %v3507 = vadd.f32 %v1583, %v1647
        %v3508 = vadd.f32 %v1584, %v1648
        %v3509 = vadd.f32 %v1585, %v1649
        %v3510 = vadd.f32 %v1586, %v1650
        %v3511 = vadd.f32 %v1587, %v1651
        %v3512 = vadd.f32 %v1588, %v1652
        %v3513 = vadd.f32 %v1589, %v1653
        %v3514 = vadd.f32 %v1590, %v1654
        %v3515 = vadd.f32 %v1591, %v1655
        %v3516 = vadd.f32 %v1592, %v1656
        %v3517 = vadd.f32 %v1593, %v1657
        %v3518 = vadd.f32 %v1594, %v1658
        %v3519 = vadd.f32 %v1595, %v1659
        %v3520 = vadd.f32 %v1596, %v1660
        %v3521 = vadd.f32 %v1597, %v1661
        %v3522 = vadd.f32 %v1598, %v1662
        %v3523 = vadd.f32 %v1599, %v1663
        %v3524 = vadd.f32 %v1600, %v1664
        %v3525 = vadd.f32 %v1601, %v1665
        %v3526 = vadd.f32 %v1602, %v1666
        %v3527 = vadd.f32 %v1603, %v1667
        %v3528 = vadd.f32 %v1604, %v1668
        %v3529 = vadd.f32 %v1605, %v1669
        %v3530 = vadd.f32 %v1606, %v1670
        %v3531 = vadd.f32 %v1607, %v1671
        %v3532 = vadd.f32 %v1608, %v1672
        %v3533 = vadd.f32 %v1609, %v1673
        %v3534 = vadd.f32 %v1610, %v1674
        %v3535 = vadd.f32 %v1611, %v1675
        %v3536 = vadd.f32 %v1612, %v1676
        %v3537 = vadd.f32 %v1613, %v1677
        %v3538 = vadd.f32 %v1614, %v1678
        %v3539 = vadd.f32 %v1615, %v1679
        %v3540 = vadd.f32 %v1616, %v1680
        %v3541 = vadd.f32 %v1617, %v1681
        %v3542 = vadd.f32 %v1618, %v1682
        %v3543 = vadd.f32 %v1619, %v1683
        %v3544 = vadd.f32 %v1620, %v1684
        %v3545 = vadd.f32 %v1621, %v1685
        %v3546 = vadd.f32 %v1622, %v1686
        %v3547 = vadd.f32 %v1623, %v1687
        %v3548 = vadd.f32 %v1624, %v1688
        %v3549 = vadd.f32 %v1625, %v1689
        %v3550 = vadd.f32 %v1626, %v1690
        %v3551 = vadd.f32 %v1627, %v1691
        %v3552 = vadd.f32 %v1628, %v1692
        %v3553 = vadd.f32 %v1629, %v1693
        %v3554 = vadd.f32 %v1630, %v1694
        %v3555 = vadd.f32 %v1631, %v1695
        %v3556 = vadd.f32 %v1632, %v1696
        %v3557 = vadd.f32 %v1633, %v1697
        %v3558 = vadd.f32 %v1634, %v1698
        %v3559 = vadd.f32 %v1635, %v1699
        %v3560 = vadd.f32 %v1636, %v1700
        %v3561 = vadd.f32 %v1637, %v1701
        %v3562 = vadd.f32 %v1638, %v1702
        %v3563 = vadd.f32 %v1639, %v1703
        %v3564 = vadd.f32 %v1640, %v1704
        %v3565 = vadd.f32 %v1641, %v1705
        %v3566 = vadd.f32 %v3502, 0.0001
        %v3567 = vadd.f32 %v3503, 0.0001
        %v3568 = vadd.f32 %v3504, 0.0001
        %v3569 = vadd.f32 %v3505, 0.0001
        %v3570 = vadd.f32 %v3506, 0.0001
        %v3571 = vadd.f32 %v3507, 0.0001
        %v3572 = vadd.f32 %v3508, 0.0001
        %v3573 = vadd.f32 %v3509, 0.0001
        %v3574 = vadd.f32 %v3510, 0.0001
        %v3575 = vadd.f32 %v3511, 0.0001
        %v3576 = vadd.f32 %v3512, 0.0001
        %v3577 = vadd.f32 %v3513, 0.0001
        %v3578 = vadd.f32 %v3514, 0.0001
        %v3579 = vadd.f32 %v3515, 0.0001
        %v3580 = vadd.f32 %v3516, 0.0001
        %v3581 = vadd.f32 %v3517, 0.0001
        %v3582 = vadd.f32 %v3518, 0.0001
        %v3583 = vadd.f32 %v3519, 0.0001
        %v3584 = vadd.f32 %v3520, 0.0001
        %v3585 = vadd.f32 %v3521, 0.0001
        %v3586 = vadd.f32 %v3522, 0.0001
        %v3587 = vadd.f32 %v3523, 0.0001
        %v3588 = vadd.f32 %v3524, 0.0001
        %v3589 = vadd.f32 %v3525, 0.0001
        %v3590 = vadd.f32 %v3526, 0.0001
        %v3591 = vadd.f32 %v3527, 0.0001
        %v3592 = vadd.f32 %v3528, 0.0001
        %v3593 = vadd.f32 %v3529, 0.0001
        %v3594 = vadd.f32 %v3530, 0.0001
        %v3595 = vadd.f32 %v3531, 0.0001
        %v3596 = vadd.f32 %v3532, 0.0001
        %v3597 = vadd.f32 %v3533, 0.0001
        %v3598 = vadd.f32 %v3534, 0.0001
        %v3599 = vadd.f32 %v3535, 0.0001
        %v3600 = vadd.f32 %v3536, 0.0001
        %v3601 = vadd.f32 %v3537, 0.0001
        %v3602 = vadd.f32 %v3538, 0.0001
        %v3603 = vadd.f32 %v3539, 0.0001
        %v3604 = vadd.f32 %v3540, 0.0001
        %v3605 = vadd.f32 %v3541, 0.0001
        %v3606 = vadd.f32 %v3542, 0.0001
        %v3607 = vadd.f32 %v3543, 0.0001
        %v3608 = vadd.f32 %v3544, 0.0001
        %v3609 = vadd.f32 %v3545, 0.0001
        %v3610 = vadd.f32 %v3546, 0.0001
        %v3611 = vadd.f32 %v3547, 0.0001
        %v3612 = vadd.f32 %v3548, 0.0001
        %v3613 = vadd.f32 %v3549, 0.0001
        %v3614 = vadd.f32 %v3550, 0.0001
        %v3615 = vadd.f32 %v3551, 0.0001
        %v3616 = vadd.f32 %v3552, 0.0001
        %v3617 = vadd.f32 %v3553, 0.0001
        %v3618 = vadd.f32 %v3554, 0.0001
        %v3619 = vadd.f32 %v3555, 0.0001
        %v3620 = vadd.f32 %v3556, 0.0001
        %v3621 = vadd.f32 %v3557, 0.0001
        %v3622 = vadd.f32 %v3558, 0.0001
        %v3623 = vadd.f32 %v3559, 0.0001
        %v3624 = vadd.f32 %v3560, 0.0001
        %v3625 = vadd.f32 %v3561, 0.0001
        %v3626 = vadd.f32 %v3562, 0.0001
        %v3627 = vadd.f32 %v3563, 0.0001
        %v3628 = vadd.f32 %v3564, 0.0001
        %v3629 = vadd.f32 %v3565, 0.0001
        %v3630 = vadd.f32 %v2452, 0.0009
        %v3631 = vadd.f32 %v2453, 0.0009
        %v3632 = vadd.f32 %v2454, 0.0009
        %v3633 = vadd.f32 %v2455, 0.0009
        %v3634 = vadd.f32 %v2456, 0.0009
        %v3635 = vadd.f32 %v2457, 0.0009
        %v3636 = vadd.f32 %v2458, 0.0009
        %v3637 = vadd.f32 %v2459, 0.0009
        %v3638 = vadd.f32 %v2460, 0.0009
        %v3639 = vadd.f32 %v2461, 0.0009
        %v3640 = vadd.f32 %v2462, 0.0009
        %v3641 = vadd.f32 %v2463, 0.0009
        %v3642 = vadd.f32 %v2464, 0.0009
        %v3643 = vadd.f32 %v2465, 0.0009
        %v3644 = vadd.f32 %v2466, 0.0009
        %v3645 = vadd.f32 %v2467, 0.0009
        %v3646 = vadd.f32 %v2468, 0.0009
        %v3647 = vadd.f32 %v2469, 0.0009
        %v3648 = vadd.f32 %v2470, 0.0009
        %v3649 = vadd.f32 %v2471, 0.0009
        %v3650 = vadd.f32 %v2472, 0.0009
        %v3651 = vadd.f32 %v2473, 0.0009
        %v3652 = vadd.f32 %v2474, 0.0009
        %v3653 = vadd.f32 %v2475, 0.0009
        %v3654 = vadd.f32 %v2476, 0.0009
        %v3655 = vadd.f32 %v2477, 0.0009
        %v3656 = vadd.f32 %v2478, 0.0009
        %v3657 = vadd.f32 %v2479, 0.0009
        %v3658 = vadd.f32 %v2480, 0.0009
        %v3659 = vadd.f32 %v2481, 0.0009
        %v3660 = vadd.f32 %v2482, 0.0009
        %v3661 = vadd.f32 %v2483, 0.0009
        %v3662 = vadd.f32 %v2484, 0.0009
        %v3663 = vadd.f32 %v2485, 0.0009
        %v3664 = vadd.f32 %v2486, 0.0009
        %v3665 = vadd.f32 %v2487, 0.0009
        %v3666 = vadd.f32 %v2488, 0.0009
        %v3667 = vadd.f32 %v2489, 0.0009
        %v3668 = vadd.f32 %v2490, 0.0009
        %v3669 = vadd.f32 %v2491, 0.0009
        %v3670 = vadd.f32 %v2492, 0.0009
        %v3671 = vadd.f32 %v2493, 0.0009
        %v3672 = vadd.f32 %v2494, 0.0009
        %v3673 = vadd.f32 %v2495, 0.0009
        %v3674 = vadd.f32 %v2496, 0.0009
        %v3675 = vadd.f32 %v2497, 0.0009
        %v3676 = vadd.f32 %v2498, 0.0009
        %v3677 = vadd.f32 %v2499, 0.0009
        %v3678 = vadd.f32 %v2500, 0.0009
        %v3679 = vadd.f32 %v2501, 0.0009
        %v3680 = vadd.f32 %v2502, 0.0009
        %v3681 = vadd.f32 %v2503, 0.0009
        %v3682 = vadd.f32 %v2504, 0.0009
        %v3683 = vadd.f32 %v2505, 0.0009
        %v3684 = vadd.f32 %v2506, 0.0009
        %v3685 = vadd.f32 %v2507, 0.0009
        %v3686 = vadd.f32 %v2508, 0.0009
        %v3687 = vadd.f32 %v2509, 0.0009
        %v3688 = vadd.f32 %v2510, 0.0009
        %v3689 = vadd.f32 %v2511, 0.0009
        %v3690 = vadd.f32 %v2512, 0.0009
        %v3691 = vadd.f32 %v2513, 0.0009
        %v3692 = vadd.f32 %v2514, 0.0009
        %v3693 = vadd.f32 %v2515, 0.0009
        %v3694 = vmul.f32 %v3566, %v3630
        %v3695 = vmul.f32 %v3567, %v3631
        %v3696 = vmul.f32 %v3568, %v3632
        %v3697 = vmul.f32 %v3569, %v3633
        %v3698 = vmul.f32 %v3570, %v3634
        %v3699 = vmul.f32 %v3571, %v3635
        %v3700 = vmul.f32 %v3572, %v3636
        %v3701 = vmul.f32 %v3573, %v3637
        %v3702 = vmul.f32 %v3574, %v3638
        %v3703 = vmul.f32 %v3575, %v3639
        %v3704 = vmul.f32 %v3576, %v3640
        %v3705 = vmul.f32 %v3577, %v3641
        %v3706 = vmul.f32 %v3578, %v3642
        %v3707 = vmul.f32 %v3579, %v3643
        %v3708 = vmul.f32 %v3580, %v3644
        %v3709 = vmul.f32 %v3581, %v3645
        %v3710 = vmul.f32 %v3582, %v3646
        %v3711 = vmul.f32 %v3583, %v3647
        %v3712 = vmul.f32 %v3584, %v3648
        %v3713 = vmul.f32 %v3585, %v3649
        %v3714 = vmul.f32 %v3586, %v3650
        %v3715 = vmul.f32 %v3587, %v3651
        %v3716 = vmul.f32 %v3588, %v3652
        %v3717 = vmul.f32 %v3589, %v3653
        %v3718 = vmul.f32 %v3590, %v3654
        %v3719 = vmul.f32 %v3591, %v3655
        %v3720 = vmul.f32 %v3592, %v3656
        %v3721 = vmul.f32 %v3593, %v3657
        %v3722 = vmul.f32 %v3594, %v3658
        %v3723 = vmul.f32 %v3595, %v3659
        %v3724 = vmul.f32 %v3596, %v3660
        %v3725 = vmul.f32 %v3597, %v3661
        %v3726 = vmul.f32 %v3598, %v3662
        %v3727 = vmul.f32 %v3599, %v3663
        %v3728 = vmul.f32 %v3600, %v3664
        %v3729 = vmul.f32 %v3601, %v3665
        %v3730 = vmul.f32 %v3602, %v3666
        %v3731 = vmul.f32 %v3603, %v3667
        %v3732 = vmul.f32 %v3604, %v3668
        %v3733 = vmul.f32 %v3605, %v3669
        %v3734 = vmul.f32 %v3606, %v3670
        %v3735 = vmul.f32 %v3607, %v3671
        %v3736 = vmul.f32 %v3608, %v3672
        %v3737 = vmul.f32 %v3609, %v3673
        %v3738 = vmul.f32 %v3610, %v3674
        %v3739 = vmul.f32 %v3611, %v3675
        %v3740 = vmul.f32 %v3612, %v3676
        %v3741 = vmul.f32 %v3613, %v3677
        %v3742 = vmul.f32 %v3614, %v3678
        %v3743 = vmul.f32 %v3615, %v3679
        %v3744 = vmul.f32 %v3616, %v3680
        %v3745 = vmul.f32 %v3617, %v3681
        %v3746 = vmul.f32 %v3618, %v3682
        %v3747 = vmul.f32 %v3619, %v3683
        %v3748 = vmul.f32 %v3620, %v3684
        %v3749 = vmul.f32 %v3621, %v3685
        %v3750 = vmul.f32 %v3622, %v3686
        %v3751 = vmul.f32 %v3623, %v3687
        %v3752 = vmul.f32 %v3624, %v3688
        %v3753 = vmul.f32 %v3625, %v3689
        %v3754 = vmul.f32 %v3626, %v3690
        %v3755 = vmul.f32 %v3627, %v3691
        %v3756 = vmul.f32 %v3628, %v3692
        %v3757 = vmul.f32 %v3629, %v3693
        %v3758 = vrcp.pop %v3694
        %v3759 = vrcp.pop %v3695
        %v3760 = vrcp.pop %v3696
        %v3761 = vrcp.pop %v3697
        %v3762 = vrcp.pop %v3698
        %v3763 = vrcp.pop %v3699
        %v3764 = vrcp.pop %v3700
        %v3765 = vrcp.pop %v3701
        %v3766 = vrcp.pop %v3702
        %v3767 = vrcp.pop %v3703
        %v3768 = vrcp.pop %v3704
        %v3769 = vrcp.pop %v3705
        %v3770 = vrcp.pop %v3706
        %v3771 = vrcp.pop %v3707
        %v3772 = vrcp.pop %v3708
        %v3773 = vrcp.pop %v3709
        %v3774 = vrcp.pop %v3710
        %v3775 = vrcp.pop %v3711
        %v3776 = vrcp.pop %v3712
        %v3777 = vrcp.pop %v3713
        %v3778 = vrcp.pop %v3714
        %v3779 = vrcp.pop %v3715
        %v3780 = vrcp.pop %v3716
        %v3781 = vrcp.pop %v3717
        %v3782 = vrcp.pop %v3718
        %v3783 = vrcp.pop %v3719
        %v3784 = vrcp.pop %v3720
        %v3785 = vrcp.pop %v3721
        %v3786 = vrcp.pop %v3722
        %v3787 = vrcp.pop %v3723
        %v3788 = vrcp.pop %v3724
        %v3789 = vrcp.pop %v3725
        %v3790 = vrcp.pop %v3726
        %v3791 = vrcp.pop %v3727
        %v3792 = vrcp.pop %v3728
        %v3793 = vrcp.pop %v3729
        %v3794 = vrcp.pop %v3730
        %v3795 = vrcp.pop %v3731
        %v3796 = vrcp.pop %v3732
        %v3797 = vrcp.pop %v3733
        %v3798 = vrcp.pop %v3734
        %v3799 = vrcp.pop %v3735
        %v3800 = vrcp.pop %v3736
        %v3801 = vrcp.pop %v3737
        %v3802 = vrcp.pop %v3738
        %v3803 = vrcp.pop %v3739
        %v3804 = vrcp.pop %v3740
        %v3805 = vrcp.pop %v3741
        %v3806 = vrcp.pop %v3742
        %v3807 = vrcp.pop %v3743
        %v3808 = vrcp.pop %v3744
        %v3809 = vrcp.pop %v3745
        %v3810 = vrcp.pop %v3746
        %v3811 = vrcp.pop %v3747
        %v3812 = vrcp.pop %v3748
        %v3813 = vrcp.pop %v3749
        %v3814 = vrcp.pop %v3750
        %v3815 = vrcp.pop %v3751
        %v3816 = vrcp.pop %v3752
        %v3817 = vrcp.pop %v3753
        %v3818 = vrcp.pop %v3754
        %v3819 = vrcp.pop %v3755
        %v3820 = vrcp.pop %v3756
        %v3821 = vrcp.pop %v3757
        %v3822 = vmul.f32 %v3694, %v3758
        %v3823 = vmul.f32 %v3695, %v3759
        %v3824 = vmul.f32 %v3696, %v3760
        %v3825 = vmul.f32 %v3697, %v3761
        %v3826 = vmul.f32 %v3698, %v3762
        %v3827 = vmul.f32 %v3699, %v3763
        %v3828 = vmul.f32 %v3700, %v3764
        %v3829 = vmul.f32 %v3701, %v3765
        %v3830 = vmul.f32 %v3702, %v3766
        %v3831 = vmul.f32 %v3703, %v3767
        %v3832 = vmul.f32 %v3704, %v3768
        %v3833 = vmul.f32 %v3705, %v3769
        %v3834 = vmul.f32 %v3706, %v3770
        %v3835 = vmul.f32 %v3707, %v3771
        %v3836 = vmul.f32 %v3708, %v3772
        %v3837 = vmul.f32 %v3709, %v3773
        %v3838 = vmul.f32 %v3710, %v3774
        %v3839 = vmul.f32 %v3711, %v3775
        %v3840 = vmul.f32 %v3712, %v3776
        %v3841 = vmul.f32 %v3713, %v3777
        %v3842 = vmul.f32 %v3714, %v3778
        %v3843 = vmul.f32 %v3715, %v3779
        %v3844 = vmul.f32 %v3716, %v3780
        %v3845 = vmul.f32 %v3717, %v3781
        %v3846 = vmul.f32 %v3718, %v3782
        %v3847 = vmul.f32 %v3719, %v3783
        %v3848 = vmul.f32 %v3720, %v3784
        %v3849 = vmul.f32 %v3721, %v3785
        %v3850 = vmul.f32 %v3722, %v3786
        %v3851 = vmul.f32 %v3723, %v3787
        %v3852 = vmul.f32 %v3724, %v3788
        %v3853 = vmul.f32 %v3725, %v3789
        %v3854 = vmul.f32 %v3726, %v3790
        %v3855 = vmul.f32 %v3727, %v3791
        %v3856 = vmul.f32 %v3728, %v3792
        %v3857 = vmul.f32 %v3729, %v3793
        %v3858 = vmul.f32 %v3730, %v3794
        %v3859 = vmul.f32 %v3731, %v3795
        %v3860 = vmul.f32 %v3732, %v3796
        %v3861 = vmul.f32 %v3733, %v3797
        %v3862 = vmul.f32 %v3734, %v3798
        %v3863 = vmul.f32 %v3735, %v3799
        %v3864 = vmul.f32 %v3736, %v3800
        %v3865 = vmul.f32 %v3737, %v3801
        %v3866 = vmul.f32 %v3738, %v3802
        %v3867 = vmul.f32 %v3739, %v3803
        %v3868 = vmul.f32 %v3740, %v3804
        %v3869 = vmul.f32 %v3741, %v3805
        %v3870 = vmul.f32 %v3742, %v3806
        %v3871 = vmul.f32 %v3743, %v3807
        %v3872 = vmul.f32 %v3744, %v3808
        %v3873 = vmul.f32 %v3745, %v3809
        %v3874 = vmul.f32 %v3746, %v3810
        %v3875 = vmul.f32 %v3747, %v3811
        %v3876 = vmul.f32 %v3748, %v3812
        %v3877 = vmul.f32 %v3749, %v3813
        %v3878 = vmul.f32 %v3750, %v3814
        %v3879 = vmul.f32 %v3751, %v3815
        %v3880 = vmul.f32 %v3752, %v3816
        %v3881 = vmul.f32 %v3753, %v3817
        %v3882 = vmul.f32 %v3754, %v3818
        %v3883 = vmul.f32 %v3755, %v3819
        %v3884 = vmul.f32 %v3756, %v3820
        %v3885 = vmul.f32 %v3757, %v3821
        %v3886 = vsub.f32 2.0, %v3822
        %v3887 = vsub.f32 2.0, %v3823
        %v3888 = vsub.f32 2.0, %v3824
        %v3889 = vsub.f32 2.0, %v3825
        %v3890 = vsub.f32 2.0, %v3826
        %v3891 = vsub.f32 2.0, %v3827
        %v3892 = vsub.f32 2.0, %v3828
        %v3893 = vsub.f32 2.0, %v3829
        %v3894 = vsub.f32 2.0, %v3830
        %v3895 = vsub.f32 2.0, %v3831
        %v3896 = vsub.f32 2.0, %v3832
        %v3897 = vsub.f32 2.0, %v3833
        %v3898 = vsub.f32 2.0, %v3834
        %v3899 = vsub.f32 2.0, %v3835
        %v3900 = vsub.f32 2.0, %v3836
        %v3901 = vsub.f32 2.0, %v3837
        %v3902 = vsub.f32 2.0, %v3838
        %v3903 = vsub.f32 2.0, %v3839
        %v3904 = vsub.f32 2.0, %v3840
        %v3905 = vsub.f32 2.0, %v3841
        %v3906 = vsub.f32 2.0, %v3842
        %v3907 = vsub.f32 2.0, %v3843
        %v3908 = vsub.f32 2.0, %v3844
        %v3909 = vsub.f32 2.0, %v3845
        %v3910 = vsub.f32 2.0, %v3846
        %v3911 = vsub.f32 2.0, %v3847
        %v3912 = vsub.f32 2.0, %v3848
        %v3913 = vsub.f32 2.0, %v3849
        %v3914 = vsub.f32 2.0, %v3850
        %v3915 = vsub.f32 2.0, %v3851
        %v3916 = vsub.f32 2.0, %v3852
        %v3917 = vsub.f32 2.0, %v3853
        %v3918 = vsub.f32 2.0, %v3854
        %v3919 = vsub.f32 2.0, %v3855
        %v3920 = vsub.f32 2.0, %v3856
        %v3921 = vsub.f32 2.0, %v3857
        %v3922 = vsub.f32 2.0, %v3858
        %v3923 = vsub.f32 2.0, %v3859
        %v3924 = vsub.f32 2.0, %v3860
        %v3925 = vsub.f32 2.0, %v3861
        %v3926 = vsub.f32 2.0, %v3862
        %v3927 = vsub.f32 2.0, %v3863
        %v3928 = vsub.f32 2.0, %v3864
        %v3929 = vsub.f32 2.0, %v3865
        %v3930 = vsub.f32 2.0, %v3866
        %v3931 = vsub.f32 2.0, %v3867
        %v3932 = vsub.f32 2.0, %v3868
        %v3933 = vsub.f32 2.0, %v3869
        %v3934 = vsub.f32 2.0, %v3870
        %v3935 = vsub.f32 2.0, %v3871
        %v3936 = vsub.f32 2.0, %v3872
        %v3937 = vsub.f32 2.0, %v3873
        %v3938 = vsub.f32 2.0, %v3874
        %v3939 = vsub.f32 2.0, %v3875
        %v3940 = vsub.f32 2.0, %v3876
        %v3941 = vsub.f32 2.0, %v3877
        %v3942 = vsub.f32 2.0, %v3878
        %v3943 = vsub.f32 2.0, %v3879
        %v3944 = vsub.f32 2.0, %v3880
        %v3945 = vsub.f32 2.0, %v3881
        %v3946 = vsub.f32 2.0, %v3882
        %v3947 = vsub.f32 2.0, %v3883
        %v3948 = vsub.f32 2.0, %v3884
        %v3949 = vsub.f32 2.0, %v3885
        %v3950 = vmul.f32 %v3758, %v3886
        %v3951 = vmul.f32 %v3759, %v3887
        %v3952 = vmul.f32 %v3760, %v3888
        %v3953 = vmul.f32 %v3761, %v3889
        %v3954 = vmul.f32 %v3762, %v3890
        %v3955 = vmul.f32 %v3763, %v3891
        %v3956 = vmul.f32 %v3764, %v3892
        %v3957 = vmul.f32 %v3765, %v3893
        %v3958 = vmul.f32 %v3766, %v3894
        %v3959 = vmul.f32 %v3767, %v3895
        %v3960 = vmul.f32 %v3768, %v3896
        %v3961 = vmul.f32 %v3769, %v3897
        %v3962 = vmul.f32 %v3770, %v3898
        %v3963 = vmul.f32 %v3771, %v3899
        %v3964 = vmul.f32 %v3772, %v3900
        %v3965 = vmul.f32 %v3773, %v3901
        %v3966 = vmul.f32 %v3774, %v3902
        %v3967 = vmul.f32 %v3775, %v3903
        %v3968 = vmul.f32 %v3776, %v3904
        %v3969 = vmul.f32 %v3777, %v3905
        %v3970 = vmul.f32 %v3778, %v3906
        %v3971 = vmul.f32 %v3779, %v3907
        %v3972 = vmul.f32 %v3780, %v3908
        %v3973 = vmul.f32 %v3781, %v3909
        %v3974 = vmul.f32 %v3782, %v3910
        %v3975 = vmul.f32 %v3783, %v3911
        %v3976 = vmul.f32 %v3784, %v3912
        %v3977 = vmul.f32 %v3785, %v3913
        %v3978 = vmul.f32 %v3786, %v3914
        %v3979 = vmul.f32 %v3787, %v3915
        %v3980 = vmul.f32 %v3788, %v3916
        %v3981 = vmul.f32 %v3789, %v3917
        %v3982 = vmul.f32 %v3790, %v3918
        %v3983 = vmul.f32 %v3791, %v3919
        %v3984 = vmul.f32 %v3792, %v3920
        %v3985 = vmul.f32 %v3793, %v3921
        %v3986 = vmul.f32 %v3794, %v3922
        %v3987 = vmul.f32 %v3795, %v3923
        %v3988 = vmul.f32 %v3796, %v3924
        %v3989 = vmul.f32 %v3797, %v3925
        %v3990 = vmul.f32 %v3798, %v3926
        %v3991 = vmul.f32 %v3799, %v3927
        %v3992 = vmul.f32 %v3800, %v3928
        %v3993 = vmul.f32 %v3801, %v3929
        %v3994 = vmul.f32 %v3802, %v3930
        %v3995 = vmul.f32 %v3803, %v3931
        %v3996 = vmul.f32 %v3804, %v3932
        %v3997 = vmul.f32 %v3805, %v3933
        %v3998 = vmul.f32 %v3806, %v3934
        %v3999 = vmul.f32 %v3807, %v3935
        %v4000 = vmul.f32 %v3808, %v3936
        %v4001 = vmul.f32 %v3809, %v3937
        %v4002 = vmul.f32 %v3810, %v3938
        %v4003 = vmul.f32 %v3811, %v3939
        %v4004 = vmul.f32 %v3812, %v3940
        %v4005 = vmul.f32 %v3813, %v3941
        %v4006 = vmul.f32 %v3814, %v3942
        %v4007 = vmul.f32 %v3815, %v3943
        %v4008 = vmul.f32 %v3816, %v3944
        %v4009 = vmul.f32 %v3817, %v3945
        %v4010 = vmul.f32 %v3818, %v3946
        %v4011 = vmul.f32 %v3819, %v3947
        %v4012 = vmul.f32 %v3820, %v3948
        %v4013 = vmul.f32 %v3821, %v3949
        %v4014 = vmul.f32 %v3438, %v3950
        %v4015 = vmul.f32 %v3439, %v3951
        %v4016 = vmul.f32 %v3440, %v3952
        %v4017 = vmul.f32 %v3441, %v3953
        %v4018 = vmul.f32 %v3442, %v3954
        %v4019 = vmul.f32 %v3443, %v3955
        %v4020 = vmul.f32 %v3444, %v3956
        %v4021 = vmul.f32 %v3445, %v3957
        %v4022 = vmul.f32 %v3446, %v3958
        %v4023 = vmul.f32 %v3447, %v3959
        %v4024 = vmul.f32 %v3448, %v3960
        %v4025 = vmul.f32 %v3449, %v3961
        %v4026 = vmul.f32 %v3450, %v3962
        %v4027 = vmul.f32 %v3451, %v3963
        %v4028 = vmul.f32 %v3452, %v3964
        %v4029 = vmul.f32 %v3453, %v3965
        %v4030 = vmul.f32 %v3454, %v3966
        %v4031 = vmul.f32 %v3455, %v3967
        %v4032 = vmul.f32 %v3456, %v3968
        %v4033 = vmul.f32 %v3457, %v3969
        %v4034 = vmul.f32 %v3458, %v3970
        %v4035 = vmul.f32 %v3459, %v3971
        %v4036 = vmul.f32 %v3460, %v3972
        %v4037 = vmul.f32 %v3461, %v3973
        %v4038 = vmul.f32 %v3462, %v3974
        %v4039 = vmul.f32 %v3463, %v3975
        %v4040 = vmul.f32 %v3464, %v3976
        %v4041 = vmul.f32 %v3465, %v3977
        %v4042 = vmul.f32 %v3466, %v3978
        %v4043 = vmul.f32 %v3467, %v3979
        %v4044 = vmul.f32 %v3468, %v3980
        %v4045 = vmul.f32 %v3469, %v3981
        %v4046 = vmul.f32 %v3470, %v3982
        %v4047 = vmul.f32 %v3471, %v3983
        %v4048 = vmul.f32 %v3472, %v3984
        %v4049 = vmul.f32 %v3473, %v3985
        %v4050 = vmul.f32 %v3474, %v3986
        %v4051 = vmul.f32 %v3475, %v3987
        %v4052 = vmul.f32 %v3476, %v3988
        %v4053 = vmul.f32 %v3477, %v3989
        %v4054 = vmul.f32 %v3478, %v3990
        %v4055 = vmul.f32 %v3479, %v3991
        %v4056 = vmul.f32 %v3480, %v3992
        %v4057 = vmul.f32 %v3481, %v3993
        %v4058 = vmul.f32 %v3482, %v3994
        %v4059 = vmul.f32 %v3483, %v3995
        %v4060 = vmul.f32 %v3484, %v3996
        %v4061 = vmul.f32 %v3485, %v3997
        %v4062 = vmul.f32 %v3486, %v3998
        %v4063 = vmul.f32 %v3487, %v3999
        %v4064 = vmul.f32 %v3488, %v4000
        %v4065 = vmul.f32 %v3489, %v4001
        %v4066 = vmul.f32 %v3490, %v4002
        %v4067 = vmul.f32 %v3491, %v4003
        %v4068 = vmul.f32 %v3492, %v4004
        %v4069 = vmul.f32 %v3493, %v4005
        %v4070 = vmul.f32 %v3494, %v4006
        %v4071 = vmul.f32 %v3495, %v4007
        %v4072 = vmul.f32 %v3496, %v4008
        %v4073 = vmul.f32 %v3497, %v4009
        %v4074 = vmul.f32 %v3498, %v4010
        %v4075 = vmul.f32 %v3499, %v4011
        %v4076 = vmul.f32 %v3500, %v4012
        %v4077 = vmul.f32 %v3501, %v4013
        %v4078 = vlaneseq
        %v4079 = vshrl.u32 %v4078, 7
        %v4080 = vadd.s32 %v4079, 8
        %v4081 = vadd.s32 %v4079, 16
        %v4082 = vadd.s32 %v4079, 24
        %v4083 = vadd.s32 %v4079, 32
        %v4084 = vadd.s32 %v4079, 40
        %v4085 = vadd.s32 %v4079, 48
        %v4086 = vadd.s32 %v4079, 56
        %v4087 = vadd.s32 %v4079, 64
        %v4088 = vadd.s32 %v4079, 72
        %v4089 = vadd.s32 %v4079, 80
        %v4090 = vadd.s32 %v4079, 88
        %v4091 = vadd.s32 %v4079, 96
        %v4092 = vadd.s32 %v4079, 104
        %v4093 = vadd.s32 %v4079, 112
        %v4094 = vadd.s32 %v4079, 120
        %v4095 = vlaneseq
        %v4096 = vand.u32 %v4095, 127
        %vm4097 = vcmp.lt.s32.totalorder %v4079, 6
        %vm4098 = vcmp.lt.s32.totalorder %v4080, 6
        %vm4099 = vcmp.lt.s32.totalorder %v4081, 6
        %vm4100 = vcmp.lt.s32.totalorder %v4082, 6
        %vm4101 = vcmp.lt.s32.totalorder %v4083, 6
        %vm4102 = vcmp.lt.s32.totalorder %v4084, 6
        %vm4103 = vcmp.lt.s32.totalorder %v4085, 6
        %vm4104 = vcmp.lt.s32.totalorder %v4086, 6
        %vm4105 = vcmp.lt.s32.totalorder %v4087, 6
        %vm4106 = vcmp.lt.s32.totalorder %v4088, 6
        %vm4107 = vcmp.lt.s32.totalorder %v4089, 6
        %vm4108 = vcmp.lt.s32.totalorder %v4090, 6
        %vm4109 = vcmp.lt.s32.totalorder %v4091, 6
        %vm4110 = vcmp.lt.s32.totalorder %v4092, 6
        %vm4111 = vcmp.lt.s32.totalorder %v4093, 6
        %vm4112 = vcmp.lt.s32.totalorder %v4094, 6
        %vm4113 = vcmp.lt.s32.totalorder %v4096, 6
        %vm4114 = vmand %vm4097, %vm4113
        %vm4115 = vmand %vm4098, %vm4113
        %vm4116 = vmand %vm4099, %vm4113
        %vm4117 = vmand %vm4100, %vm4113
        %vm4118 = vmand %vm4101, %vm4113
        %vm4119 = vmand %vm4102, %vm4113
        %vm4120 = vmand %vm4103, %vm4113
        %vm4121 = vmand %vm4104, %vm4113
        %vm4122 = vmand %vm4105, %vm4113
        %vm4123 = vmand %vm4106, %vm4113
        %vm4124 = vmand %vm4107, %vm4113
        %vm4125 = vmand %vm4108, %vm4113
        %vm4126 = vmand %vm4109, %vm4113
        %vm4127 = vmand %vm4110, %vm4113
        %vm4128 = vmand %vm4111, %vm4113
        %vm4129 = vmand %vm4112, %vm4113
        %v4130 = vsel %vm4114, %v4014, 0.0
        %v4131 = vsel %vm4115, %v4015, 0.0
        %v4132 = vsel %vm4116, %v4016, 0.0
        %v4133 = vsel %vm4117, %v4017, 0.0
        %v4134 = vsel %vm4118, %v4018, 0.0
        %v4135 = vsel %vm4119, %v4019, 0.0
        %v4136 = vsel %vm4120, %v4020, 0.0
        %v4137 = vsel %vm4121, %v4021, 0.0
        %v4138 = vsel %vm4122, %v4022, 0.0
        %v4139 = vsel %vm4123, %v4023, 0.0
        %v4140 = vsel %vm4124, %v4024, 0.0
        %v4141 = vsel %vm4125, %v4025, 0.0
        %v4142 = vsel %vm4126, %v4026, 0.0
        %v4143 = vsel %vm4127, %v4027, 0.0
        %v4144 = vsel %vm4128, %v4028, 0.0
        %v4145 = vsel %vm4129, %v4029, 0.0
        %v4146 = vsel %vm4114, %v4030, 0.0
        %v4147 = vsel %vm4115, %v4031, 0.0
        %v4148 = vsel %vm4116, %v4032, 0.0
        %v4149 = vsel %vm4117, %v4033, 0.0
        %v4150 = vsel %vm4118, %v4034, 0.0
        %v4151 = vsel %vm4119, %v4035, 0.0
        %v4152 = vsel %vm4120, %v4036, 0.0
        %v4153 = vsel %vm4121, %v4037, 0.0
        %v4154 = vsel %vm4122, %v4038, 0.0
        %v4155 = vsel %vm4123, %v4039, 0.0
        %v4156 = vsel %vm4124, %v4040, 0.0
        %v4157 = vsel %vm4125, %v4041, 0.0
        %v4158 = vsel %vm4126, %v4042, 0.0
        %v4159 = vsel %vm4127, %v4043, 0.0
        %v4160 = vsel %vm4128, %v4044, 0.0
        %v4161 = vsel %vm4129, %v4045, 0.0
        %v4162 = vsel %vm4114, %v4046, 0.0
        %v4163 = vsel %vm4115, %v4047, 0.0
        %v4164 = vsel %vm4116, %v4048, 0.0
        %v4165 = vsel %vm4117, %v4049, 0.0
        %v4166 = vsel %vm4118, %v4050, 0.0
        %v4167 = vsel %vm4119, %v4051, 0.0
        %v4168 = vsel %vm4120, %v4052, 0.0
        %v4169 = vsel %vm4121, %v4053, 0.0
        %v4170 = vsel %vm4122, %v4054, 0.0
        %v4171 = vsel %vm4123, %v4055, 0.0
        %v4172 = vsel %vm4124, %v4056, 0.0
        %v4173 = vsel %vm4125, %v4057, 0.0
        %v4174 = vsel %vm4126, %v4058, 0.0
        %v4175 = vsel %vm4127, %v4059, 0.0
        %v4176 = vsel %vm4128, %v4060, 0.0
        %v4177 = vsel %vm4129, %v4061, 0.0
        %v4178 = vsel %vm4114, %v4062, 0.0
        %v4179 = vsel %vm4115, %v4063, 0.0
        %v4180 = vsel %vm4116, %v4064, 0.0
        %v4181 = vsel %vm4117, %v4065, 0.0
        %v4182 = vsel %vm4118, %v4066, 0.0
        %v4183 = vsel %vm4119, %v4067, 0.0
        %v4184 = vsel %vm4120, %v4068, 0.0
        %v4185 = vsel %vm4121, %v4069, 0.0
        %v4186 = vsel %vm4122, %v4070, 0.0
        %v4187 = vsel %vm4123, %v4071, 0.0
        %v4188 = vsel %vm4124, %v4072, 0.0
        %v4189 = vsel %vm4125, %v4073, 0.0
        %v4190 = vsel %vm4126, %v4074, 0.0
        %v4191 = vsel %vm4127, %v4075, 0.0
        %v4192 = vsel %vm4128, %v4076, 0.0
        %v4193 = vsel %vm4129, %v4077, 0.0
        %v4194 = vadd.f32 %v4130, %v4131
        %v4195 = vadd.f32 %v4194, %v4132
        %v4196 = vadd.f32 %v4195, %v4133
        %v4197 = vadd.f32 %v4196, %v4134
        %v4198 = vadd.f32 %v4197, %v4135
        %v4199 = vadd.f32 %v4198, %v4136
        %v4200 = vadd.f32 %v4199, %v4137
        %v4201 = vadd.f32 %v4200, %v4138
        %v4202 = vadd.f32 %v4201, %v4139
        %v4203 = vadd.f32 %v4202, %v4140
        %v4204 = vadd.f32 %v4203, %v4141
        %v4205 = vadd.f32 %v4204, %v4142
        %v4206 = vadd.f32 %v4205, %v4143
        %v4207 = vadd.f32 %v4206, %v4144
        %v4208 = vadd.f32 %v4207, %v4145
        %v4209 = vadd.f32 %v4208, %v4146
        %v4210 = vadd.f32 %v4209, %v4147
        %v4211 = vadd.f32 %v4210, %v4148
        %v4212 = vadd.f32 %v4211, %v4149
        %v4213 = vadd.f32 %v4212, %v4150
        %v4214 = vadd.f32 %v4213, %v4151
        %v4215 = vadd.f32 %v4214, %v4152
        %v4216 = vadd.f32 %v4215, %v4153
        %v4217 = vadd.f32 %v4216, %v4154
        %v4218 = vadd.f32 %v4217, %v4155
        %v4219 = vadd.f32 %v4218, %v4156
        %v4220 = vadd.f32 %v4219, %v4157
        %v4221 = vadd.f32 %v4220, %v4158
        %v4222 = vadd.f32 %v4221, %v4159
        %v4223 = vadd.f32 %v4222, %v4160
        %v4224 = vadd.f32 %v4223, %v4161
        %v4225 = vadd.f32 %v4224, %v4162
        %v4226 = vadd.f32 %v4225, %v4163
        %v4227 = vadd.f32 %v4226, %v4164
        %v4228 = vadd.f32 %v4227, %v4165
        %v4229 = vadd.f32 %v4228, %v4166
        %v4230 = vadd.f32 %v4229, %v4167
        %v4231 = vadd.f32 %v4230, %v4168
        %v4232 = vadd.f32 %v4231, %v4169
        %v4233 = vadd.f32 %v4232, %v4170
        %v4234 = vadd.f32 %v4233, %v4171
        %v4235 = vadd.f32 %v4234, %v4172
        %v4236 = vadd.f32 %v4235, %v4173
        %v4237 = vadd.f32 %v4236, %v4174
        %v4238 = vadd.f32 %v4237, %v4175
        %v4239 = vadd.f32 %v4238, %v4176
        %v4240 = vadd.f32 %v4239, %v4177
        %v4241 = vadd.f32 %v4240, %v4178
        %v4242 = vadd.f32 %v4241, %v4179
        %v4243 = vadd.f32 %v4242, %v4180
        %v4244 = vadd.f32 %v4243, %v4181
        %v4245 = vadd.f32 %v4244, %v4182
        %v4246 = vadd.f32 %v4245, %v4183
        %v4247 = vadd.f32 %v4246, %v4184
        %v4248 = vadd.f32 %v4247, %v4185
        %v4249 = vadd.f32 %v4248, %v4186
        %v4250 = vadd.f32 %v4249, %v4187
        %v4251 = vadd.f32 %v4250, %v4188
        %v4252 = vadd.f32 %v4251, %v4189
        %v4253 = vadd.f32 %v4252, %v4190
        %v4254 = vadd.f32 %v4253, %v4191
        %v4255 = vadd.f32 %v4254, %v4192
        %v4256 = vadd.f32 %v4255, %v4193
        %4257 = vadd.xlane.f32.xlu0 %v4256
        %v4258 = vpop.xlane.xlu0 %4257
        %v4259 = vrot.slane %v4258, 4
        %v4260 = vadd.f32 %v4258, %v4259
        %v4261 = vrot.slane %v4260, 2
        %v4262 = vadd.f32 %v4260, %v4261
        %v4263 = vrot.slane %v4262, 1
        %v4264 = vadd.f32 %v4262, %v4263
        %v4265 = vmul.f32 %v4264, 0.0069444445
        %4266 = vst.msk [vmem:[%s326] sm:$0x1] %vm384, %v4265
        %p4267 = scmp.lt.s32.totalorder %s24, 1
        %s4268 = scalar_select %p4267, %s24, 1
        %s4269 = scalar_lea.vmem %s4, %s4268
        %p4270 = scmp.lt.s32.totalorder %s24, 1
        %s4271 = scalar_select %p4270, %s24, 1
        %s4272 = scalar_lea.vmem %s5, %s4271
        // Predicated region
        $region53: #{tpu_custom_call.1} parent=35 // pred_check
          %p4273 = pneg %p136
        $region54: #{tpu_custom_call.1} parent=35 // pred_check_branch
          %4275 = sbr.rel (%p4273) target = $region56
        $region55: #{tpu_custom_call.1} parent=35 // pred_region
          _
        $region56: #{tpu_custom_call.1} parent=35 // pred_fallthru
          _
        // Predicated region
        $region57: #{tpu_custom_call.1} parent=35 // pred_check
          %p4276 = pneg %p162
        $region58: #{tpu_custom_call.1} parent=35 // pred_check_branch
          %4278 = sbr.rel (%p4276) target = $region60
        $region59: #{tpu_custom_call.1} parent=35 // pred_region
          _
        $region60: #{tpu_custom_call.1} parent=35 // pred_fallthru
          _
      $region36: #{tpu_custom_call.1} parent=5 // pred_fallthru
        _
      %p4279 = scmp.le.s32.totalorder 2, %s19
      // Predicated region
      $region61: #{tpu_custom_call.1} parent=5 // pred_check
        %p4280 = pneg %p4279
      $region62: #{tpu_custom_call.1} parent=5 // pred_check_branch
        %4282 = sbr.rel (%p4280) target = $region64
      $region63: #{tpu_custom_call.1} parent=5 // pred_region
        %s4283 = ssub.s32 %s19, 2
        // Predicated region
        $region65: #{tpu_custom_call.1} parent=63 // pred_check
          %p4284 = pneg %p142
        $region66: #{tpu_custom_call.1} parent=63 // pred_check_branch
          %4286 = sbr.rel (%p4284) target = $region68
        $region67: #{tpu_custom_call.1} parent=63 // pred_region
          %p4287 = scmp.lt.s32.totalorder %s25, 1
          %s4288 = scalar_select %p4287, %s25, 1
          %s4289 = scalar_lea.vmem %s4, %s4288
        $region68: #{tpu_custom_call.1} parent=63 // pred_fallthru
          _
        // Predicated region
        $region69: #{tpu_custom_call.1} parent=63 // pred_check
          %p4290 = pneg %p168
        $region70: #{tpu_custom_call.1} parent=63 // pred_check_branch
          %4292 = sbr.rel (%p4290) target = $region72
        $region71: #{tpu_custom_call.1} parent=63 // pred_region
          %p4293 = scmp.lt.s32.totalorder %s25, 1
          %s4294 = scalar_select %p4293, %s25, 1
          %s4295 = scalar_lea.vmem %s5, %s4294
        $region72: #{tpu_custom_call.1} parent=63 // pred_fallthru
          _
      $region64: #{tpu_custom_call.1} parent=5 // pred_fallthru
        _
    $region6: #{tpu_custom_call.1} parent=1 // loop_footer
      %s23 = sadd.s32 1, %s19
    $region7: #{tpu_custom_call.1} parent=1 // loop_footer_branch
      %18 = sbr.rel target = $region3
    $region8: #{tpu_custom_call.1} parent=1 // loop_exit
      _
    %4296 = vsyncpa [#allocation3], 1
    %s4297 = scalar_lea.sflag [#allocation3], 1
    %4298 = vsyncpa %s4297, 1
    %4299 = vsyncpa [#allocation5], 1
    %s4300 = scalar_lea.sflag [#allocation5], 1
    %4301 = vsyncpa %s4300, 1
    %4302 = vsyncpa [#allocation8], 1

</llo_original>
